<compile_context>
chip_gen: v7x
topology: tpu7x:2x2x1
jax: 0.10.0
libtpu: 0.0.40
codegen_flags: <defaults>
</compile_context>

<pallas_src>
import jax
import jax.numpy as jnp
from jax.experimental import pallas as pl
from jax.experimental.pallas import tpu as pltpu


DTYPE = jnp.bfloat16          # storage / MXU dtype for activations & weights
ACC = jnp.float32             # accumulation / epilogue dtype


# ----------------------------- Pallas kernels -----------------------------

def _conv3x3_bn_silu_kernel(r0_ref, r1_ref, r2_ref, w_ref, s_ref, b_ref, o_ref):
    # r{0,1,2}: (1, 1, W+2, Cin)  -- padded input rows h, h+1, h+2
    # w:        (9, Cin, Cout)    -- resident, tap order (kh, kw)
    # s, b:     (1, Cout)         -- folded BatchNorm scale / bias (f32)
    # o:        (1, 1, W, Cout)
    W = o_ref.shape[2]
    Cout = o_ref.shape[3]
    rows = (r0_ref[0, 0], r1_ref[0, 0], r2_ref[0, 0])   # each (W+2, Cin)
    acc = jnp.zeros((W, Cout), ACC)
    for kh in range(3):
        r = rows[kh]
        for kw in range(3):
            acc += jnp.dot(r[kw:kw + W, :], w_ref[kh * 3 + kw],
                           preferred_element_type=ACC)
    y = acc * s_ref[...] + b_ref[...]
    y = y * jax.nn.sigmoid(y)                            # SiLU
    o_ref[0, 0] = y.astype(o_ref.dtype)


def _upsample2x_kernel(x_ref, w_ref, b_ref, o_ref):
    # x: (1, 1, W, C); w: (2, C, 2C) resident (per-dh, columns ordered (dw, co))
    # b: (2, 1, 2C) f32; o: (1, 1, 2, W, 2C)
    x = x_ref[0, 0]                                      # (W, C)
    for dh in range(2):
        y = jnp.dot(x, w_ref[dh], preferred_element_type=ACC) + b_ref[dh]
        o_ref[0, 0, dh] = y.astype(o_ref.dtype)


def _matmul_bn_silu_kernel(x_ref, w_ref, s_ref, b_ref, o_ref):
    # x: (TM, Cin); w: (Cin, Cout) resident; s/b: (1, Cout); o: (TM, Cout)
    y = jnp.dot(x_ref[...], w_ref[...], preferred_element_type=ACC)
    y = y * s_ref[...] + b_ref[...]
    y = y * jax.nn.sigmoid(y)
    o_ref[...] = y.astype(o_ref.dtype)


# ------------------------------ JAX wrappers ------------------------------

def conv3x3_bn_silu(x, w9, scale, bias):
    """3x3 / stride-1 / pad-1 conv + folded BN + SiLU.  x: (N, H, W, Cin)."""
    N, H, W, Cin = x.shape
    Cout = w9.shape[-1]
    xp = jnp.pad(x, ((0, 0), (1, 1), (1, 1), (0, 0)))     # zero pad, (N,H+2,W+2,Cin)
    Wp = W + 2

    def row_spec(kh):
        return pl.BlockSpec((1, 1, Wp, Cin),
                            lambda n, h, kh=kh: (n, h + kh, 0, 0))

    return pl.pallas_call(
        _conv3x3_bn_silu_kernel,
        out_shape=jax.ShapeDtypeStruct((N, H, W, Cout), x.dtype),
        grid=(N, H),
        in_specs=[row_spec(0), row_spec(1), row_spec(2),
                  pl.BlockSpec((9, Cin, Cout), lambda n, h: (0, 0, 0)),   # resident
                  pl.BlockSpec((1, Cout), lambda n, h: (0, 0)),           # resident
                  pl.BlockSpec((1, Cout), lambda n, h: (0, 0))],          # resident
        out_specs=pl.BlockSpec((1, 1, W, Cout), lambda n, h: (n, h, 0, 0)),
        compiler_params=pltpu.CompilerParams(
            dimension_semantics=("parallel", "parallel")),
    )(xp, xp, xp, w9, scale, bias)


def upsample2x(x, w_up, b_up):
    """ConvTranspose2d(C, C, 2, 2, 0, bias=True).  x: (N, H, W, C) -> (N,2H,2W,C)."""
    N, H, W, C = x.shape
    y6 = pl.pallas_call(
        _upsample2x_kernel,
        out_shape=jax.ShapeDtypeStruct((N, H, 2, W, 2 * C), x.dtype),
        grid=(N, H),
        in_specs=[pl.BlockSpec((1, 1, W, C), lambda n, h: (n, h, 0, 0)),
                  pl.BlockSpec((2, C, 2 * C), lambda n, h: (0, 0, 0)),    # resident
                  pl.BlockSpec((2, 1, 2 * C), lambda n, h: (0, 0, 0))],   # resident
        out_specs=pl.BlockSpec((1, 1, 2, W, 2 * C),
                               lambda n, h: (n, h, 0, 0, 0)),
        compiler_params=pltpu.CompilerParams(
            dimension_semantics=("parallel", "parallel")),
    )(x, w_up, b_up)
    # (N, H, 2, W, 2C) -> (N, 2H, 2W, C): adjacent-dims reshape (free, no transpose).
    return y6.reshape(N, 2 * H, 2 * W, C)


def _pick_rows_tile(p, target=512):
    for t in (target, 256, 128, 64, 32, 16):
        if t <= p and p % t == 0:
            return t
    return p


def conv1x1_bn_silu(x2d, w, scale, bias, out_dtype):
    """Per-pixel matmul + folded BN + SiLU.  x2d: (P, Cin)."""
    P, Cin = x2d.shape
    Cout = w.shape[-1]
    tm = _pick_rows_tile(P)
    return pl.pallas_call(
        _matmul_bn_silu_kernel,
        out_shape=jax.ShapeDtypeStruct((P, Cout), out_dtype),
        grid=(P // tm,),
        in_specs=[pl.BlockSpec((tm, Cin), lambda i: (i, 0)),
                  pl.BlockSpec((Cin, Cout), lambda i: (0, 0)),            # resident
                  pl.BlockSpec((1, Cout), lambda i: (0, 0)),              # resident
                  pl.BlockSpec((1, Cout), lambda i: (0, 0))],             # resident
        out_specs=pl.BlockSpec((tm, Cout), lambda i: (i, 0)),
        compiler_params=pltpu.CompilerParams(dimension_semantics=("parallel",)),
    )(x2d, w, scale, bias)


def proto_forward(x_nchw, params):
    x = jnp.transpose(x_nchw, (0, 2, 3, 1)).astype(DTYPE)        # NCHW -> NHWC, bf16
    x = conv3x3_bn_silu(x, params["w1"], params["scale1"], params["bias1"])   # cv1
    x = upsample2x(x, params["w_up"], params["b_up"])                         # upsample
    x = conv3x3_bn_silu(x, params["w2"], params["scale2"], params["bias2"])   # cv2
    N, H2, W2, C = x.shape
    y = conv1x1_bn_silu(x.reshape(N * H2 * W2, C), params["w3"],
                        params["scale3"], params["bias3"], jnp.float32)       # cv3
    y = y.reshape(N, H2, W2, -1)
    return jnp.transpose(y, (0, 3, 1, 2))                        # NHWC -> NCHW


# --------------------------- deterministic params ---------------------------

def init_params(key, c1, c_, c2, eps=1e-3):
    f32 = jnp.float32
    ks = jax.random.split(key, 11)

    def bn_fold(kg, kb, c):
        gamma = 1.0 + 0.05 * jax.random.normal(kg, (c,), f32)
        beta = 0.05 * jax.random.normal(kb, (c,), f32)
        mean = 0.02 * jnp.arange(c, dtype=f32) / max(c, 1)
        var = jnp.ones((c,), f32)
        scale = gamma / jnp.sqrt(var + eps)
        bias = beta - mean * scale
        return scale.reshape(1, c), bias.reshape(1, c)

    def conv_w(k, cout, cin, ksz):
        fan_in = cin * ksz * ksz
        return jax.random.normal(k, (cout, cin, ksz, ksz), f32) * (fan_in ** -0.5)

    w1 = conv_w(ks[0], c_, c1, 3)                       # OIHW
    s1, b1 = bn_fold(ks[1], ks[2], c_)
    wt = jax.random.normal(ks[3], (c_, c_, 2, 2), f32) * (c_ ** -0.5)  # (in,out,kh,kw)
    bt = 0.1 * jax.random.normal(ks[4], (c_,), f32)
    w2 = conv_w(ks[5], c_, c_, 3)
    s2, b2 = bn_fold(ks[6], ks[7], c_)
    w3 = conv_w(ks[8], c2, c_, 1)
    s3, b3 = bn_fold(ks[9], ks[10], c2)

    def pack3x3(w):                                     # OIHW -> (9, Cin, Cout)
        co, ci = w.shape[0], w.shape[1]
        return jnp.transpose(w, (2, 3, 1, 0)).reshape(9, ci, co)

    # ConvTranspose weight (Cin,Cout,2,2) -> per-dh (Cin, 2*Cout), columns (dw, co)
    w_up = jnp.transpose(wt, (2, 0, 3, 1)).reshape(2, c_, 2 * c_)
    b_row = jnp.tile(bt, 2).reshape(1, 2 * c_)
    b_up = jnp.tile(b_row[None], (2, 1, 1))             # (2, 1, 2*Cout), f32

    return dict(
        w1=pack3x3(w1).astype(DTYPE), scale1=s1, bias1=b1,
        w_up=w_up.astype(DTYPE), b_up=b_up,
        w2=pack3x3(w2).astype(DTYPE), scale2=s2, bias2=b2,
        w3=w3.reshape(c2, c_).T.astype(DTYPE), scale3=s3, bias3=b3,
    )


# ------------------------------ pure-JAX ref ------------------------------

def proto_reference(x_nchw, params):
    f32 = jnp.float32
    x = jnp.transpose(x_nchw, (0, 2, 3, 1)).astype(DTYPE)

    def conv3x3(x, w9, scale, bias):
        hwio = w9.reshape(3, 3, w9.shape[1], w9.shape[2]).astype(f32)
        y = jax.lax.conv_general_dilated(
            x.astype(f32), hwio, (1, 1), ((1, 1), (1, 1)),
            dimension_numbers=("NHWC", "HWIO", "NHWC"))
        y = y * scale + bias
        y = y * jax.nn.sigmoid(y)
        return y.astype(DTYPE)

    x = conv3x3(x, params["w1"], params["scale1"], params["bias1"])

    N, H, W, C = x.shape
    wup = params["w_up"].astype(f32)                    # (2, C, 2C)
    y = jnp.einsum("nhwc,dce->nhdwe", x.astype(f32), wup) + params["b_up"]
    x = y.astype(DTYPE).reshape(N, 2 * H, 2 * W, C)

    x = conv3x3(x, params["w2"], params["scale2"], params["bias2"])

    w3 = params["w3"].astype(f32)                       # (C, c2)
    y = jnp.einsum("nhwc,cd->nhwd", x.astype(f32), w3)
    y = y * params["scale3"] + params["bias3"]
    y = y * jax.nn.sigmoid(y)
    return jnp.transpose(y, (0, 3, 1, 2))


# ---------------------------------- main ----------------------------------

if __name__ == "__main__":
    key = jax.random.PRNGKey(0)
    kx, kp = jax.random.split(key)

    N, C1, H, W = 2, 4, 16, 16
    C_, C2 = 32, 16                    # small stand-ins for c_=256, c2=32
    x = jax.random.normal(kx, (N, C1, H, W), jnp.float32)   # NCHW input
    params = init_params(kp, C1, C_, C2)

    out = jax.jit(proto_forward)(x, params)
    out = jax.block_until_ready(out)

    ref = jax.block_until_ready(proto_reference(x, params))
    assert out.shape == (N, C2, 2 * H, 2 * W)
    assert out.dtype == jnp.float32
    max_err = jnp.max(jnp.abs(out - ref))
    assert jnp.allclose(out, ref, rtol=2e-2, atol=2e-2), f"max abs err {max_err}"

    print("KERNEL_OK")
</pallas_src>

<mosaic_0001>
module attributes {stable_mosaic.version = 11 : i64} {
  func.func @_upsample2x_kernel(%arg0: i32, %arg1: i32, %arg2: memref<1x1x16x32xbf16, #tpu.memory_space<vmem>>, %arg3: memref<2x32x64xbf16, #tpu.memory_space<vmem>>, %arg4: memref<2x1x64xf32, #tpu.memory_space<vmem>>, %arg5: memref<1x1x2x16x64xbf16, #tpu.memory_space<vmem>>) attributes {dimension_semantics = [#tpu.dimension_semantics<parallel>, #tpu.dimension_semantics<parallel>], iteration_bounds = array<i64: 2, 16>, scalar_prefetch = 0 : i64, scratch_operands = 0 : i64, tpu.core_type = #tpu.core_type<tc>, window_params = [{transform_indices = @transform_0, window_bounds = array<i64: 1, 1, 16, 32>}, {pipeline_mode = #tpu.pipeline_mode<synchronous>, transform_indices = @transform_1, window_bounds = array<i64: 2, 32, 64>}, {pipeline_mode = #tpu.pipeline_mode<synchronous>, transform_indices = @transform_2, window_bounds = array<i64: 2, 1, 64>}, {transform_indices = @transform_3, window_bounds = array<i64: 1, 1, 2, 16, 64>}]} {
    %c0 = arith.constant 0 : index
    %c0_0 = arith.constant 0 : index
    %c0_1 = arith.constant 0 : index
    %c0_2 = arith.constant 0 : index
    %0 = vector.load %arg2[%c0, %c0_0, %c0_1, %c0_2] : memref<1x1x16x32xbf16, #tpu.memory_space<vmem>>, vector<1x1x16x32xbf16>
    %1 = vector.shape_cast %0 : vector<1x1x16x32xbf16> to vector<16x32xbf16>
    %c0_3 = arith.constant 0 : index
    %c0_4 = arith.constant 0 : index
    %c0_5 = arith.constant 0 : index
    %2 = vector.load %arg3[%c0_3, %c0_4, %c0_5] : memref<2x32x64xbf16, #tpu.memory_space<vmem>>, vector<1x32x64xbf16>
    %3 = vector.shape_cast %2 : vector<1x32x64xbf16> to vector<32x64xbf16>
    %cst = arith.constant dense<0.000000e+00> : vector<16x64xf32>
    %4 = tpu.matmul %1, %3, %cst {dimension_numbers = #tpu.dot_dimension_numbers<[1], [0], [0], [1], [0, 0, 1, 1], [], []>} : vector<16x32xbf16>, vector<32x64xbf16>, vector<16x64xf32> -> vector<16x64xf32>
    %c0_6 = arith.constant 0 : index
    %c0_7 = arith.constant 0 : index
    %c0_8 = arith.constant 0 : index
    %5 = vector.load %arg4[%c0_6, %c0_7, %c0_8] : memref<2x1x64xf32, #tpu.memory_space<vmem>>, vector<1x1x64xf32>
    %6 = vector.shape_cast %5 : vector<1x1x64xf32> to vector<1x64xf32>
    %7 = vector.broadcast %6 : vector<1x64xf32> to vector<16x64xf32>
    %8 = arith.addf %4, %7 : vector<16x64xf32>
    %9 = arith.truncf %8 : vector<16x64xf32> to vector<16x64xbf16>
    %c0_9 = arith.constant 0 : index
    %c0_10 = arith.constant 0 : index
    %c0_11 = arith.constant 0 : index
    %c0_12 = arith.constant 0 : index
    %c0_13 = arith.constant 0 : index
    %10 = vector.load %arg5[%c0_9, %c0_10, %c0_11, %c0_12, %c0_13] : memref<1x1x2x16x64xbf16, #tpu.memory_space<vmem>>, vector<1x1x1x16x64xbf16>
    %11 = vector.shape_cast %10 : vector<1x1x1x16x64xbf16> to vector<16x64xbf16>
    %12 = vector.shape_cast %9 : vector<16x64xbf16> to vector<1x1x1x16x64xbf16>
    tpu.vector_store %arg5[%c0_9, %c0_10, %c0_11, %c0_12, %c0_13], %12 {strides = array<i32>} : memref<1x1x2x16x64xbf16, #tpu.memory_space<vmem>>, vector<1x1x1x16x64xbf16>,
    %c1 = arith.constant 1 : index
    %c0_14 = arith.constant 0 : index
    %c0_15 = arith.constant 0 : index
    %13 = vector.load %arg3[%c1, %c0_14, %c0_15] : memref<2x32x64xbf16, #tpu.memory_space<vmem>>, vector<1x32x64xbf16>
    %14 = vector.shape_cast %13 : vector<1x32x64xbf16> to vector<32x64xbf16>
    %cst_16 = arith.constant dense<0.000000e+00> : vector<16x64xf32>
    %15 = tpu.matmul %1, %14, %cst_16 {dimension_numbers = #tpu.dot_dimension_numbers<[1], [0], [0], [1], [0, 0, 1, 1], [], []>} : vector<16x32xbf16>, vector<32x64xbf16>, vector<16x64xf32> -> vector<16x64xf32>
    %c1_17 = arith.constant 1 : index
    %c0_18 = arith.constant 0 : index
    %c0_19 = arith.constant 0 : index
    %16 = vector.load %arg4[%c1_17, %c0_18, %c0_19] : memref<2x1x64xf32, #tpu.memory_space<vmem>>, vector<1x1x64xf32>
    %17 = vector.shape_cast %16 : vector<1x1x64xf32> to vector<1x64xf32>
    %18 = vector.broadcast %17 : vector<1x64xf32> to vector<16x64xf32>
    %19 = arith.addf %15, %18 : vector<16x64xf32>
    %20 = arith.truncf %19 : vector<16x64xf32> to vector<16x64xbf16>
    %c0_20 = arith.constant 0 : index
    %c0_21 = arith.constant 0 : index
    %c1_22 = arith.constant 1 : index
    %c0_23 = arith.constant 0 : index
    %c0_24 = arith.constant 0 : index
    %21 = vector.load %arg5[%c0_20, %c0_21, %c1_22, %c0_23, %c0_24] : memref<1x1x2x16x64xbf16, #tpu.memory_space<vmem>>, vector<1x1x1x16x64xbf16>
    %22 = vector.shape_cast %21 : vector<1x1x1x16x64xbf16> to vector<16x64xbf16>
    %23 = vector.shape_cast %20 : vector<16x64xbf16> to vector<1x1x1x16x64xbf16>
    tpu.vector_store %arg5[%c0_20, %c0_21, %c1_22, %c0_23, %c0_24], %23 {strides = array<i32>} : memref<1x1x2x16x64xbf16, #tpu.memory_space<vmem>>, vector<1x1x1x16x64xbf16>,
    return
  }
  func.func @transform_0(%arg0: i32, %arg1: i32) -> (i32, i32, i32, i32) {
    %c0_i32 = arith.constant 0 : i32
    %c0_i32_0 = arith.constant 0 : i32
    %c0_i32_1 = arith.constant 0 : i32
    return %arg0, %arg1, %c0_i32, %c0_i32_0 : i32, i32, i32, i32
  }
  func.func @transform_1(%arg0: i32, %arg1: i32) -> (i32, i32, i32) {
    %c0_i32 = arith.constant 0 : i32
    %c0_i32_0 = arith.constant 0 : i32
    %c0_i32_1 = arith.constant 0 : i32
    %c0_i32_2 = arith.constant 0 : i32
    return %c0_i32, %c0_i32_0, %c0_i32_1 : i32, i32, i32
  }
  func.func @transform_2(%arg0: i32, %arg1: i32) -> (i32, i32, i32) {
    %c0_i32 = arith.constant 0 : i32
    %c0_i32_0 = arith.constant 0 : i32
    %c0_i32_1 = arith.constant 0 : i32
    %c0_i32_2 = arith.constant 0 : i32
    return %c0_i32, %c0_i32_0, %c0_i32_1 : i32, i32, i32
  }
  func.func @transform_3(%arg0: i32, %arg1: i32) -> (i32, i32, i32, i32, i32) {
    %c0_i32 = arith.constant 0 : i32
    %c0_i32_0 = arith.constant 0 : i32
    %c0_i32_1 = arith.constant 0 : i32
    %c0_i32_2 = arith.constant 0 : i32
    return %arg0, %arg1, %c0_i32, %c0_i32_0, %c0_i32_1 : i32, i32, i32, i32, i32
  }
}

module attributes {stable_mosaic.version = 11 : i64} {
  func.func @_conv3x3_bn_silu_kernel(%arg0: i32, %arg1: i32, %arg2: memref<1x1x18x4xbf16, #tpu.memory_space<vmem>>, %arg3: memref<1x1x18x4xbf16, #tpu.memory_space<vmem>>, %arg4: memref<1x1x18x4xbf16, #tpu.memory_space<vmem>>, %arg5: memref<9x4x32xbf16, #tpu.memory_space<vmem>>, %arg6: memref<1x32xf32, #tpu.memory_space<vmem>>, %arg7: memref<1x32xf32, #tpu.memory_space<vmem>>, %arg8: memref<1x1x16x32xbf16, #tpu.memory_space<vmem>>) attributes {dimension_semantics = [#tpu.dimension_semantics<parallel>, #tpu.dimension_semantics<parallel>], iteration_bounds = array<i64: 2, 16>, scalar_prefetch = 0 : i64, scratch_operands = 0 : i64, tpu.core_type = #tpu.core_type<tc>, window_params = [{transform_indices = @transform_0, window_bounds = array<i64: 1, 1, 18, 4>}, {transform_indices = @transform_1, window_bounds = array<i64: 1, 1, 18, 4>}, {transform_indices = @transform_2, window_bounds = array<i64: 1, 1, 18, 4>}, {pipeline_mode = #tpu.pipeline_mode<synchronous>, transform_indices = @transform_3, window_bounds = array<i64: 9, 4, 32>}, {pipeline_mode = #tpu.pipeline_mode<synchronous>, transform_indices = @transform_4, window_bounds = array<i64: 1, 32>}, {pipeline_mode = #tpu.pipeline_mode<synchronous>, transform_indices = @transform_5, window_bounds = array<i64: 1, 32>}, {transform_indices = @transform_6, window_bounds = array<i64: 1, 1, 16, 32>}]} {
    %c0 = arith.constant 0 : index
    %c0_0 = arith.constant 0 : index
    %c0_1 = arith.constant 0 : index
    %c0_2 = arith.constant 0 : index
    %0 = vector.load %arg2[%c0, %c0_0, %c0_1, %c0_2] : memref<1x1x18x4xbf16, #tpu.memory_space<vmem>>, vector<1x1x18x4xbf16>
    %1 = vector.shape_cast %0 : vector<1x1x18x4xbf16> to vector<18x4xbf16>
    %c0_3 = arith.constant 0 : index
    %c0_4 = arith.constant 0 : index
    %c0_5 = arith.constant 0 : index
    %c0_6 = arith.constant 0 : index
    %2 = vector.load %arg3[%c0_3, %c0_4, %c0_5, %c0_6] : memref<1x1x18x4xbf16, #tpu.memory_space<vmem>>, vector<1x1x18x4xbf16>
    %3 = vector.shape_cast %2 : vector<1x1x18x4xbf16> to vector<18x4xbf16>
    %c0_7 = arith.constant 0 : index
    %c0_8 = arith.constant 0 : index
    %c0_9 = arith.constant 0 : index
    %c0_10 = arith.constant 0 : index
    %4 = vector.load %arg4[%c0_7, %c0_8, %c0_9, %c0_10] : memref<1x1x18x4xbf16, #tpu.memory_space<vmem>>, vector<1x1x18x4xbf16>
    %5 = vector.shape_cast %4 : vector<1x1x18x4xbf16> to vector<18x4xbf16>
    %cst = arith.constant 0.000000e+00 : f32
    %6 = vector.broadcast %cst : f32 to vector<16x32xf32>
    %7 = vector.extract_strided_slice %1 {offsets = [0, 0], sizes = [16, 4], strides = [1, 1]} : vector<18x4xbf16> to vector<16x4xbf16>
    %c0_11 = arith.constant 0 : index
    %c0_12 = arith.constant 0 : index
    %c0_13 = arith.constant 0 : index
    %8 = vector.load %arg5[%c0_11, %c0_12, %c0_13] : memref<9x4x32xbf16, #tpu.memory_space<vmem>>, vector<1x4x32xbf16>
    %9 = vector.shape_cast %8 : vector<1x4x32xbf16> to vector<4x32xbf16>
    %cst_14 = arith.constant dense<0.000000e+00> : vector<16x32xf32>
    %10 = tpu.matmul %7, %9, %cst_14 {dimension_numbers = #tpu.dot_dimension_numbers<[1], [0], [0], [1], [0, 0, 1, 1], [], []>} : vector<16x4xbf16>, vector<4x32xbf16>, vector<16x32xf32> -> vector<16x32xf32>
    %11 = arith.addf %6, %10 : vector<16x32xf32>
    %12 = vector.extract_strided_slice %1 {offsets = [1, 0], sizes = [16, 4], strides = [1, 1]} : vector<18x4xbf16> to vector<16x4xbf16>
    %c1 = arith.constant 1 : index
    %c0_15 = arith.constant 0 : index
    %c0_16 = arith.constant 0 : index
    %13 = vector.load %arg5[%c1, %c0_15, %c0_16] : memref<9x4x32xbf16, #tpu.memory_space<vmem>>, vector<1x4x32xbf16>
    %14 = vector.shape_cast %13 : vector<1x4x32xbf16> to vector<4x32xbf16>
    %cst_17 = arith.constant dense<0.000000e+00> : vector<16x32xf32>
    %15 = tpu.matmul %12, %14, %cst_17 {dimension_numbers = #tpu.dot_dimension_numbers<[1], [0], [0], [1], [0, 0, 1, 1], [], []>} : vector<16x4xbf16>, vector<4x32xbf16>, vector<16x32xf32> -> vector<16x32xf32>
    %16 = arith.addf %11, %15 : vector<16x32xf32>
    %17 = vector.extract_strided_slice %1 {offsets = [2, 0], sizes = [16, 4], strides = [1, 1]} : vector<18x4xbf16> to vector<16x4xbf16>
    %c2 = arith.constant 2 : index
    %c0_18 = arith.constant 0 : index
    %c0_19 = arith.constant 0 : index
    %18 = vector.load %arg5[%c2, %c0_18, %c0_19] : memref<9x4x32xbf16, #tpu.memory_space<vmem>>, vector<1x4x32xbf16>
    %19 = vector.shape_cast %18 : vector<1x4x32xbf16> to vector<4x32xbf16>
    %cst_20 = arith.constant dense<0.000000e+00> : vector<16x32xf32>
    %20 = tpu.matmul %17, %19, %cst_20 {dimension_numbers = #tpu.dot_dimension_numbers<[1], [0], [0], [1], [0, 0, 1, 1], [], []>} : vector<16x4xbf16>, vector<4x32xbf16>, vector<16x32xf32> -> vector<16x32xf32>
    %21 = arith.addf %16, %20 : vector<16x32xf32>
    %22 = vector.extract_strided_slice %3 {offsets = [0, 0], sizes = [16, 4], strides = [1, 1]} : vector<18x4xbf16> to vector<16x4xbf16>
    %c3 = arith.constant 3 : index
    %c0_21 = arith.constant 0 : index
    %c0_22 = arith.constant 0 : index
    %23 = vector.load %arg5[%c3, %c0_21, %c0_22] : memref<9x4x32xbf16, #tpu.memory_space<vmem>>, vector<1x4x32xbf16>
    %24 = vector.shape_cast %23 : vector<1x4x32xbf16> to vector<4x32xbf16>
    %cst_23 = arith.constant dense<0.000000e+00> : vector<16x32xf32>
    %25 = tpu.matmul %22, %24, %cst_23 {dimension_numbers = #tpu.dot_dimension_numbers<[1], [0], [0], [1], [0, 0, 1, 1], [], []>} : vector<16x4xbf16>, vector<4x32xbf16>, vector<16x32xf32> -> vector<16x32xf32>
    %26 = arith.addf %21, %25 : vector<16x32xf32>
    %27 = vector.extract_strided_slice %3 {offsets = [1, 0], sizes = [16, 4], strides = [1, 1]} : vector<18x4xbf16> to vector<16x4xbf16>
    %c4 = arith.constant 4 : index
    %c0_24 = arith.constant 0 : index
    %c0_25 = arith.constant 0 : index
    %28 = vector.load %arg5[%c4, %c0_24, %c0_25] : memref<9x4x32xbf16, #tpu.memory_space<vmem>>, vector<1x4x32xbf16>
    %29 = vector.shape_cast %28 : vector<1x4x32xbf16> to vector<4x32xbf16>
    %cst_26 = arith.constant dense<0.000000e+00> : vector<16x32xf32>
    %30 = tpu.matmul %27, %29, %cst_26 {dimension_numbers = #tpu.dot_dimension_numbers<[1], [0], [0], [1], [0, 0, 1, 1], [], []>} : vector<16x4xbf16>, vector<4x32xbf16>, vector<16x32xf32> -> vector<16x32xf32>
    %31 = arith.addf %26, %30 : vector<16x32xf32>
    %32 = vector.extract_strided_slice %3 {offsets = [2, 0], sizes = [16, 4], strides = [1, 1]} : vector<18x4xbf16> to vector<16x4xbf16>
    %c5 = arith.constant 5 : index
    %c0_27 = arith.constant 0 : index
    %c0_28 = arith.constant 0 : index
    %33 = vector.load %arg5[%c5, %c0_27, %c0_28] : memref<9x4x32xbf16, #tpu.memory_space<vmem>>, vector<1x4x32xbf16>
    %34 = vector.shape_cast %33 : vector<1x4x32xbf16> to vector<4x32xbf16>
    %cst_29 = arith.constant dense<0.000000e+00> : vector<16x32xf32>
    %35 = tpu.matmul %32, %34, %cst_29 {dimension_numbers = #tpu.dot_dimension_numbers<[1], [0], [0], [1], [0, 0, 1, 1], [], []>} : vector<16x4xbf16>, vector<4x32xbf16>, vector<16x32xf32> -> vector<16x32xf32>
    %36 = arith.addf %31, %35 : vector<16x32xf32>
    %37 = vector.extract_strided_slice %5 {offsets = [0, 0], sizes = [16, 4], strides = [1, 1]} : vector<18x4xbf16> to vector<16x4xbf16>
    %c6 = arith.constant 6 : index
    %c0_30 = arith.constant 0 : index
    %c0_31 = arith.constant 0 : index
    %38 = vector.load %arg5[%c6, %c0_30, %c0_31] : memref<9x4x32xbf16, #tpu.memory_space<vmem>>, vector<1x4x32xbf16>
    %39 = vector.shape_cast %38 : vector<1x4x32xbf16> to vector<4x32xbf16>
    %cst_32 = arith.constant dense<0.000000e+00> : vector<16x32xf32>
    %40 = tpu.matmul %37, %39, %cst_32 {dimension_numbers = #tpu.dot_dimension_numbers<[1], [0], [0], [1], [0, 0, 1, 1], [], []>} : vector<16x4xbf16>, vector<4x32xbf16>, vector<16x32xf32> -> vector<16x32xf32>
    %41 = arith.addf %36, %40 : vector<16x32xf32>
    %42 = vector.extract_strided_slice %5 {offsets = [1, 0], sizes = [16, 4], strides = [1, 1]} : vector<18x4xbf16> to vector<16x4xbf16>
    %c7 = arith.constant 7 : index
    %c0_33 = arith.constant 0 : index
    %c0_34 = arith.constant 0 : index
    %43 = vector.load %arg5[%c7, %c0_33, %c0_34] : memref<9x4x32xbf16, #tpu.memory_space<vmem>>, vector<1x4x32xbf16>
    %44 = vector.shape_cast %43 : vector<1x4x32xbf16> to vector<4x32xbf16>
    %cst_35 = arith.constant dense<0.000000e+00> : vector<16x32xf32>
    %45 = tpu.matmul %42, %44, %cst_35 {dimension_numbers = #tpu.dot_dimension_numbers<[1], [0], [0], [1], [0, 0, 1, 1], [], []>} : vector<16x4xbf16>, vector<4x32xbf16>, vector<16x32xf32> -> vector<16x32xf32>
    %46 = arith.addf %41, %45 : vector<16x32xf32>
    %47 = vector.extract_strided_slice %5 {offsets = [2, 0], sizes = [16, 4], strides = [1, 1]} : vector<18x4xbf16> to vector<16x4xbf16>
    %c8 = arith.constant 8 : index
    %c0_36 = arith.constant 0 : index
    %c0_37 = arith.constant 0 : index
    %48 = vector.load %arg5[%c8, %c0_36, %c0_37] : memref<9x4x32xbf16, #tpu.memory_space<vmem>>, vector<1x4x32xbf16>
    %49 = vector.shape_cast %48 : vector<1x4x32xbf16> to vector<4x32xbf16>
    %cst_38 = arith.constant dense<0.000000e+00> : vector<16x32xf32>
    %50 = tpu.matmul %47, %49, %cst_38 {dimension_numbers = #tpu.dot_dimension_numbers<[1], [0], [0], [1], [0, 0, 1, 1], [], []>} : vector<16x4xbf16>, vector<4x32xbf16>, vector<16x32xf32> -> vector<16x32xf32>
    %51 = arith.addf %46, %50 : vector<16x32xf32>
    %c0_39 = arith.constant 0 : index
    %c0_40 = arith.constant 0 : index
    %52 = vector.load %arg6[%c0_39, %c0_40] : memref<1x32xf32, #tpu.memory_space<vmem>>, vector<1x32xf32>
    %53 = vector.broadcast %52 : vector<1x32xf32> to vector<16x32xf32>
    %54 = arith.mulf %51, %53 : vector<16x32xf32>
    %c0_41 = arith.constant 0 : index
    %c0_42 = arith.constant 0 : index
    %55 = vector.load %arg7[%c0_41, %c0_42] : memref<1x32xf32, #tpu.memory_space<vmem>>, vector<1x32xf32>
    %56 = vector.broadcast %55 : vector<1x32xf32> to vector<16x32xf32>
    %57 = arith.addf %54, %56 : vector<16x32xf32>
    %58 = arith.negf %57 : vector<16x32xf32>
    %59 = math.exp %58 : vector<16x32xf32>
    %cst_43 = arith.constant 1.000000e+00 : f32
    %60 = vector.broadcast %cst_43 : f32 to vector<16x32xf32>
    %61 = arith.addf %60, %59 : vector<16x32xf32>
    %62 = arith.divf %60, %61 : vector<16x32xf32>
    %63 = arith.mulf %57, %62 : vector<16x32xf32>
    %64 = arith.truncf %63 : vector<16x32xf32> to vector<16x32xbf16>
    %c0_44 = arith.constant 0 : index
    %c0_45 = arith.constant 0 : index
    %c0_46 = arith.constant 0 : index
    %c0_47 = arith.constant 0 : index
    %65 = vector.load %arg8[%c0_44, %c0_45, %c0_46, %c0_47] : memref<1x1x16x32xbf16, #tpu.memory_space<vmem>>, vector<1x1x16x32xbf16>
    %66 = vector.shape_cast %65 : vector<1x1x16x32xbf16> to vector<16x32xbf16>
    %67 = vector.shape_cast %64 : vector<16x32xbf16> to vector<1x1x16x32xbf16>
    tpu.vector_store %arg8[%c0_44, %c0_45, %c0_46, %c0_47], %67 {strides = array<i32>} : memref<1x1x16x32xbf16, #tpu.memory_space<vmem>>, vector<1x1x16x32xbf16>,
    return
  }
  func.func @transform_0(%arg0: i32, %arg1: i32) -> (i32, i32, i32, i32) {
    %c0_i32 = arith.constant 0 : i32
    %0 = arith.addi %arg1, %c0_i32 : i32
    %c0_i32_0 = arith.constant 0 : i32
    %c0_i32_1 = arith.constant 0 : i32
    %c0_i32_2 = arith.constant 0 : i32
    return %arg0, %0, %c0_i32_0, %c0_i32_1 : i32, i32, i32, i32
  }
  func.func @transform_1(%arg0: i32, %arg1: i32) -> (i32, i32, i32, i32) {
    %c1_i32 = arith.constant 1 : i32
    %0 = arith.addi %arg1, %c1_i32 : i32
    %c0_i32 = arith.constant 0 : i32
    %c0_i32_0 = arith.constant 0 : i32
    %c0_i32_1 = arith.constant 0 : i32
    return %arg0, %0, %c0_i32, %c0_i32_0 : i32, i32, i32, i32
  }
  func.func @transform_2(%arg0: i32, %arg1: i32) -> (i32, i32, i32, i32) {
    %c2_i32 = arith.constant 2 : i32
    %0 = arith.addi %arg1, %c2_i32 : i32
    %c0_i32 = arith.constant 0 : i32
    %c0_i32_0 = arith.constant 0 : i32
    %c0_i32_1 = arith.constant 0 : i32
    return %arg0, %0, %c0_i32, %c0_i32_0 : i32, i32, i32, i32
  }
  func.func @transform_3(%arg0: i32, %arg1: i32) -> (i32, i32, i32) {
    %c0_i32 = arith.constant 0 : i32
    %c0_i32_0 = arith.constant 0 : i32
    %c0_i32_1 = arith.constant 0 : i32
    %c0_i32_2 = arith.constant 0 : i32
    return %c0_i32, %c0_i32_0, %c0_i32_1 : i32, i32, i32
  }
  func.func @transform_4(%arg0: i32, %arg1: i32) -> (i32, i32) {
    %c0_i32 = arith.constant 0 : i32
    %c0_i32_0 = arith.constant 0 : i32
    %c0_i32_1 = arith.constant 0 : i32
    return %c0_i32, %c0_i32_0 : i32, i32
  }
  func.func @transform_5(%arg0: i32, %arg1: i32) -> (i32, i32) {
    %c0_i32 = arith.constant 0 : i32
    %c0_i32_0 = arith.constant 0 : i32
    %c0_i32_1 = arith.constant 0 : i32
    return %c0_i32, %c0_i32_0 : i32, i32
  }
  func.func @transform_6(%arg0: i32, %arg1: i32) -> (i32, i32, i32, i32) {
    %c0_i32 = arith.constant 0 : i32
    %c0_i32_0 = arith.constant 0 : i32
    %c0_i32_1 = arith.constant 0 : i32
    return %arg0, %arg1, %c0_i32, %c0_i32_0 : i32, i32, i32, i32
  }
}

module attributes {stable_mosaic.version = 11 : i64} {
  func.func @_conv3x3_bn_silu_kernel(%arg0: i32, %arg1: i32, %arg2: memref<1x1x34x32xbf16, #tpu.memory_space<vmem>>, %arg3: memref<1x1x34x32xbf16, #tpu.memory_space<vmem>>, %arg4: memref<1x1x34x32xbf16, #tpu.memory_space<vmem>>, %arg5: memref<9x32x32xbf16, #tpu.memory_space<vmem>>, %arg6: memref<1x32xf32, #tpu.memory_space<vmem>>, %arg7: memref<1x32xf32, #tpu.memory_space<vmem>>, %arg8: memref<1x1x32x32xbf16, #tpu.memory_space<vmem>>) attributes {dimension_semantics = [#tpu.dimension_semantics<parallel>, #tpu.dimension_semantics<parallel>], iteration_bounds = array<i64: 2, 32>, scalar_prefetch = 0 : i64, scratch_operands = 0 : i64, tpu.core_type = #tpu.core_type<tc>, window_params = [{transform_indices = @transform_0, window_bounds = array<i64: 1, 1, 34, 32>}, {transform_indices = @transform_1, window_bounds = array<i64: 1, 1, 34, 32>}, {transform_indices = @transform_2, window_bounds = array<i64: 1, 1, 34, 32>}, {pipeline_mode = #tpu.pipeline_mode<synchronous>, transform_indices = @transform_3, window_bounds = array<i64: 9, 32, 32>}, {pipeline_mode = #tpu.pipeline_mode<synchronous>, transform_indices = @transform_4, window_bounds = array<i64: 1, 32>}, {pipeline_mode = #tpu.pipeline_mode<synchronous>, transform_indices = @transform_5, window_bounds = array<i64: 1, 32>}, {transform_indices = @transform_6, window_bounds = array<i64: 1, 1, 32, 32>}]} {
    %c0 = arith.constant 0 : index
    %c0_0 = arith.constant 0 : index
    %c0_1 = arith.constant 0 : index
    %c0_2 = arith.constant 0 : index
    %0 = vector.load %arg2[%c0, %c0_0, %c0_1, %c0_2] : memref<1x1x34x32xbf16, #tpu.memory_space<vmem>>, vector<1x1x34x32xbf16>
    %1 = vector.shape_cast %0 : vector<1x1x34x32xbf16> to vector<34x32xbf16>
    %c0_3 = arith.constant 0 : index
    %c0_4 = arith.constant 0 : index
    %c0_5 = arith.constant 0 : index
    %c0_6 = arith.constant 0 : index
    %2 = vector.load %arg3[%c0_3, %c0_4, %c0_5, %c0_6] : memref<1x1x34x32xbf16, #tpu.memory_space<vmem>>, vector<1x1x34x32xbf16>
    %3 = vector.shape_cast %2 : vector<1x1x34x32xbf16> to vector<34x32xbf16>
    %c0_7 = arith.constant 0 : index
    %c0_8 = arith.constant 0 : index
    %c0_9 = arith.constant 0 : index
    %c0_10 = arith.constant 0 : index
    %4 = vector.load %arg4[%c0_7, %c0_8, %c0_9, %c0_10] : memref<1x1x34x32xbf16, #tpu.memory_space<vmem>>, vector<1x1x34x32xbf16>
    %5 = vector.shape_cast %4 : vector<1x1x34x32xbf16> to vector<34x32xbf16>
    %cst = arith.constant 0.000000e+00 : f32
    %6 = vector.broadcast %cst : f32 to vector<32x32xf32>
    %7 = vector.extract_strided_slice %1 {offsets = [0, 0], sizes = [32, 32], strides = [1, 1]} : vector<34x32xbf16> to vector<32x32xbf16>
    %c0_11 = arith.constant 0 : index
    %c0_12 = arith.constant 0 : index
    %c0_13 = arith.constant 0 : index
    %8 = vector.load %arg5[%c0_11, %c0_12, %c0_13] : memref<9x32x32xbf16, #tpu.memory_space<vmem>>, vector<1x32x32xbf16>
    %9 = vector.shape_cast %8 : vector<1x32x32xbf16> to vector<32x32xbf16>
    %cst_14 = arith.constant dense<0.000000e+00> : vector<32x32xf32>
    %10 = tpu.matmul %7, %9, %cst_14 {dimension_numbers = #tpu.dot_dimension_numbers<[1], [0], [0], [1], [0, 0, 1, 1], [], []>} : vector<32x32xbf16>, vector<32x32xbf16>, vector<32x32xf32> -> vector<32x32xf32>
    %11 = arith.addf %6, %10 : vector<32x32xf32>
    %12 = vector.extract_strided_slice %1 {offsets = [1, 0], sizes = [32, 32], strides = [1, 1]} : vector<34x32xbf16> to vector<32x32xbf16>
    %c1 = arith.constant 1 : index
    %c0_15 = arith.constant 0 : index
    %c0_16 = arith.constant 0 : index
    %13 = vector.load %arg5[%c1, %c0_15, %c0_16] : memref<9x32x32xbf16, #tpu.memory_space<vmem>>, vector<1x32x32xbf16>
    %14 = vector.shape_cast %13 : vector<1x32x32xbf16> to vector<32x32xbf16>
    %cst_17 = arith.constant dense<0.000000e+00> : vector<32x32xf32>
    %15 = tpu.matmul %12, %14, %cst_17 {dimension_numbers = #tpu.dot_dimension_numbers<[1], [0], [0], [1], [0, 0, 1, 1], [], []>} : vector<32x32xbf16>, vector<32x32xbf16>, vector<32x32xf32> -> vector<32x32xf32>
    %16 = arith.addf %11, %15 : vector<32x32xf32>
    %17 = vector.extract_strided_slice %1 {offsets = [2, 0], sizes = [32, 32], strides = [1, 1]} : vector<34x32xbf16> to vector<32x32xbf16>
    %c2 = arith.constant 2 : index
    %c0_18 = arith.constant 0 : index
    %c0_19 = arith.constant 0 : index
    %18 = vector.load %arg5[%c2, %c0_18, %c0_19] : memref<9x32x32xbf16, #tpu.memory_space<vmem>>, vector<1x32x32xbf16>
    %19 = vector.shape_cast %18 : vector<1x32x32xbf16> to vector<32x32xbf16>
    %cst_20 = arith.constant dense<0.000000e+00> : vector<32x32xf32>
    %20 = tpu.matmul %17, %19, %cst_20 {dimension_numbers = #tpu.dot_dimension_numbers<[1], [0], [0], [1], [0, 0, 1, 1], [], []>} : vector<32x32xbf16>, vector<32x32xbf16>, vector<32x32xf32> -> vector<32x32xf32>
    %21 = arith.addf %16, %20 : vector<32x32xf32>
    %22 = vector.extract_strided_slice %3 {offsets = [0, 0], sizes = [32, 32], strides = [1, 1]} : vector<34x32xbf16> to vector<32x32xbf16>
    %c3 = arith.constant 3 : index
    %c0_21 = arith.constant 0 : index
    %c0_22 = arith.constant 0 : index
    %23 = vector.load %arg5[%c3, %c0_21, %c0_22] : memref<9x32x32xbf16, #tpu.memory_space<vmem>>, vector<1x32x32xbf16>
    %24 = vector.shape_cast %23 : vector<1x32x32xbf16> to vector<32x32xbf16>
    %cst_23 = arith.constant dense<0.000000e+00> : vector<32x32xf32>
    %25 = tpu.matmul %22, %24, %cst_23 {dimension_numbers = #tpu.dot_dimension_numbers<[1], [0], [0], [1], [0, 0, 1, 1], [], []>} : vector<32x32xbf16>, vector<32x32xbf16>, vector<32x32xf32> -> vector<32x32xf32>
    %26 = arith.addf %21, %25 : vector<32x32xf32>
    %27 = vector.extract_strided_slice %3 {offsets = [1, 0], sizes = [32, 32], strides = [1, 1]} : vector<34x32xbf16> to vector<32x32xbf16>
    %c4 = arith.constant 4 : index
    %c0_24 = arith.constant 0 : index
    %c0_25 = arith.constant 0 : index
    %28 = vector.load %arg5[%c4, %c0_24, %c0_25] : memref<9x32x32xbf16, #tpu.memory_space<vmem>>, vector<1x32x32xbf16>
    %29 = vector.shape_cast %28 : vector<1x32x32xbf16> to vector<32x32xbf16>
    %cst_26 = arith.constant dense<0.000000e+00> : vector<32x32xf32>
    %30 = tpu.matmul %27, %29, %cst_26 {dimension_numbers = #tpu.dot_dimension_numbers<[1], [0], [0], [1], [0, 0, 1, 1], [], []>} : vector<32x32xbf16>, vector<32x32xbf16>, vector<32x32xf32> -> vector<32x32xf32>
    %31 = arith.addf %26, %30 : vector<32x32xf32>
    %32 = vector.extract_strided_slice %3 {offsets = [2, 0], sizes = [32, 32], strides = [1, 1]} : vector<34x32xbf16> to vector<32x32xbf16>
    %c5 = arith.constant 5 : index
    %c0_27 = arith.constant 0 : index
    %c0_28 = arith.constant 0 : index
    %33 = vector.load %arg5[%c5, %c0_27, %c0_28] : memref<9x32x32xbf16, #tpu.memory_space<vmem>>, vector<1x32x32xbf16>
    %34 = vector.shape_cast %33 : vector<1x32x32xbf16> to vector<32x32xbf16>
    %cst_29 = arith.constant dense<0.000000e+00> : vector<32x32xf32>
    %35 = tpu.matmul %32, %34, %cst_29 {dimension_numbers = #tpu.dot_dimension_numbers<[1], [0], [0], [1], [0, 0, 1, 1], [], []>} : vector<32x32xbf16>, vector<32x32xbf16>, vector<32x32xf32> -> vector<32x32xf32>
    %36 = arith.addf %31, %35 : vector<32x32xf32>
    %37 = vector.extract_strided_slice %5 {offsets = [0, 0], sizes = [32, 32], strides = [1, 1]} : vector<34x32xbf16> to vector<32x32xbf16>
    %c6 = arith.constant 6 : index
    %c0_30 = arith.constant 0 : index
    %c0_31 = arith.constant 0 : index
    %38 = vector.load %arg5[%c6, %c0_30, %c0_31] : memref<9x32x32xbf16, #tpu.memory_space<vmem>>, vector<1x32x32xbf16>
    %39 = vector.shape_cast %38 : vector<1x32x32xbf16> to vector<32x32xbf16>
    %cst_32 = arith.constant dense<0.000000e+00> : vector<32x32xf32>
    %40 = tpu.matmul %37, %39, %cst_32 {dimension_numbers = #tpu.dot_dimension_numbers<[1], [0], [0], [1], [0, 0, 1, 1], [], []>} : vector<32x32xbf16>, vector<32x32xbf16>, vector<32x32xf32> -> vector<32x32xf32>
    %41 = arith.addf %36, %40 : vector<32x32xf32>
    %42 = vector.extract_strided_slice %5 {offsets = [1, 0], sizes = [32, 32], strides = [1, 1]} : vector<34x32xbf16> to vector<32x32xbf16>
    %c7 = arith.constant 7 : index
    %c0_33 = arith.constant 0 : index
    %c0_34 = arith.constant 0 : index
    %43 = vector.load %arg5[%c7, %c0_33, %c0_34] : memref<9x32x32xbf16, #tpu.memory_space<vmem>>, vector<1x32x32xbf16>
    %44 = vector.shape_cast %43 : vector<1x32x32xbf16> to vector<32x32xbf16>
    %cst_35 = arith.constant dense<0.000000e+00> : vector<32x32xf32>
    %45 = tpu.matmul %42, %44, %cst_35 {dimension_numbers = #tpu.dot_dimension_numbers<[1], [0], [0], [1], [0, 0, 1, 1], [], []>} : vector<32x32xbf16>, vector<32x32xbf16>, vector<32x32xf32> -> vector<32x32xf32>
    %46 = arith.addf %41, %45 : vector<32x32xf32>
    %47 = vector.extract_strided_slice %5 {offsets = [2, 0], sizes = [32, 32], strides = [1, 1]} : vector<34x32xbf16> to vector<32x32xbf16>
    %c8 = arith.constant 8 : index
    %c0_36 = arith.constant 0 : index
    %c0_37 = arith.constant 0 : index
    %48 = vector.load %arg5[%c8, %c0_36, %c0_37] : memref<9x32x32xbf16, #tpu.memory_space<vmem>>, vector<1x32x32xbf16>
    %49 = vector.shape_cast %48 : vector<1x32x32xbf16> to vector<32x32xbf16>
    %cst_38 = arith.constant dense<0.000000e+00> : vector<32x32xf32>
    %50 = tpu.matmul %47, %49, %cst_38 {dimension_numbers = #tpu.dot_dimension_numbers<[1], [0], [0], [1], [0, 0, 1, 1], [], []>} : vector<32x32xbf16>, vector<32x32xbf16>, vector<32x32xf32> -> vector<32x32xf32>
    %51 = arith.addf %46, %50 : vector<32x32xf32>
    %c0_39 = arith.constant 0 : index
    %c0_40 = arith.constant 0 : index
    %52 = vector.load %arg6[%c0_39, %c0_40] : memref<1x32xf32, #tpu.memory_space<vmem>>, vector<1x32xf32>
    %53 = vector.broadcast %52 : vector<1x32xf32> to vector<32x32xf32>
    %54 = arith.mulf %51, %53 : vector<32x32xf32>
    %c0_41 = arith.constant 0 : index
    %c0_42 = arith.constant 0 : index
    %55 = vector.load %arg7[%c0_41, %c0_42] : memref<1x32xf32, #tpu.memory_space<vmem>>, vector<1x32xf32>
    %56 = vector.broadcast %55 : vector<1x32xf32> to vector<32x32xf32>
    %57 = arith.addf %54, %56 : vector<32x32xf32>
    %58 = arith.negf %57 : vector<32x32xf32>
    %59 = math.exp %58 : vector<32x32xf32>
    %cst_43 = arith.constant 1.000000e+00 : f32
    %60 = vector.broadcast %cst_43 : f32 to vector<32x32xf32>
    %61 = arith.addf %60, %59 : vector<32x32xf32>
    %62 = arith.divf %60, %61 : vector<32x32xf32>
    %63 = arith.mulf %57, %62 : vector<32x32xf32>
    %64 = arith.truncf %63 : vector<32x32xf32> to vector<32x32xbf16>
    %c0_44 = arith.constant 0 : index
    %c0_45 = arith.constant 0 : index
    %c0_46 = arith.constant 0 : index
    %c0_47 = arith.constant 0 : index
    %65 = vector.load %arg8[%c0_44, %c0_45, %c0_46, %c0_47] : memref<1x1x32x32xbf16, #tpu.memory_space<vmem>>, vector<1x1x32x32xbf16>
    %66 = vector.shape_cast %65 : vector<1x1x32x32xbf16> to vector<32x32xbf16>
    %67 = vector.shape_cast %64 : vector<32x32xbf16> to vector<1x1x32x32xbf16>
    tpu.vector_store %arg8[%c0_44, %c0_45, %c0_46, %c0_47], %67 {strides = array<i32>} : memref<1x1x32x32xbf16, #tpu.memory_space<vmem>>, vector<1x1x32x32xbf16>,
    return
  }
  func.func @transform_0(%arg0: i32, %arg1: i32) -> (i32, i32, i32, i32) {
    %c0_i32 = arith.constant 0 : i32
    %0 = arith.addi %arg1, %c0_i32 : i32
    %c0_i32_0 = arith.constant 0 : i32
    %c0_i32_1 = arith.constant 0 : i32
    %c0_i32_2 = arith.constant 0 : i32
    return %arg0, %0, %c0_i32_0, %c0_i32_1 : i32, i32, i32, i32
  }
  func.func @transform_1(%arg0: i32, %arg1: i32) -> (i32, i32, i32, i32) {
    %c1_i32 = arith.constant 1 : i32
    %0 = arith.addi %arg1, %c1_i32 : i32
    %c0_i32 = arith.constant 0 : i32
    %c0_i32_0 = arith.constant 0 : i32
    %c0_i32_1 = arith.constant 0 : i32
    return %arg0, %0, %c0_i32, %c0_i32_0 : i32, i32, i32, i32
  }
  func.func @transform_2(%arg0: i32, %arg1: i32) -> (i32, i32, i32, i32) {
    %c2_i32 = arith.constant 2 : i32
    %0 = arith.addi %arg1, %c2_i32 : i32
    %c0_i32 = arith.constant 0 : i32
    %c0_i32_0 = arith.constant 0 : i32
    %c0_i32_1 = arith.constant 0 : i32
    return %arg0, %0, %c0_i32, %c0_i32_0 : i32, i32, i32, i32
  }
  func.func @transform_3(%arg0: i32, %arg1: i32) -> (i32, i32, i32) {
    %c0_i32 = arith.constant 0 : i32
    %c0_i32_0 = arith.constant 0 : i32
    %c0_i32_1 = arith.constant 0 : i32
    %c0_i32_2 = arith.constant 0 : i32
    return %c0_i32, %c0_i32_0, %c0_i32_1 : i32, i32, i32
  }
  func.func @transform_4(%arg0: i32, %arg1: i32) -> (i32, i32) {
    %c0_i32 = arith.constant 0 : i32
    %c0_i32_0 = arith.constant 0 : i32
    %c0_i32_1 = arith.constant 0 : i32
    return %c0_i32, %c0_i32_0 : i32, i32
  }
  func.func @transform_5(%arg0: i32, %arg1: i32) -> (i32, i32) {
    %c0_i32 = arith.constant 0 : i32
    %c0_i32_0 = arith.constant 0 : i32
    %c0_i32_1 = arith.constant 0 : i32
    return %c0_i32, %c0_i32_0 : i32, i32
  }
  func.func @transform_6(%arg0: i32, %arg1: i32) -> (i32, i32, i32, i32) {
    %c0_i32 = arith.constant 0 : i32
    %c0_i32_0 = arith.constant 0 : i32
    %c0_i32_1 = arith.constant 0 : i32
    return %arg0, %arg1, %c0_i32, %c0_i32_0 : i32, i32, i32, i32
  }
}

module attributes {stable_mosaic.version = 11 : i64} {
  func.func @_matmul_bn_silu_kernel(%arg0: i32, %arg1: memref<512x32xbf16, #tpu.memory_space<vmem>>, %arg2: memref<32x16xbf16, #tpu.memory_space<vmem>>, %arg3: memref<1x16xf32, #tpu.memory_space<vmem>>, %arg4: memref<1x16xf32, #tpu.memory_space<vmem>>, %arg5: memref<512x16xf32, #tpu.memory_space<vmem>>) attributes {dimension_semantics = [#tpu.dimension_semantics<parallel>], iteration_bounds = array<i64: 4>, scalar_prefetch = 0 : i64, scratch_operands = 0 : i64, tpu.core_type = #tpu.core_type<tc>, window_params = [{transform_indices = @transform_0, window_bounds = array<i64: 512, 32>}, {pipeline_mode = #tpu.pipeline_mode<synchronous>, transform_indices = @transform_1, window_bounds = array<i64: 32, 16>}, {pipeline_mode = #tpu.pipeline_mode<synchronous>, transform_indices = @transform_2, window_bounds = array<i64: 1, 16>}, {pipeline_mode = #tpu.pipeline_mode<synchronous>, transform_indices = @transform_3, window_bounds = array<i64: 1, 16>}, {transform_indices = @transform_4, window_bounds = array<i64: 512, 16>}]} {
    %c0 = arith.constant 0 : index
    %c0_0 = arith.constant 0 : index
    %0 = vector.load %arg1[%c0, %c0_0] : memref<512x32xbf16, #tpu.memory_space<vmem>>, vector<512x32xbf16>
    %c0_1 = arith.constant 0 : index
    %c0_2 = arith.constant 0 : index
    %1 = vector.load %arg2[%c0_1, %c0_2] : memref<32x16xbf16, #tpu.memory_space<vmem>>, vector<32x16xbf16>
    %cst = arith.constant dense<0.000000e+00> : vector<512x16xf32>
    %2 = tpu.matmul %0, %1, %cst {dimension_numbers = #tpu.dot_dimension_numbers<[1], [0], [0], [1], [0, 0, 1, 1], [], []>} : vector<512x32xbf16>, vector<32x16xbf16>, vector<512x16xf32> -> vector<512x16xf32>
    %c0_3 = arith.constant 0 : index
    %c0_4 = arith.constant 0 : index
    %3 = vector.load %arg3[%c0_3, %c0_4] : memref<1x16xf32, #tpu.memory_space<vmem>>, vector<1x16xf32>
    %4 = vector.broadcast %3 : vector<1x16xf32> to vector<512x16xf32>
    %5 = arith.mulf %2, %4 : vector<512x16xf32>
    %c0_5 = arith.constant 0 : index
    %c0_6 = arith.constant 0 : index
    %6 = vector.load %arg4[%c0_5, %c0_6] : memref<1x16xf32, #tpu.memory_space<vmem>>, vector<1x16xf32>
    %7 = vector.broadcast %6 : vector<1x16xf32> to vector<512x16xf32>
    %8 = arith.addf %5, %7 : vector<512x16xf32>
    %9 = arith.negf %8 : vector<512x16xf32>
    %10 = math.exp %9 : vector<512x16xf32>
    %cst_7 = arith.constant 1.000000e+00 : f32
    %11 = vector.broadcast %cst_7 : f32 to vector<512x16xf32>
    %12 = arith.addf %11, %10 : vector<512x16xf32>
    %13 = arith.divf %11, %12 : vector<512x16xf32>
    %14 = arith.mulf %8, %13 : vector<512x16xf32>
    %c0_8 = arith.constant 0 : index
    %c0_9 = arith.constant 0 : index
    %15 = vector.load %arg5[%c0_8, %c0_9] : memref<512x16xf32, #tpu.memory_space<vmem>>, vector<512x16xf32>
    tpu.vector_store %arg5[%c0_8, %c0_9], %14 {strides = array<i32>} : memref<512x16xf32, #tpu.memory_space<vmem>>, vector<512x16xf32>,
    return
  }
  func.func @transform_0(%arg0: i32) -> (i32, i32) {
    %c0_i32 = arith.constant 0 : i32
    %c0_i32_0 = arith.constant 0 : i32
    return %arg0, %c0_i32 : i32, i32
  }
  func.func @transform_1(%arg0: i32) -> (i32, i32) {
    %c0_i32 = arith.constant 0 : i32
    %c0_i32_0 = arith.constant 0 : i32
    %c0_i32_1 = arith.constant 0 : i32
    return %c0_i32, %c0_i32_0 : i32, i32
  }
  func.func @transform_2(%arg0: i32) -> (i32, i32) {
    %c0_i32 = arith.constant 0 : i32
    %c0_i32_0 = arith.constant 0 : i32
    %c0_i32_1 = arith.constant 0 : i32
    return %c0_i32, %c0_i32_0 : i32, i32
  }
  func.func @transform_3(%arg0: i32) -> (i32, i32) {
    %c0_i32 = arith.constant 0 : i32
    %c0_i32_0 = arith.constant 0 : i32
    %c0_i32_1 = arith.constant 0 : i32
    return %c0_i32, %c0_i32_0 : i32, i32
  }
  func.func @transform_4(%arg0: i32) -> (i32, i32) {
    %c0_i32 = arith.constant 0 : i32
    %c0_i32_0 = arith.constant 0 : i32
    return %arg0, %c0_i32 : i32, i32
  }
}

</mosaic_0001>

<llo_original>
// kernel: proto_forward.5
$region0: #{proto_forward.5}
  #allocation0 [shape = 'u32[]', space=smem, size = 0x4, offset = 0x4, fixed_abs, tag = 'smem constant byte address 0x4 - core index']
  #allocation1 [shape = 'u32[144,128]{1,0:T(1,128)}', space=vmem, size = 0x12000, scoped, tag = 'internal scratch']
  %s0 = inlined_call_operand.vmem [shape: bf16[2,16,16,32], index: 0, kind: input, shape index: {}]
  %s1 = inlined_call_operand.vmem [shape: bf16[2,32,64], index: 1, kind: input, shape index: {}]
  %s2 = inlined_call_operand.vmem [shape: f32[2,1,64], index: 2, kind: input, shape index: {}]
  %s3 = inlined_call_operand.vmem [shape: bf16[2,16,2,16,64], index: 3, kind: output, shape index: {}]
  %s4 = sld [smem:[#allocation0]]
  $region45: #{proto_forward.5} parent=0
    _
  %s6 = ssub.s32 1, %s4
  %s7 = scalar_select 0, %s6, %s4
  loop: start=0, step=1, limit=34
  $region2: #{proto_forward.5} parent=0 // loop_pre_header
    _
  $region3: #{proto_forward.5} parent=0 // loop_header
    %s9 = sphi 0, %s13
    %p10 = scmp.ge.s32.totalorder %s9, 34
    %s16 = sphi 0, %s28
    %s17 = sphi 0, %s24
    %s18 = sphi 0, %s16
    %s19 = sphi 0, %s17
    %s20 = sphi 0, %s18
    %s21 = sphi 0, %s19
    %s33 = sphi 0, %s35
    %s36 = sphi 0, %s33
    %s37 = sphi 0, %s36
    %s53 = sphi 0, %s37
    %s57 = sphi 0, %s57
    %s59 = sphi 0, %s57
    %s60 = sphi 0, %s59
    %s74 = sphi 0, %s60
    %s78 = sphi 0, %s78
    %s80 = sphi 0, %s78
    %s81 = sphi 0, %s80
    %s95 = sphi 0, %s81
    %s103 = sphi 0, %s105
    %s106 = sphi 0, %s103
    %s107 = sphi 0, %s106
    %s123 = sphi 0, %s107
  $region4: #{proto_forward.5} parent=0 // loop_header_branch
    %12 = sbr.rel (%p10) target = $region8
  $region5: #{proto_forward.5} parent=0 // loop_body
    %s14 = ssub.s32 %s9, 1
    %s15 = ssub.s32 %s9, 2
    %s22 = sadd.s32 1, %s17
    %p23 = scmp.ge.s32.totalorder %s22, 16
    %s24 = scalar_select %p23, 0, %s22
    %s25 = sadd.s32 1, %s16
    %s26 = scalar_select %p23, %s25, %s16
    %p27 = scmp.ge.s32.totalorder %s26, 2
    %s28 = scalar_select %p27, 0, %s26
    %s29 = ssub.s32 %s16, %s28
    %s30 = ssub.s32 %s17, %s24
    %s31 = sor.u32 %s29, %s30
    %p32 = scmp.eq.s32.totalorder %s31, 0
    %s34 = sadd.s32 %s33, 1
    %s35 = scalar_select %p32, %s33, %s34
    %p38 = pneg %p32
    %p39 = scmp.eq.s32.totalorder %s9, 31
    %p40 = por %p38, %p39
    %p41 = scmp.ne.s32.totalorder %s33, %s36
    %p42 = scmp.eq.s32.totalorder %s9, 0
    %p43 = por %p41, %p42
    %p44 = scmp.ne.s32.totalorder %s33, %s36
    %p45 = scmp.eq.s32.totalorder %s14, 31
    %p46 = por %p44, %p45
    %p47 = scmp.ne.s32.totalorder %s36, %s37
    %p48 = scmp.eq.s32.totalorder %s14, 0
    %p49 = por %p47, %p48
    %p50 = scmp.ne.s32.totalorder %s36, %s37
    %p51 = scmp.eq.s32.totalorder %s15, 31
    %p52 = por %p50, %p51
    %p54 = scmp.ne.s32.totalorder %s37, %s53
    %p55 = scmp.eq.s32.totalorder %s15, 0
    %p56 = por %p54, %p55
    %s58 = sadd.s32 %s57, 1
    %p61 = scmp.eq.s32.totalorder %s9, 31
    %p62 = scmp.ne.s32.totalorder %s57, %s59
    %p63 = scmp.eq.s32.totalorder %s9, 0
    %p64 = por %p62, %p63
    %p65 = scmp.ne.s32.totalorder %s57, %s59
    %p66 = scmp.eq.s32.totalorder %s14, 31
    %p67 = por %p65, %p66
    %p68 = scmp.ne.s32.totalorder %s59, %s60
    %p69 = scmp.eq.s32.totalorder %s14, 0
    %p70 = por %p68, %p69
    %p71 = scmp.ne.s32.totalorder %s59, %s60
    %p72 = scmp.eq.s32.totalorder %s15, 31
    %p73 = por %p71, %p72
    %p75 = scmp.ne.s32.totalorder %s60, %s74
    %p76 = scmp.eq.s32.totalorder %s15, 0
    %p77 = por %p75, %p76
    %s79 = sadd.s32 %s78, 1
    %p82 = scmp.eq.s32.totalorder %s9, 31
    %p83 = scmp.ne.s32.totalorder %s78, %s80
    %p84 = scmp.eq.s32.totalorder %s9, 0
    %p85 = por %p83, %p84
    %p86 = scmp.ne.s32.totalorder %s78, %s80
    %p87 = scmp.eq.s32.totalorder %s14, 31
    %p88 = por %p86, %p87
    %p89 = scmp.ne.s32.totalorder %s80, %s81
    %p90 = scmp.eq.s32.totalorder %s14, 0
    %p91 = por %p89, %p90
    %p92 = scmp.ne.s32.totalorder %s80, %s81
    %p93 = scmp.eq.s32.totalorder %s15, 31
    %p94 = por %p92, %p93
    %p96 = scmp.ne.s32.totalorder %s81, %s95
    %p97 = scmp.eq.s32.totalorder %s15, 0
    %p98 = por %p96, %p97
    %s99 = ssub.s32 %s16, %s28
    %s100 = ssub.s32 %s17, %s24
    %s101 = sor.u32 %s99, %s100
    %p102 = scmp.eq.s32.totalorder %s101, 0
    %s104 = sadd.s32 %s103, 1
    %s105 = scalar_select %p102, %s103, %s104
    %p108 = pneg %p102
    %p109 = scmp.eq.s32.totalorder %s9, 31
    %p110 = por %p108, %p109
    %p111 = scmp.ne.s32.totalorder %s103, %s106
    %p112 = scmp.eq.s32.totalorder %s9, 0
    %p113 = por %p111, %p112
    %p114 = scmp.ne.s32.totalorder %s103, %s106
    %p115 = scmp.eq.s32.totalorder %s14, 31
    %p116 = por %p114, %p115
    %p117 = scmp.ne.s32.totalorder %s106, %s107
    %p118 = scmp.eq.s32.totalorder %s14, 0
    %p119 = por %p117, %p118
    %p120 = scmp.ne.s32.totalorder %s106, %s107
    %p121 = scmp.eq.s32.totalorder %s15, 31
    %p122 = por %p120, %p121
    %p124 = scmp.ne.s32.totalorder %s107, %s123
    %p125 = scmp.eq.s32.totalorder %s15, 0
    %p126 = por %p124, %p125
    %p127 = scmp.le.s32.totalorder 1, %s9
    %p128 = scmp.lt.s32.totalorder %s9, 33
    %p129 = pnand %p127, %p128
    %p130 = pneg %p129
    // Predicated region
    $region9: #{proto_forward.5} parent=5 // pred_check
      _
    $region10: #{proto_forward.5} parent=5 // pred_check_branch
      %132 = sbr.rel (%p129) target = $region12
    $region11: #{proto_forward.5} parent=5 // pred_region
      %s133 = ssub.s32 %s9, 1
      // Predicated region
      $region13: #{proto_forward.5} parent=11 // pred_check
        %p134 = pneg %p70
      $region14: #{proto_forward.5} parent=11 // pred_check_branch
        %136 = sbr.rel (%p134) target = $region16
      $region15: #{proto_forward.5} parent=11 // pred_region
        _
      $region16: #{proto_forward.5} parent=11 // pred_fallthru
        _
      // Predicated region
      $region17: #{proto_forward.5} parent=11 // pred_check
        %p137 = pneg %p91
      $region18: #{proto_forward.5} parent=11 // pred_check_branch
        %139 = sbr.rel (%p137) target = $region20
      $region19: #{proto_forward.5} parent=11 // pred_region
        _
      $region20: #{proto_forward.5} parent=11 // pred_fallthru
        _
    $region12: #{proto_forward.5} parent=5 // pred_fallthru
      _
    %p140 = scmp.lt.s32.totalorder %s9, 32
    // Predicated region
    $region21: #{proto_forward.5} parent=5 // pred_check
      %p141 = pneg %p140
    $region22: #{proto_forward.5} parent=5 // pred_check_branch
      %143 = sbr.rel (%p141) target = $region24
    $region23: #{proto_forward.5} parent=5 // pred_region
      // Predicated region
      $region25: #{proto_forward.5} parent=23 // pred_check
        %p144 = pneg %p43
      $region26: #{proto_forward.5} parent=23 // pred_check_branch
        %146 = sbr.rel (%p144) target = $region28
      $region27: #{proto_forward.5} parent=23 // pred_region
        %p147 = scmp.lt.s32.totalorder %s16, 1
        %s148 = scalar_select %p147, %s16, 1
        %p149 = scmp.lt.s32.totalorder %s17, 15
        %s150 = scalar_select %p149, %s17, 15
        %s151 = smul.addr %s150, 2
        %s152 = smul.addr %s148, 32
        %s153 = sadd.s32 %s151, %s152
        %s154 = smul.addr %s153, 4
        %s155 = scalar_lea.vmem %s0, %s154
      $region28: #{proto_forward.5} parent=23 // pred_fallthru
        _
    $region24: #{proto_forward.5} parent=5 // pred_fallthru
      _
    %p156 = scmp.le.s32.totalorder 1, %s9
    %p157 = scmp.lt.s32.totalorder %s9, 33
    %p158 = pnand %p156, %p157
    %p159 = pneg %p158
    // Predicated region
    $region29: #{proto_forward.5} parent=5 // pred_check
      _
    $region30: #{proto_forward.5} parent=5 // pred_check_branch
      %161 = sbr.rel (%p158) target = $region32
    $region31: #{proto_forward.5} parent=5 // pred_region
      %s162 = ssub.s32 %s9, 1
      %p163 = scmp.lt.s32.totalorder %s18, 1
      %s164 = scalar_select %p163, %s18, 1
      %p165 = scmp.lt.s32.totalorder %s19, 15
      %s166 = scalar_select %p165, %s19, 15
      %s167 = smul.addr %s166, 2
      %s168 = smul.addr %s164, 32
      %s169 = sadd.s32 %s167, %s168
      %s170 = smul.addr %s169, 4
      %s171 = scalar_lea.vmem %s0, %s170
      %p172 = pneg %p49
      %p173 = pneg %p46
      %p174 = pneg %p70
      %p175 = pneg %p67
      %p176 = pneg %p91
      %p177 = pneg %p88
      %p178 = pneg %p119
      %p179 = pneg %p116
      %p180 = scmp.lt.s32.totalorder %s18, 1
      %s181 = scalar_select %p180, %s18, 1
      %p182 = scmp.lt.s32.totalorder %s19, 15
      %s183 = scalar_select %p182, %s19, 15
      %s184 = smul.addr %s183, 4
      %s185 = smul.addr %s181, 64
      %s186 = sadd.s32 %s184, %s185
      %s187 = smul.addr %s186, 4
      %s188 = scalar_lea.vmem %s3, %s187
      %p189 = scmp.lt.s32.totalorder %s18, 1
      %s190 = scalar_select %p189, %s18, 1
      %p191 = scmp.lt.s32.totalorder %s19, 15
      %s192 = scalar_select %p191, %s19, 15
      %s193 = smul.addr %s192, 2
      %s194 = smul.addr %s190, 32
      %s195 = sadd.s32 %s193, %s194
      %s196 = smul.addr %s195, 4
      %s197 = scalar_lea.vmem %s0, %s196
      %p198 = scmp.lt.s32.totalorder %s18, 1
      %s199 = scalar_select %p198, %s18, 1
      %p200 = scmp.lt.s32.totalorder %s19, 15
      %s201 = scalar_select %p200, %s19, 15
      %s202 = smul.addr %s201, 4
      %s203 = smul.addr %s199, 64
      %s204 = sadd.s32 %s202, %s203
      %s205 = smul.addr %s204, 4
      %s206 = scalar_lea.vmem %s3, %s205
      %v208 = vld [vmem:[%s197] sm:$0xf]
      %v209 = vld [vmem:[%s197 + $0x4] sm:$0xf]
      %v210 = vld [vmem:[%s1] sm:$0xf]
      %v211 = vld [vmem:[%s1 + $0x4] sm:$0xf]
      %v212 = vld [vmem:[%s1 + $0x8] sm:$0xf]
      %v213 = vld [vmem:[%s1 + $0xc] sm:$0xf]
      %v214 = vld [vmem:[%s2] sm:$0x1]
      %v216 = vlaneseq
      %v217 = vshrl.u32 %v216, 7
      %v218 = vsub.s32 0, %v217
      %v219 = vrot.slane %v214, %v218
      %v223 = vunpack.c.l.b16 %v208
      %v224 = vunpack.c.l.b16 %v209
      %v225 = vpack.c.b16 %v224, %v223
      %v230 = vunpack.c.l.b16 %v210
      %v231 = vunpack.c.l.b16 %v211
      %v232 = vunpack.c.l.b16 %v212
      %v233 = vunpack.c.l.b16 %v213
      %v234 = vpack.c.b16 %v231, %v230
      %v235 = vpack.c.b16 %v233, %v232
      %vm238 = vcmask 261120
      %v240 = vsel %vm238, %v225, 0
      %242 = vmatprep.subr.bf16.mxu0 0
      %243 = vmatpush1.bf16.msra.mxu0 %v234
      %244 = vmatprep.subr.bf16.mxu0 0
      %245 = vmatpush1.bf16.msra.mxu0 %v235
      %246 = vmatprep.subr.bf16.mxu0 0
      %247 = vmatpush1.bf16.msra.mxu0 0
      %248 = vmatprep.subr.bf16.mxu0 0
      %249 = vmatpush1.bf16.msra.mxu0 0
      %250 = vmatprep.subr.bf16.mxu0 0
      %251 = vmatpush1.bf16.msra.mxu0 0
      %252 = vmatprep.subr.bf16.mxu0 0
      %253 = vmatpush1.bf16.msra.mxu0 0
      %254 = vmatprep.subr.bf16.mxu0 0
      %255 = vmatpush1.bf16.msra.mxu0 0
      %256 = vmatprep.subr.bf16.mxu0 0
      %257 = vmatpush1.bf16.msra.mxu0 0
      %258 = vmatprep.subr.bf16.mxu0 0
      %259 = vmatpush1.bf16.msra.mxu0 0
      %260 = vmatprep.subr.bf16.mxu0 0
      %261 = vmatpush1.bf16.msra.mxu0 0
      %262 = vmatprep.subr.bf16.mxu0 0
      %263 = vmatpush1.bf16.msra.mxu0 0
      %264 = vmatprep.subr.bf16.mxu0 0
      %265 = vmatpush1.bf16.msra.mxu0 0
      %266 = vmatprep.subr.bf16.mxu0 0
      %267 = vmatpush1.bf16.msra.mxu0 0
      %268 = vmatprep.subr.bf16.mxu0 0
      %269 = vmatpush1.bf16.msra.mxu0 0
      %270 = vmatprep.subr.bf16.mxu0 0
      %271 = vmatpush1.bf16.msra.mxu0 0
      %272 = vmatprep.subr.bf16.mxu0 0
      %273 = vmatpush1.bf16.msra.mxu0 0
      %274 = vmatprep.mubr.bf16.mxu0 0
      %275 = vmatmul.mubr.bf16.gmra.mrb[0].mxu0 %v240
      %v276 = vpop.f32.mrb[0].mxu0
      %v277 = vadd.f32 %v219, %v276
      %v278 = vpop.f32.mrb[0].mxu0
      %v279 = vpop.f32.mrb[0].mxu0
      %v280 = vadd.f32 %v219, %v279
      %v281 = vpop.f32.mrb[0].mxu0
      %282 = vdwg.mxu0
      %v283 = vpack.c.bf16 %v280, %v277
      %v285 = vunpack.c.l.b16 %v283
      %v286 = vunpack.c.h.b16 %v283
      %v287 = vpack.c.b16 %v285, %v285
      %v288 = vpack.c.b16 %v286, %v286
      %vm291 = vcmask 519168
      %292 = vst.msk [vmem:[%s206] sm:$0xf] %vm291, %v287
      %293 = vst.msk [vmem:[%s206 + $0x4] sm:$0xf] %vm291, %v288
      %s294 = scalar_lea.vmem %s1, 16
      %v295 = vld [vmem:[%s294] sm:$0xf]
      %v296 = vld [vmem:[%s294 + $0x4] sm:$0xf]
      %v297 = vld [vmem:[%s294 + $0x8] sm:$0xf]
      %v298 = vld [vmem:[%s294 + $0xc] sm:$0xf]
      %s299 = scalar_lea.vmem %s2, 1
      %v300 = vld [vmem:[%s299] sm:$0x1]
      %v302 = vlaneseq
      %v303 = vshrl.u32 %v302, 7
      %v304 = vsub.s32 0, %v303
      %v305 = vrot.slane %v300, %v304
      %v311 = vunpack.c.l.b16 %v295
      %v312 = vunpack.c.l.b16 %v296
      %v313 = vunpack.c.l.b16 %v297
      %v314 = vunpack.c.l.b16 %v298
      %v315 = vpack.c.b16 %v312, %v311
      %v316 = vpack.c.b16 %v314, %v313
      %319 = vmatprep.subr.bf16.mxu0 0
      %320 = vmatpush1.bf16.msra.mxu0 %v315
      %321 = vmatprep.subr.bf16.mxu0 0
      %322 = vmatpush1.bf16.msra.mxu0 %v316
      %323 = vmatprep.subr.bf16.mxu0 0
      %324 = vmatpush1.bf16.msra.mxu0 0
      %325 = vmatprep.subr.bf16.mxu0 0
      %326 = vmatpush1.bf16.msra.mxu0 0
      %327 = vmatprep.subr.bf16.mxu0 0
      %328 = vmatpush1.bf16.msra.mxu0 0
      %329 = vmatprep.subr.bf16.mxu0 0
      %330 = vmatpush1.bf16.msra.mxu0 0
      %331 = vmatprep.subr.bf16.mxu0 0
      %332 = vmatpush1.bf16.msra.mxu0 0
      %333 = vmatprep.subr.bf16.mxu0 0
      %334 = vmatpush1.bf16.msra.mxu0 0
      %335 = vmatprep.subr.bf16.mxu0 0
      %336 = vmatpush1.bf16.msra.mxu0 0
      %337 = vmatprep.subr.bf16.mxu0 0
      %338 = vmatpush1.bf16.msra.mxu0 0
      %339 = vmatprep.subr.bf16.mxu0 0
      %340 = vmatpush1.bf16.msra.mxu0 0
      %341 = vmatprep.subr.bf16.mxu0 0
      %342 = vmatpush1.bf16.msra.mxu0 0
      %343 = vmatprep.subr.bf16.mxu0 0
      %344 = vmatpush1.bf16.msra.mxu0 0
      %345 = vmatprep.subr.bf16.mxu0 0
      %346 = vmatpush1.bf16.msra.mxu0 0
      %347 = vmatprep.subr.bf16.mxu0 0
      %348 = vmatpush1.bf16.msra.mxu0 0
      %349 = vmatprep.subr.bf16.mxu0 0
      %350 = vmatpush1.bf16.msra.mxu0 0
      %351 = vmatprep.mubr.bf16.mxu0 0
      %352 = vmatmul.mubr.bf16.gmra.mrb[0].mxu0 %v240
      %v353 = vpop.f32.mrb[0].mxu0
      %v354 = vadd.f32 %v305, %v353
      %v355 = vpop.f32.mrb[0].mxu0
      %v356 = vpop.f32.mrb[0].mxu0
      %v357 = vadd.f32 %v305, %v356
      %v358 = vpop.f32.mrb[0].mxu0
      %359 = vdwg.mxu0
      %v360 = vpack.c.bf16 %v357, %v354
      %v362 = vunpack.c.l.b16 %v360
      %v363 = vunpack.c.h.b16 %v360
      %v364 = vpack.c.b16 %v362, %v362
      %v365 = vpack.c.b16 %v363, %v363
      %s368 = scalar_lea.vmem %s206, 8
      %369 = vst.msk [vmem:[%s368] sm:$0xf] %vm291, %v364
      %370 = vst.msk [vmem:[%s368 + $0x4] sm:$0xf] %vm291, %v365
      %p371 = scmp.lt.s32.totalorder %s18, 1
      %s372 = scalar_select %p371, %s18, 1
      %p373 = scmp.lt.s32.totalorder %s19, 15
      %s374 = scalar_select %p373, %s19, 15
      %s375 = smul.addr %s374, 4
      %s376 = smul.addr %s372, 64
      %s377 = sadd.s32 %s375, %s376
      %s378 = smul.addr %s377, 4
      %s379 = scalar_lea.vmem %s3, %s378
      // Predicated region
      $region33: #{proto_forward.5} parent=31 // pred_check
        %p380 = pneg %p116
      $region34: #{proto_forward.5} parent=31 // pred_check_branch
        %382 = sbr.rel (%p380) target = $region36
      $region35: #{proto_forward.5} parent=31 // pred_region
        _
      $region36: #{proto_forward.5} parent=31 // pred_fallthru
        _
    $region32: #{proto_forward.5} parent=5 // pred_fallthru
      _
    %p383 = scmp.le.s32.totalorder 2, %s9
    // Predicated region
    $region37: #{proto_forward.5} parent=5 // pred_check
      %p384 = pneg %p383
    $region38: #{proto_forward.5} parent=5 // pred_check_branch
      %386 = sbr.rel (%p384) target = $region40
    $region39: #{proto_forward.5} parent=5 // pred_region
      %s387 = ssub.s32 %s9, 2
      // Predicated region
      $region41: #{proto_forward.5} parent=39 // pred_check
        %p388 = pneg %p122
      $region42: #{proto_forward.5} parent=39 // pred_check_branch
        %390 = sbr.rel (%p388) target = $region44
      $region43: #{proto_forward.5} parent=39 // pred_region
        %p391 = scmp.lt.s32.totalorder %s20, 1
        %s392 = scalar_select %p391, %s20, 1
        %p393 = scmp.lt.s32.totalorder %s21, 15
        %s394 = scalar_select %p393, %s21, 15
        %s395 = smul.addr %s394, 4
        %s396 = smul.addr %s392, 64
        %s397 = sadd.s32 %s395, %s396
        %s398 = smul.addr %s397, 4
        %s399 = scalar_lea.vmem %s3, %s398
      $region44: #{proto_forward.5} parent=39 // pred_fallthru
        _
    $region40: #{proto_forward.5} parent=5 // pred_fallthru
      _
  $region6: #{proto_forward.5} parent=0 // loop_footer
    %s13 = sadd.s32 1, %s9
  $region7: #{proto_forward.5} parent=0 // loop_footer_branch
    %8 = sbr.rel target = $region3
  $region8: #{proto_forward.5} parent=0 // loop_exit
    _

// kernel: proto_forward.4
$region0: #{proto_forward.4}
  #allocation0 [shape = 'u32[]', space=smem, size = 0x4, offset = 0x4, fixed_abs, tag = 'smem constant byte address 0x4 - core index']
  #allocation1 [shape = 'u32[144,128]{1,0:T(1,128)}', space=vmem, size = 0x12000, scoped, tag = 'internal scratch']
  %s0 = inlined_call_operand.vmem [shape: bf16[2,18,18,4], index: 0, kind: input, shape index: {}, may-alias: {0,1,2}]
  %s1 = inlined_call_operand.vmem [shape: bf16[2,18,18,4], index: 1, kind: input, shape index: {}, may-alias: {0,1,2}]
  %s2 = inlined_call_operand.vmem [shape: bf16[2,18,18,4], index: 2, kind: input, shape index: {}, may-alias: {0,1,2}]
  %s3 = inlined_call_operand.vmem [shape: bf16[9,4,32], index: 3, kind: input, shape index: {}]
  %s4 = inlined_call_operand.vmem [shape: f32[1,32], index: 4, kind: input, shape index: {}]
  %s5 = inlined_call_operand.vmem [shape: f32[1,32], index: 5, kind: input, shape index: {}]
  %s6 = inlined_call_operand.vmem [shape: bf16[2,16,16,32], index: 6, kind: output, shape index: {}]
  %s7 = sld [smem:[#allocation0]]
  $region57: #{proto_forward.4} parent=0
    _
  %s9 = ssub.s32 1, %s7
  %s10 = scalar_select 0, %s9, %s7
  loop: start=0, step=1, limit=34
  $region2: #{proto_forward.4} parent=0 // loop_pre_header
    _
  $region3: #{proto_forward.4} parent=0 // loop_header
    %s12 = sphi 0, %s16
    %p13 = scmp.ge.s32.totalorder %s12, 34
    %s19 = sphi 0, %s31
    %s20 = sphi 0, %s27
    %s21 = sphi 0, %s19
    %s22 = sphi 0, %s20
    %s23 = sphi 0, %s21
    %s24 = sphi 0, %s22
    %s36 = sphi 0, %s38
    %s39 = sphi 0, %s36
    %s40 = sphi 0, %s39
    %s56 = sphi 0, %s40
    %s66 = sphi 0, %s68
    %s69 = sphi 0, %s66
    %s70 = sphi 0, %s69
    %s86 = sphi 0, %s70
    %s96 = sphi 0, %s98
    %s99 = sphi 0, %s96
    %s100 = sphi 0, %s99
    %s116 = sphi 0, %s100
    %s120 = sphi 0, %s120
    %s122 = sphi 0, %s120
    %s123 = sphi 0, %s122
    %s137 = sphi 0, %s123
    %s141 = sphi 0, %s141
    %s143 = sphi 0, %s141
    %s144 = sphi 0, %s143
    %s158 = sphi 0, %s144
    %s162 = sphi 0, %s162
    %s164 = sphi 0, %s162
    %s165 = sphi 0, %s164
    %s179 = sphi 0, %s165
    %s187 = sphi 0, %s189
    %s190 = sphi 0, %s187
    %s191 = sphi 0, %s190
    %s207 = sphi 0, %s191
  $region4: #{proto_forward.4} parent=0 // loop_header_branch
    %15 = sbr.rel (%p13) target = $region8
  $region5: #{proto_forward.4} parent=0 // loop_body
    %s17 = ssub.s32 %s12, 1
    %s18 = ssub.s32 %s12, 2
    %s25 = sadd.s32 1, %s20
    %p26 = scmp.ge.s32.totalorder %s25, 16
    %s27 = scalar_select %p26, 0, %s25
    %s28 = sadd.s32 1, %s19
    %s29 = scalar_select %p26, %s28, %s19
    %p30 = scmp.ge.s32.totalorder %s29, 2
    %s31 = scalar_select %p30, 0, %s29
    %s32 = ssub.s32 %s19, %s31
    %s33 = ssub.s32 %s20, %s27
    %s34 = sor.u32 %s32, %s33
    %p35 = scmp.eq.s32.totalorder %s34, 0
    %s37 = sadd.s32 %s36, 1
    %s38 = scalar_select %p35, %s36, %s37
    %p41 = pneg %p35
    %p42 = scmp.eq.s32.totalorder %s12, 31
    %p43 = por %p41, %p42
    %p44 = scmp.ne.s32.totalorder %s36, %s39
    %p45 = scmp.eq.s32.totalorder %s12, 0
    %p46 = por %p44, %p45
    %p47 = scmp.ne.s32.totalorder %s36, %s39
    %p48 = scmp.eq.s32.totalorder %s17, 31
    %p49 = por %p47, %p48
    %p50 = scmp.ne.s32.totalorder %s39, %s40
    %p51 = scmp.eq.s32.totalorder %s17, 0
    %p52 = por %p50, %p51
    %p53 = scmp.ne.s32.totalorder %s39, %s40
    %p54 = scmp.eq.s32.totalorder %s18, 31
    %p55 = por %p53, %p54
    %p57 = scmp.ne.s32.totalorder %s40, %s56
    %p58 = scmp.eq.s32.totalorder %s18, 0
    %p59 = por %p57, %p58
    %s60 = sadd.s32 %s20, 1
    %s61 = sadd.s32 %s27, 1
    %s62 = ssub.s32 %s19, %s31
    %s63 = ssub.s32 %s60, %s61
    %s64 = sor.u32 %s62, %s63
    %p65 = scmp.eq.s32.totalorder %s64, 0
    %s67 = sadd.s32 %s66, 1
    %s68 = scalar_select %p65, %s66, %s67
    %p71 = pneg %p65
    %p72 = scmp.eq.s32.totalorder %s12, 31
    %p73 = por %p71, %p72
    %p74 = scmp.ne.s32.totalorder %s66, %s69
    %p75 = scmp.eq.s32.totalorder %s12, 0
    %p76 = por %p74, %p75
    %p77 = scmp.ne.s32.totalorder %s66, %s69
    %p78 = scmp.eq.s32.totalorder %s17, 31
    %p79 = por %p77, %p78
    %p80 = scmp.ne.s32.totalorder %s69, %s70
    %p81 = scmp.eq.s32.totalorder %s17, 0
    %p82 = por %p80, %p81
    %p83 = scmp.ne.s32.totalorder %s69, %s70
    %p84 = scmp.eq.s32.totalorder %s18, 31
    %p85 = por %p83, %p84
    %p87 = scmp.ne.s32.totalorder %s70, %s86
    %p88 = scmp.eq.s32.totalorder %s18, 0
    %p89 = por %p87, %p88
    %s90 = sadd.s32 %s20, 2
    %s91 = sadd.s32 %s27, 2
    %s92 = ssub.s32 %s19, %s31
    %s93 = ssub.s32 %s90, %s91
    %s94 = sor.u32 %s92, %s93
    %p95 = scmp.eq.s32.totalorder %s94, 0
    %s97 = sadd.s32 %s96, 1
    %s98 = scalar_select %p95, %s96, %s97
    %p101 = pneg %p95
    %p102 = scmp.eq.s32.totalorder %s12, 31
    %p103 = por %p101, %p102
    %p104 = scmp.ne.s32.totalorder %s96, %s99
    %p105 = scmp.eq.s32.totalorder %s12, 0
    %p106 = por %p104, %p105
    %p107 = scmp.ne.s32.totalorder %s96, %s99
    %p108 = scmp.eq.s32.totalorder %s17, 31
    %p109 = por %p107, %p108
    %p110 = scmp.ne.s32.totalorder %s99, %s100
    %p111 = scmp.eq.s32.totalorder %s17, 0
    %p112 = por %p110, %p111
    %p113 = scmp.ne.s32.totalorder %s99, %s100
    %p114 = scmp.eq.s32.totalorder %s18, 31
    %p115 = por %p113, %p114
    %p117 = scmp.ne.s32.totalorder %s100, %s116
    %p118 = scmp.eq.s32.totalorder %s18, 0
    %p119 = por %p117, %p118
    %s121 = sadd.s32 %s120, 1
    %p124 = scmp.eq.s32.totalorder %s12, 31
    %p125 = scmp.ne.s32.totalorder %s120, %s122
    %p126 = scmp.eq.s32.totalorder %s12, 0
    %p127 = por %p125, %p126
    %p128 = scmp.ne.s32.totalorder %s120, %s122
    %p129 = scmp.eq.s32.totalorder %s17, 31
    %p130 = por %p128, %p129
    %p131 = scmp.ne.s32.totalorder %s122, %s123
    %p132 = scmp.eq.s32.totalorder %s17, 0
    %p133 = por %p131, %p132
    %p134 = scmp.ne.s32.totalorder %s122, %s123
    %p135 = scmp.eq.s32.totalorder %s18, 31
    %p136 = por %p134, %p135
    %p138 = scmp.ne.s32.totalorder %s123, %s137
    %p139 = scmp.eq.s32.totalorder %s18, 0
    %p140 = por %p138, %p139
    %s142 = sadd.s32 %s141, 1
    %p145 = scmp.eq.s32.totalorder %s12, 31
    %p146 = scmp.ne.s32.totalorder %s141, %s143
    %p147 = scmp.eq.s32.totalorder %s12, 0
    %p148 = por %p146, %p147
    %p149 = scmp.ne.s32.totalorder %s141, %s143
    %p150 = scmp.eq.s32.totalorder %s17, 31
    %p151 = por %p149, %p150
    %p152 = scmp.ne.s32.totalorder %s143, %s144
    %p153 = scmp.eq.s32.totalorder %s17, 0
    %p154 = por %p152, %p153
    %p155 = scmp.ne.s32.totalorder %s143, %s144
    %p156 = scmp.eq.s32.totalorder %s18, 31
    %p157 = por %p155, %p156
    %p159 = scmp.ne.s32.totalorder %s144, %s158
    %p160 = scmp.eq.s32.totalorder %s18, 0
    %p161 = por %p159, %p160
    %s163 = sadd.s32 %s162, 1
    %p166 = scmp.eq.s32.totalorder %s12, 31
    %p167 = scmp.ne.s32.totalorder %s162, %s164
    %p168 = scmp.eq.s32.totalorder %s12, 0
    %p169 = por %p167, %p168
    %p170 = scmp.ne.s32.totalorder %s162, %s164
    %p171 = scmp.eq.s32.totalorder %s17, 31
    %p172 = por %p170, %p171
    %p173 = scmp.ne.s32.totalorder %s164, %s165
    %p174 = scmp.eq.s32.totalorder %s17, 0
    %p175 = por %p173, %p174
    %p176 = scmp.ne.s32.totalorder %s164, %s165
    %p177 = scmp.eq.s32.totalorder %s18, 31
    %p178 = por %p176, %p177
    %p180 = scmp.ne.s32.totalorder %s165, %s179
    %p181 = scmp.eq.s32.totalorder %s18, 0
    %p182 = por %p180, %p181
    %s183 = ssub.s32 %s19, %s31
    %s184 = ssub.s32 %s20, %s27
    %s185 = sor.u32 %s183, %s184
    %p186 = scmp.eq.s32.totalorder %s185, 0
    %s188 = sadd.s32 %s187, 1
    %s189 = scalar_select %p186, %s187, %s188
    %p192 = pneg %p186
    %p193 = scmp.eq.s32.totalorder %s12, 31
    %p194 = por %p192, %p193
    %p195 = scmp.ne.s32.totalorder %s187, %s190
    %p196 = scmp.eq.s32.totalorder %s12, 0
    %p197 = por %p195, %p196
    %p198 = scmp.ne.s32.totalorder %s187, %s190
    %p199 = scmp.eq.s32.totalorder %s17, 31
    %p200 = por %p198, %p199
    %p201 = scmp.ne.s32.totalorder %s190, %s191
    %p202 = scmp.eq.s32.totalorder %s17, 0
    %p203 = por %p201, %p202
    %p204 = scmp.ne.s32.totalorder %s190, %s191
    %p205 = scmp.eq.s32.totalorder %s18, 31
    %p206 = por %p204, %p205
    %p208 = scmp.ne.s32.totalorder %s191, %s207
    %p209 = scmp.eq.s32.totalorder %s18, 0
    %p210 = por %p208, %p209
    %p211 = scmp.le.s32.totalorder 1, %s12
    %p212 = scmp.lt.s32.totalorder %s12, 33
    %p213 = pnand %p211, %p212
    %p214 = pneg %p213
    // Predicated region
    $region9: #{proto_forward.4} parent=5 // pred_check
      _
    $region10: #{proto_forward.4} parent=5 // pred_check_branch
      %216 = sbr.rel (%p213) target = $region12
    $region11: #{proto_forward.4} parent=5 // pred_region
      %s217 = ssub.s32 %s12, 1
      // Predicated region
      $region13: #{proto_forward.4} parent=11 // pred_check
        %p218 = pneg %p133
      $region14: #{proto_forward.4} parent=11 // pred_check_branch
        %220 = sbr.rel (%p218) target = $region16
      $region15: #{proto_forward.4} parent=11 // pred_region
        _
      $region16: #{proto_forward.4} parent=11 // pred_fallthru
        _
      // Predicated region
      $region17: #{proto_forward.4} parent=11 // pred_check
        %p221 = pneg %p154
      $region18: #{proto_forward.4} parent=11 // pred_check_branch
        %223 = sbr.rel (%p221) target = $region20
      $region19: #{proto_forward.4} parent=11 // pred_region
        _
      $region20: #{proto_forward.4} parent=11 // pred_fallthru
        _
      // Predicated region
      $region21: #{proto_forward.4} parent=11 // pred_check
        %p224 = pneg %p175
      $region22: #{proto_forward.4} parent=11 // pred_check_branch
        %226 = sbr.rel (%p224) target = $region24
      $region23: #{proto_forward.4} parent=11 // pred_region
        _
      $region24: #{proto_forward.4} parent=11 // pred_fallthru
        _
    $region12: #{proto_forward.4} parent=5 // pred_fallthru
      _
    %p227 = scmp.lt.s32.totalorder %s12, 32
    // Predicated region
    $region25: #{proto_forward.4} parent=5 // pred_check
      %p228 = pneg %p227
    $region26: #{proto_forward.4} parent=5 // pred_check_branch
      %230 = sbr.rel (%p228) target = $region28
    $region27: #{proto_forward.4} parent=5 // pred_region
      // Predicated region
      $region29: #{proto_forward.4} parent=27 // pred_check
        %p231 = pneg %p46
      $region30: #{proto_forward.4} parent=27 // pred_check_branch
        %233 = sbr.rel (%p231) target = $region32
      $region31: #{proto_forward.4} parent=27 // pred_region
        %p234 = scmp.lt.s32.totalorder %s19, 1
        %s235 = scalar_select %p234, %s19, 1
        %p236 = scmp.lt.s32.totalorder %s20, 17
        %s237 = scalar_select %p236, %s20, 17
        %s238 = smul.addr %s237, 3
        %s239 = smul.addr %s235, 54
        %s240 = sadd.s32 %s238, %s239
        %s241 = smul.addr %s240, 4
        %s242 = scalar_lea.vmem %s0, %s241
      $region32: #{proto_forward.4} parent=27 // pred_fallthru
        _
      // Predicated region
      $region33: #{proto_forward.4} parent=27 // pred_check
        %p243 = pneg %p76
      $region34: #{proto_forward.4} parent=27 // pred_check_branch
        %245 = sbr.rel (%p243) target = $region36
      $region35: #{proto_forward.4} parent=27 // pred_region
        %s246 = sadd.s32 %s20, 1
        %p247 = scmp.lt.s32.totalorder %s19, 1
        %s248 = scalar_select %p247, %s19, 1
        %p249 = scmp.lt.s32.totalorder %s246, 17
        %s250 = scalar_select %p249, %s246, 17
        %s251 = smul.addr %s250, 3
        %s252 = smul.addr %s248, 54
        %s253 = sadd.s32 %s251, %s252
        %s254 = smul.addr %s253, 4
        %s255 = scalar_lea.vmem %s1, %s254
        %s256 = sadd.s32 %s20, 1
      $region36: #{proto_forward.4} parent=27 // pred_fallthru
        _
      // Predicated region
      $region37: #{proto_forward.4} parent=27 // pred_check
        %p257 = pneg %p106
      $region38: #{proto_forward.4} parent=27 // pred_check_branch
        %259 = sbr.rel (%p257) target = $region40
      $region39: #{proto_forward.4} parent=27 // pred_region
        %s260 = sadd.s32 %s20, 2
        %p261 = scmp.lt.s32.totalorder %s19, 1
        %s262 = scalar_select %p261, %s19, 1
        %p263 = scmp.lt.s32.totalorder %s260, 17
        %s264 = scalar_select %p263, %s260, 17
        %s265 = smul.addr %s264, 3
        %s266 = smul.addr %s262, 54
        %s267 = sadd.s32 %s265, %s266
        %s268 = smul.addr %s267, 4
        %s269 = scalar_lea.vmem %s2, %s268
        %s270 = sadd.s32 %s20, 2
      $region40: #{proto_forward.4} parent=27 // pred_fallthru
        _
    $region28: #{proto_forward.4} parent=5 // pred_fallthru
      _
    %p271 = scmp.le.s32.totalorder 1, %s12
    %p272 = scmp.lt.s32.totalorder %s12, 33
    %p273 = pnand %p271, %p272
    %p274 = pneg %p273
    // Predicated region
    $region41: #{proto_forward.4} parent=5 // pred_check
      _
    $region42: #{proto_forward.4} parent=5 // pred_check_branch
      %276 = sbr.rel (%p273) target = $region44
    $region43: #{proto_forward.4} parent=5 // pred_region
      %s277 = ssub.s32 %s12, 1
      %p278 = scmp.lt.s32.totalorder %s21, 1
      %s279 = scalar_select %p278, %s21, 1
      %p280 = scmp.lt.s32.totalorder %s22, 17
      %s281 = scalar_select %p280, %s22, 17
      %s282 = smul.addr %s281, 3
      %s283 = smul.addr %s279, 54
      %s284 = sadd.s32 %s282, %s283
      %s285 = smul.addr %s284, 4
      %s286 = scalar_lea.vmem %s0, %s285
      %p287 = pneg %p52
      %p288 = pneg %p49
      %s289 = sadd.s32 %s22, 1
      %p290 = scmp.lt.s32.totalorder %s21, 1
      %s291 = scalar_select %p290, %s21, 1
      %p292 = scmp.lt.s32.totalorder %s289, 17
      %s293 = scalar_select %p292, %s289, 17
      %s294 = smul.addr %s293, 3
      %s295 = smul.addr %s291, 54
      %s296 = sadd.s32 %s294, %s295
      %s297 = smul.addr %s296, 4
      %s298 = scalar_lea.vmem %s1, %s297
      %p299 = pneg %p82
      %p300 = pneg %p79
      %s301 = sadd.s32 %s22, 2
      %p302 = scmp.lt.s32.totalorder %s21, 1
      %s303 = scalar_select %p302, %s21, 1
      %p304 = scmp.lt.s32.totalorder %s301, 17
      %s305 = scalar_select %p304, %s301, 17
      %s306 = smul.addr %s305, 3
      %s307 = smul.addr %s303, 54
      %s308 = sadd.s32 %s306, %s307
      %s309 = smul.addr %s308, 4
      %s310 = scalar_lea.vmem %s2, %s309
      %p311 = pneg %p112
      %p312 = pneg %p109
      %p313 = pneg %p133
      %p314 = pneg %p130
      %p315 = pneg %p154
      %p316 = pneg %p151
      %p317 = pneg %p175
      %p318 = pneg %p172
      %p319 = pneg %p203
      %p320 = pneg %p200
      %p321 = scmp.lt.s32.totalorder %s21, 1
      %s322 = scalar_select %p321, %s21, 1
      %p323 = scmp.lt.s32.totalorder %s22, 15
      %s324 = scalar_select %p323, %s22, 15
      %s325 = smul.addr %s324, 2
      %s326 = smul.addr %s322, 32
      %s327 = sadd.s32 %s325, %s326
      %s328 = smul.addr %s327, 4
      %s329 = scalar_lea.vmem %s6, %s328
      %p330 = scmp.lt.s32.totalorder %s21, 1
      %s331 = scalar_select %p330, %s21, 1
      %p332 = scmp.lt.s32.totalorder %s22, 17
      %s333 = scalar_select %p332, %s22, 17
      %s334 = smul.addr %s333, 3
      %s335 = smul.addr %s331, 54
      %s336 = sadd.s32 %s334, %s335
      %s337 = smul.addr %s336, 4
      %s338 = scalar_lea.vmem %s0, %s337
      %s339 = sadd.s32 %s22, 1
      %p340 = scmp.lt.s32.totalorder %s21, 1
      %s341 = scalar_select %p340, %s21, 1
      %p342 = scmp.lt.s32.totalorder %s339, 17
      %s343 = scalar_select %p342, %s339, 17
      %s344 = smul.addr %s343, 3
      %s345 = smul.addr %s341, 54
      %s346 = sadd.s32 %s344, %s345
      %s347 = smul.addr %s346, 4
      %s348 = scalar_lea.vmem %s1, %s347
      %s349 = sadd.s32 %s22, 1
      %s350 = sadd.s32 %s22, 2
      %p351 = scmp.lt.s32.totalorder %s21, 1
      %s352 = scalar_select %p351, %s21, 1
      %p353 = scmp.lt.s32.totalorder %s350, 17
      %s354 = scalar_select %p353, %s350, 17
      %s355 = smul.addr %s354, 3
      %s356 = smul.addr %s352, 54
      %s357 = sadd.s32 %s355, %s356
      %s358 = smul.addr %s357, 4
      %s359 = scalar_lea.vmem %s2, %s358
      %s360 = sadd.s32 %s22, 2
      %p361 = scmp.lt.s32.totalorder %s21, 1
      %s362 = scalar_select %p361, %s21, 1
      %p363 = scmp.lt.s32.totalorder %s22, 15
      %s364 = scalar_select %p363, %s22, 15
      %s365 = smul.addr %s364, 2
      %s366 = smul.addr %s362, 32
      %s367 = sadd.s32 %s365, %s366
      %s368 = smul.addr %s367, 4
      %s369 = scalar_lea.vmem %s6, %s368
      %v371 = vld [vmem:[%s338] sm:$0xf]
      %v372 = vld [vmem:[%s338 + $0x4] sm:$0xf]
      %v373 = vld [vmem:[%s338 + $0x8] sm:$0x1]
      %v374 = vld [vmem:[%s348] sm:$0xf]
      %v375 = vld [vmem:[%s348 + $0x4] sm:$0xf]
      %v376 = vld [vmem:[%s348 + $0x8] sm:$0x1]
      %v377 = vld [vmem:[%s359] sm:$0xf]
      %v378 = vld [vmem:[%s359 + $0x4] sm:$0xf]
      %v379 = vld [vmem:[%s359 + $0x8] sm:$0x1]
      %v380 = vld [vmem:[%s3] sm:$0x3]
      %s381 = scalar_lea.vmem %s3, 2
      %v382 = vld [vmem:[%s381] sm:$0x3]
      %v386 = vunpack.c.l.b16 %v371
      %v387 = vunpack.c.l.b16 %v372
      %v388 = vunpack.c.l.b16 %v373
      %v389 = vpack.c.b16 %v387, %v386
      %v390 = vpack.c.b16 %v388, %v388
      %vm391 = vsmask.f32 7424
      %v393 = vshrl.u32 %v389, 16
      %v395 = vshll.u32 %v389, 16
      %v397 = vrot.slane %v395, 1
      %v398 = vor.u32 %v393, %v397
      %v400 = vshll.u32 %v390, 16
      %v402 = vrot.slane %v400, 1
      %v403 = vsel %vm391, %v398, %v402
      %vm404 = vcmask 31744
      %v406 = vsel %vm404, %v403, 0
      %vm408 = vcmask 1041408
      %v410 = vsel %vm408, %v382, 0
      %412 = vmatprep.subr.bf16.mxu0 0
      %413 = vmatpush1.bf16.msra.mxu0 %v410
      %414 = vmatprep.subr.bf16.mxu0 0
      %415 = vmatpush1.bf16.msra.mxu0 0
      %416 = vmatprep.subr.bf16.mxu0 0
      %417 = vmatpush1.bf16.msra.mxu0 0
      %418 = vmatprep.subr.bf16.mxu0 0
      %419 = vmatpush1.bf16.msra.mxu0 0
      %420 = vmatprep.subr.bf16.mxu0 0
      %421 = vmatpush1.bf16.msra.mxu0 0
      %422 = vmatprep.subr.bf16.mxu0 0
      %423 = vmatpush1.bf16.msra.mxu0 0
      %424 = vmatprep.subr.bf16.mxu0 0
      %425 = vmatpush1.bf16.msra.mxu0 0
      %426 = vmatprep.subr.bf16.mxu0 0
      %427 = vmatpush1.bf16.msra.mxu0 0
      %428 = vmatprep.subr.bf16.mxu0 0
      %429 = vmatpush1.bf16.msra.mxu0 0
      %430 = vmatprep.subr.bf16.mxu0 0
      %431 = vmatpush1.bf16.msra.mxu0 0
      %432 = vmatprep.subr.bf16.mxu0 0
      %433 = vmatpush1.bf16.msra.mxu0 0
      %434 = vmatprep.subr.bf16.mxu0 0
      %435 = vmatpush1.bf16.msra.mxu0 0
      %436 = vmatprep.subr.bf16.mxu0 0
      %437 = vmatpush1.bf16.msra.mxu0 0
      %438 = vmatprep.subr.bf16.mxu0 0
      %439 = vmatpush1.bf16.msra.mxu0 0
      %440 = vmatprep.subr.bf16.mxu0 0
      %441 = vmatpush1.bf16.msra.mxu0 0
      %442 = vmatprep.subr.bf16.mxu0 0
      %443 = vmatpush1.bf16.msra.mxu0 0
      %444 = vmatprep.mubr.bf16.mxu0 0
      %445 = vmatmul.mubr.bf16.gmra.mrb[0].mxu0 %v406
      %v446 = vpop.f32.mrb[0].mxu0
      %v447 = vadd.f32 0.0, %v446
      %v448 = vpop.f32.mrb[0].mxu0
      %v449 = vpop.f32.mrb[0].mxu0
      %v450 = vadd.f32 0.0, %v449
      %v451 = vpop.f32.mrb[0].mxu0
      %452 = vdwg.mxu0
      %v453 = vsel %vm404, %v389, 0
      %v456 = vsel %vm408, %v380, 0
      %458 = vmatprep.subr.bf16.mxu0 0
      %459 = vmatpush1.bf16.msra.mxu0 %v456
      %460 = vmatprep.subr.bf16.mxu0 0
      %461 = vmatpush1.bf16.msra.mxu0 0
      %462 = vmatprep.subr.bf16.mxu0 0
      %463 = vmatpush1.bf16.msra.mxu0 0
      %464 = vmatprep.subr.bf16.mxu0 0
      %465 = vmatpush1.bf16.msra.mxu0 0
      %466 = vmatprep.subr.bf16.mxu0 0
      %467 = vmatpush1.bf16.msra.mxu0 0
      %468 = vmatprep.subr.bf16.mxu0 0
      %469 = vmatpush1.bf16.msra.mxu0 0
      %470 = vmatprep.subr.bf16.mxu0 0
      %471 = vmatpush1.bf16.msra.mxu0 0
      %472 = vmatprep.subr.bf16.mxu0 0
      %473 = vmatpush1.bf16.msra.mxu0 0
      %474 = vmatprep.subr.bf16.mxu0 0
      %475 = vmatpush1.bf16.msra.mxu0 0
      %476 = vmatprep.subr.bf16.mxu0 0
      %477 = vmatpush1.bf16.msra.mxu0 0
      %478 = vmatprep.subr.bf16.mxu0 0
      %479 = vmatpush1.bf16.msra.mxu0 0
      %480 = vmatprep.subr.bf16.mxu0 0
      %481 = vmatpush1.bf16.msra.mxu0 0
      %482 = vmatprep.subr.bf16.mxu0 0
      %483 = vmatpush1.bf16.msra.mxu0 0
      %484 = vmatprep.subr.bf16.mxu0 0
      %485 = vmatpush1.bf16.msra.mxu0 0
      %486 = vmatprep.subr.bf16.mxu0 0
      %487 = vmatpush1.bf16.msra.mxu0 0
      %488 = vmatprep.subr.bf16.mxu0 0
      %489 = vmatpush1.bf16.msra.mxu0 0
      %490 = vmatprep.mubr.bf16.mxu0 0
      %491 = vmatmul.mubr.bf16.gmra.mrb[0].mxu0 %v453
      %v492 = vpop.f32.mrb[0].mxu0
      %v493 = vadd.f32 %v447, %v492
      %v494 = vpop.f32.mrb[0].mxu0
      %v495 = vpop.f32.mrb[0].mxu0
      %v496 = vadd.f32 %v450, %v495
      %v497 = vpop.f32.mrb[0].mxu0
      %498 = vdwg.mxu0
      %s499 = scalar_lea.vmem %s3, 4
      %v500 = vld [vmem:[%s499] sm:$0x3]
      %vm501 = vcmask 1046528
      %v502 = vrot.slane %v389, 1
      %v503 = vrot.slane %v390, 1
      %v504 = vsel %vm501, %v502, %v503
      %v506 = vsel %vm404, %v504, 0
      %v509 = vsel %vm408, %v500, 0
      %511 = vmatprep.subr.bf16.mxu0 0
      %512 = vmatpush1.bf16.msra.mxu0 %v509
      %513 = vmatprep.subr.bf16.mxu0 0
      %514 = vmatpush1.bf16.msra.mxu0 0
      %515 = vmatprep.subr.bf16.mxu0 0
      %516 = vmatpush1.bf16.msra.mxu0 0
      %517 = vmatprep.subr.bf16.mxu0 0
      %518 = vmatpush1.bf16.msra.mxu0 0
      %519 = vmatprep.subr.bf16.mxu0 0
      %520 = vmatpush1.bf16.msra.mxu0 0
      %521 = vmatprep.subr.bf16.mxu0 0
      %522 = vmatpush1.bf16.msra.mxu0 0
      %523 = vmatprep.subr.bf16.mxu0 0
      %524 = vmatpush1.bf16.msra.mxu0 0
      %525 = vmatprep.subr.bf16.mxu0 0
      %526 = vmatpush1.bf16.msra.mxu0 0
      %527 = vmatprep.subr.bf16.mxu0 0
      %528 = vmatpush1.bf16.msra.mxu0 0
      %529 = vmatprep.subr.bf16.mxu0 0
      %530 = vmatpush1.bf16.msra.mxu0 0
      %531 = vmatprep.subr.bf16.mxu0 0
      %532 = vmatpush1.bf16.msra.mxu0 0
      %533 = vmatprep.subr.bf16.mxu0 0
      %534 = vmatpush1.bf16.msra.mxu0 0
      %535 = vmatprep.subr.bf16.mxu0 0
      %536 = vmatpush1.bf16.msra.mxu0 0
      %537 = vmatprep.subr.bf16.mxu0 0
      %538 = vmatpush1.bf16.msra.mxu0 0
      %539 = vmatprep.subr.bf16.mxu0 0
      %540 = vmatpush1.bf16.msra.mxu0 0
      %541 = vmatprep.subr.bf16.mxu0 0
      %542 = vmatpush1.bf16.msra.mxu0 0
      %543 = vmatprep.mubr.bf16.mxu0 0
      %544 = vmatmul.mubr.bf16.gmra.mrb[0].mxu0 %v506
      %v545 = vpop.f32.mrb[0].mxu0
      %v546 = vadd.f32 0.0, %v545
      %v547 = vpop.f32.mrb[0].mxu0
      %v548 = vpop.f32.mrb[0].mxu0
      %v549 = vadd.f32 0.0, %v548
      %v550 = vpop.f32.mrb[0].mxu0
      %551 = vdwg.mxu0
      %v552 = vadd.f32 %v493, %v546
      %v553 = vadd.f32 %v496, %v549
      %s554 = scalar_lea.vmem %s3, 6
      %v555 = vld [vmem:[%s554] sm:$0x3]
      %v558 = vunpack.c.l.b16 %v374
      %v559 = vunpack.c.l.b16 %v375
      %v560 = vpack.c.b16 %v559, %v558
      %v562 = vsel %vm404, %v560, 0
      %v565 = vsel %vm408, %v555, 0
      %567 = vmatprep.subr.bf16.mxu0 0
      %568 = vmatpush1.bf16.msra.mxu0 %v565
      %569 = vmatprep.subr.bf16.mxu0 0
      %570 = vmatpush1.bf16.msra.mxu0 0
      %571 = vmatprep.subr.bf16.mxu0 0
      %572 = vmatpush1.bf16.msra.mxu0 0
      %573 = vmatprep.subr.bf16.mxu0 0
      %574 = vmatpush1.bf16.msra.mxu0 0
      %575 = vmatprep.subr.bf16.mxu0 0
      %576 = vmatpush1.bf16.msra.mxu0 0
      %577 = vmatprep.subr.bf16.mxu0 0
      %578 = vmatpush1.bf16.msra.mxu0 0
      %579 = vmatprep.subr.bf16.mxu0 0
      %580 = vmatpush1.bf16.msra.mxu0 0
      %581 = vmatprep.subr.bf16.mxu0 0
      %582 = vmatpush1.bf16.msra.mxu0 0
      %583 = vmatprep.subr.bf16.mxu0 0
      %584 = vmatpush1.bf16.msra.mxu0 0
      %585 = vmatprep.subr.bf16.mxu0 0
      %586 = vmatpush1.bf16.msra.mxu0 0
      %587 = vmatprep.subr.bf16.mxu0 0
      %588 = vmatpush1.bf16.msra.mxu0 0
      %589 = vmatprep.subr.bf16.mxu0 0
      %590 = vmatpush1.bf16.msra.mxu0 0
      %591 = vmatprep.subr.bf16.mxu0 0
      %592 = vmatpush1.bf16.msra.mxu0 0
      %593 = vmatprep.subr.bf16.mxu0 0
      %594 = vmatpush1.bf16.msra.mxu0 0
      %595 = vmatprep.subr.bf16.mxu0 0
      %596 = vmatpush1.bf16.msra.mxu0 0
      %597 = vmatprep.subr.bf16.mxu0 0
      %598 = vmatpush1.bf16.msra.mxu0 0
      %599 = vmatprep.mubr.bf16.mxu0 0
      %600 = vmatmul.mubr.bf16.gmra.mrb[0].mxu0 %v562
      %v601 = vpop.f32.mrb[0].mxu0
      %v602 = vadd.f32 0.0, %v601
      %v603 = vpop.f32.mrb[0].mxu0
      %v604 = vpop.f32.mrb[0].mxu0
      %v605 = vadd.f32 0.0, %v604
      %v606 = vpop.f32.mrb[0].mxu0
      %607 = vdwg.mxu0
      %v608 = vadd.f32 %v552, %v602
      %v609 = vadd.f32 %v553, %v605
      %s610 = scalar_lea.vmem %s3, 8
      %v611 = vld [vmem:[%s610] sm:$0x3]
      %v613 = vunpack.c.l.b16 %v376
      %v614 = vpack.c.b16 %v613, %v613
      %v615 = vshrl.u32 %v560, 16
      %v617 = vshll.u32 %v560, 16
      %v619 = vrot.slane %v617, 1
      %v620 = vor.u32 %v615, %v619
      %v622 = vshll.u32 %v614, 16
      %v624 = vrot.slane %v622, 1
      %v625 = vsel %vm391, %v620, %v624
      %v627 = vsel %vm404, %v625, 0
      %v630 = vsel %vm408, %v611, 0
      %632 = vmatprep.subr.bf16.mxu0 0
      %633 = vmatpush1.bf16.msra.mxu0 %v630
      %634 = vmatprep.subr.bf16.mxu0 0
      %635 = vmatpush1.bf16.msra.mxu0 0
      %636 = vmatprep.subr.bf16.mxu0 0
      %637 = vmatpush1.bf16.msra.mxu0 0
      %638 = vmatprep.subr.bf16.mxu0 0
      %639 = vmatpush1.bf16.msra.mxu0 0
      %640 = vmatprep.subr.bf16.mxu0 0
      %641 = vmatpush1.bf16.msra.mxu0 0
      %642 = vmatprep.subr.bf16.mxu0 0
      %643 = vmatpush1.bf16.msra.mxu0 0
      %644 = vmatprep.subr.bf16.mxu0 0
      %645 = vmatpush1.bf16.msra.mxu0 0
      %646 = vmatprep.subr.bf16.mxu0 0
      %647 = vmatpush1.bf16.msra.mxu0 0
      %648 = vmatprep.subr.bf16.mxu0 0
      %649 = vmatpush1.bf16.msra.mxu0 0
      %650 = vmatprep.subr.bf16.mxu0 0
      %651 = vmatpush1.bf16.msra.mxu0 0
      %652 = vmatprep.subr.bf16.mxu0 0
      %653 = vmatpush1.bf16.msra.mxu0 0
      %654 = vmatprep.subr.bf16.mxu0 0
      %655 = vmatpush1.bf16.msra.mxu0 0
      %656 = vmatprep.subr.bf16.mxu0 0
      %657 = vmatpush1.bf16.msra.mxu0 0
      %658 = vmatprep.subr.bf16.mxu0 0
      %659 = vmatpush1.bf16.msra.mxu0 0
      %660 = vmatprep.subr.bf16.mxu0 0
      %661 = vmatpush1.bf16.msra.mxu0 0
      %662 = vmatprep.subr.bf16.mxu0 0
      %663 = vmatpush1.bf16.msra.mxu0 0
      %664 = vmatprep.mubr.bf16.mxu0 0
      %665 = vmatmul.mubr.bf16.gmra.mrb[0].mxu0 %v627
      %v666 = vpop.f32.mrb[0].mxu0
      %v667 = vadd.f32 0.0, %v666
      %v668 = vpop.f32.mrb[0].mxu0
      %v669 = vpop.f32.mrb[0].mxu0
      %v670 = vadd.f32 0.0, %v669
      %v671 = vpop.f32.mrb[0].mxu0
      %672 = vdwg.mxu0
      %v673 = vadd.f32 %v608, %v667
      %v674 = vadd.f32 %v609, %v670
      %s675 = scalar_lea.vmem %s3, 10
      %v676 = vld [vmem:[%s675] sm:$0x3]
      %v677 = vrot.slane %v560, 1
      %v678 = vrot.slane %v614, 1
      %v679 = vsel %vm501, %v677, %v678
      %v681 = vsel %vm404, %v679, 0
      %v684 = vsel %vm408, %v676, 0
      %686 = vmatprep.subr.bf16.mxu0 0
      %687 = vmatpush1.bf16.msra.mxu0 %v684
      %688 = vmatprep.subr.bf16.mxu0 0
      %689 = vmatpush1.bf16.msra.mxu0 0
      %690 = vmatprep.subr.bf16.mxu0 0
      %691 = vmatpush1.bf16.msra.mxu0 0
      %692 = vmatprep.subr.bf16.mxu0 0
      %693 = vmatpush1.bf16.msra.mxu0 0
      %694 = vmatprep.subr.bf16.mxu0 0
      %695 = vmatpush1.bf16.msra.mxu0 0
      %696 = vmatprep.subr.bf16.mxu0 0
      %697 = vmatpush1.bf16.msra.mxu0 0
      %698 = vmatprep.subr.bf16.mxu0 0
      %699 = vmatpush1.bf16.msra.mxu0 0
      %700 = vmatprep.subr.bf16.mxu0 0
      %701 = vmatpush1.bf16.msra.mxu0 0
      %702 = vmatprep.subr.bf16.mxu0 0
      %703 = vmatpush1.bf16.msra.mxu0 0
      %704 = vmatprep.subr.bf16.mxu0 0
      %705 = vmatpush1.bf16.msra.mxu0 0
      %706 = vmatprep.subr.bf16.mxu0 0
      %707 = vmatpush1.bf16.msra.mxu0 0
      %708 = vmatprep.subr.bf16.mxu0 0
      %709 = vmatpush1.bf16.msra.mxu0 0
      %710 = vmatprep.subr.bf16.mxu0 0
      %711 = vmatpush1.bf16.msra.mxu0 0
      %712 = vmatprep.subr.bf16.mxu0 0
      %713 = vmatpush1.bf16.msra.mxu0 0
      %714 = vmatprep.subr.bf16.mxu0 0
      %715 = vmatpush1.bf16.msra.mxu0 0
      %716 = vmatprep.subr.bf16.mxu0 0
      %717 = vmatpush1.bf16.msra.mxu0 0
      %718 = vmatprep.mubr.bf16.mxu0 0
      %719 = vmatmul.mubr.bf16.gmra.mrb[0].mxu0 %v681
      %v720 = vpop.f32.mrb[0].mxu0
      %v721 = vadd.f32 0.0, %v720
      %v722 = vpop.f32.mrb[0].mxu0
      %v723 = vpop.f32.mrb[0].mxu0
      %v724 = vadd.f32 0.0, %v723
      %v725 = vpop.f32.mrb[0].mxu0
      %726 = vdwg.mxu0
      %v727 = vadd.f32 %v673, %v721
      %v728 = vadd.f32 %v674, %v724
      %s729 = scalar_lea.vmem %s3, 12
      %v730 = vld [vmem:[%s729] sm:$0x3]
      %v733 = vunpack.c.l.b16 %v377
      %v734 = vunpack.c.l.b16 %v378
      %v735 = vpack.c.b16 %v734, %v733
      %v737 = vsel %vm404, %v735, 0
      %v740 = vsel %vm408, %v730, 0
      %742 = vmatprep.subr.bf16.mxu0 0
      %743 = vmatpush1.bf16.msra.mxu0 %v740
      %744 = vmatprep.subr.bf16.mxu0 0
      %745 = vmatpush1.bf16.msra.mxu0 0
      %746 = vmatprep.subr.bf16.mxu0 0
      %747 = vmatpush1.bf16.msra.mxu0 0
      %748 = vmatprep.subr.bf16.mxu0 0
      %749 = vmatpush1.bf16.msra.mxu0 0
      %750 = vmatprep.subr.bf16.mxu0 0
      %751 = vmatpush1.bf16.msra.mxu0 0
      %752 = vmatprep.subr.bf16.mxu0 0
      %753 = vmatpush1.bf16.msra.mxu0 0
      %754 = vmatprep.subr.bf16.mxu0 0
      %755 = vmatpush1.bf16.msra.mxu0 0
      %756 = vmatprep.subr.bf16.mxu0 0
      %757 = vmatpush1.bf16.msra.mxu0 0
      %758 = vmatprep.subr.bf16.mxu0 0
      %759 = vmatpush1.bf16.msra.mxu0 0
      %760 = vmatprep.subr.bf16.mxu0 0
      %761 = vmatpush1.bf16.msra.mxu0 0
      %762 = vmatprep.subr.bf16.mxu0 0
      %763 = vmatpush1.bf16.msra.mxu0 0
      %764 = vmatprep.subr.bf16.mxu0 0
      %765 = vmatpush1.bf16.msra.mxu0 0
      %766 = vmatprep.subr.bf16.mxu0 0
      %767 = vmatpush1.bf16.msra.mxu0 0
      %768 = vmatprep.subr.bf16.mxu0 0
      %769 = vmatpush1.bf16.msra.mxu0 0
      %770 = vmatprep.subr.bf16.mxu0 0
      %771 = vmatpush1.bf16.msra.mxu0 0
      %772 = vmatprep.subr.bf16.mxu0 0
      %773 = vmatpush1.bf16.msra.mxu0 0
      %774 = vmatprep.mubr.bf16.mxu0 0
      %775 = vmatmul.mubr.bf16.gmra.mrb[0].mxu0 %v737
      %v776 = vpop.f32.mrb[0].mxu0
      %v777 = vadd.f32 0.0, %v776
      %v778 = vpop.f32.mrb[0].mxu0
      %v779 = vpop.f32.mrb[0].mxu0
      %v780 = vadd.f32 0.0, %v779
      %v781 = vpop.f32.mrb[0].mxu0
      %782 = vdwg.mxu0
      %v783 = vadd.f32 %v727, %v777
      %v784 = vadd.f32 %v728, %v780
      %s785 = scalar_lea.vmem %s3, 14
      %v786 = vld [vmem:[%s785] sm:$0x3]
      %v788 = vunpack.c.l.b16 %v379
      %v789 = vpack.c.b16 %v788, %v788
      %v790 = vshrl.u32 %v735, 16
      %v792 = vshll.u32 %v735, 16
      %v794 = vrot.slane %v792, 1
      %v795 = vor.u32 %v790, %v794
      %v797 = vshll.u32 %v789, 16
      %v799 = vrot.slane %v797, 1
      %v800 = vsel %vm391, %v795, %v799
      %v802 = vsel %vm404, %v800, 0
      %v805 = vsel %vm408, %v786, 0
      %807 = vmatprep.subr.bf16.mxu0 0
      %808 = vmatpush1.bf16.msra.mxu0 %v805
      %809 = vmatprep.subr.bf16.mxu0 0
      %810 = vmatpush1.bf16.msra.mxu0 0
      %811 = vmatprep.subr.bf16.mxu0 0
      %812 = vmatpush1.bf16.msra.mxu0 0
      %813 = vmatprep.subr.bf16.mxu0 0
      %814 = vmatpush1.bf16.msra.mxu0 0
      %815 = vmatprep.subr.bf16.mxu0 0
      %816 = vmatpush1.bf16.msra.mxu0 0
      %817 = vmatprep.subr.bf16.mxu0 0
      %818 = vmatpush1.bf16.msra.mxu0 0
      %819 = vmatprep.subr.bf16.mxu0 0
      %820 = vmatpush1.bf16.msra.mxu0 0
      %821 = vmatprep.subr.bf16.mxu0 0
      %822 = vmatpush1.bf16.msra.mxu0 0
      %823 = vmatprep.subr.bf16.mxu0 0
      %824 = vmatpush1.bf16.msra.mxu0 0
      %825 = vmatprep.subr.bf16.mxu0 0
      %826 = vmatpush1.bf16.msra.mxu0 0
      %827 = vmatprep.subr.bf16.mxu0 0
      %828 = vmatpush1.bf16.msra.mxu0 0
      %829 = vmatprep.subr.bf16.mxu0 0
      %830 = vmatpush1.bf16.msra.mxu0 0
      %831 = vmatprep.subr.bf16.mxu0 0
      %832 = vmatpush1.bf16.msra.mxu0 0
      %833 = vmatprep.subr.bf16.mxu0 0
      %834 = vmatpush1.bf16.msra.mxu0 0
      %835 = vmatprep.subr.bf16.mxu0 0
      %836 = vmatpush1.bf16.msra.mxu0 0
      %837 = vmatprep.subr.bf16.mxu0 0
      %838 = vmatpush1.bf16.msra.mxu0 0
      %839 = vmatprep.mubr.bf16.mxu0 0
      %840 = vmatmul.mubr.bf16.gmra.mrb[0].mxu0 %v802
      %v841 = vpop.f32.mrb[0].mxu0
      %v842 = vadd.f32 0.0, %v841
      %v843 = vpop.f32.mrb[0].mxu0
      %v844 = vpop.f32.mrb[0].mxu0
      %v845 = vadd.f32 0.0, %v844
      %v846 = vpop.f32.mrb[0].mxu0
      %847 = vdwg.mxu0
      %v848 = vadd.f32 %v783, %v842
      %v849 = vadd.f32 %v784, %v845
      %s850 = scalar_lea.vmem %s3, 16
      %v851 = vld [vmem:[%s850] sm:$0x3]
      %v852 = vrot.slane %v735, 1
      %v853 = vrot.slane %v789, 1
      %v854 = vsel %vm501, %v852, %v853
      %v856 = vsel %vm404, %v854, 0
      %v859 = vsel %vm408, %v851, 0
      %861 = vmatprep.subr.bf16.mxu0 0
      %862 = vmatpush1.bf16.msra.mxu0 %v859
      %863 = vmatprep.subr.bf16.mxu0 0
      %864 = vmatpush1.bf16.msra.mxu0 0
      %865 = vmatprep.subr.bf16.mxu0 0
      %866 = vmatpush1.bf16.msra.mxu0 0
      %867 = vmatprep.subr.bf16.mxu0 0
      %868 = vmatpush1.bf16.msra.mxu0 0
      %869 = vmatprep.subr.bf16.mxu0 0
      %870 = vmatpush1.bf16.msra.mxu0 0
      %871 = vmatprep.subr.bf16.mxu0 0
      %872 = vmatpush1.bf16.msra.mxu0 0
      %873 = vmatprep.subr.bf16.mxu0 0
      %874 = vmatpush1.bf16.msra.mxu0 0
      %875 = vmatprep.subr.bf16.mxu0 0
      %876 = vmatpush1.bf16.msra.mxu0 0
      %877 = vmatprep.subr.bf16.mxu0 0
      %878 = vmatpush1.bf16.msra.mxu0 0
      %879 = vmatprep.subr.bf16.mxu0 0
      %880 = vmatpush1.bf16.msra.mxu0 0
      %881 = vmatprep.subr.bf16.mxu0 0
      %882 = vmatpush1.bf16.msra.mxu0 0
      %883 = vmatprep.subr.bf16.mxu0 0
      %884 = vmatpush1.bf16.msra.mxu0 0
      %885 = vmatprep.subr.bf16.mxu0 0
      %886 = vmatpush1.bf16.msra.mxu0 0
      %887 = vmatprep.subr.bf16.mxu0 0
      %888 = vmatpush1.bf16.msra.mxu0 0
      %889 = vmatprep.subr.bf16.mxu0 0
      %890 = vmatpush1.bf16.msra.mxu0 0
      %891 = vmatprep.subr.bf16.mxu0 0
      %892 = vmatpush1.bf16.msra.mxu0 0
      %893 = vmatprep.mubr.bf16.mxu0 0
      %894 = vmatmul.mubr.bf16.gmra.mrb[0].mxu0 %v856
      %v895 = vpop.f32.mrb[0].mxu0
      %v896 = vadd.f32 0.0, %v895
      %v897 = vpop.f32.mrb[0].mxu0
      %v898 = vpop.f32.mrb[0].mxu0
      %v899 = vadd.f32 0.0, %v898
      %v900 = vpop.f32.mrb[0].mxu0
      %901 = vdwg.mxu0
      %v902 = vadd.f32 %v848, %v896
      %v903 = vadd.f32 %v849, %v899
      %v904 = vld [vmem:[%s4] sm:$0x1]
      %v906 = vlaneseq
      %v907 = vshrl.u32 %v906, 7
      %v908 = vsub.s32 0, %v907
      %v909 = vrot.slane %v904, %v908
      %v911 = vmul.f32 %v902, %v909
      %v912 = vmul.f32 %v903, %v909
      %v913 = vld [vmem:[%s5] sm:$0x1]
      %v915 = vlaneseq
      %v916 = vshrl.u32 %v915, 7
      %v917 = vsub.s32 0, %v916
      %v918 = vrot.slane %v913, %v917
      %v920 = vadd.f32 %v911, %v918
      %v921 = vadd.f32 %v912, %v918
      %v922 = vxor.u32 %v920, 2147483648
      %v923 = vxor.u32 %v921, 2147483648
      %v924 = vmul.f32 %v922, 1.442695
      %v925 = vpow.pop %v924
      %v926 = vmul.f32 %v923, 1.442695
      %v927 = vpow.pop %v926
      %v928 = vadd.f32 %v925, 1.0
      %v929 = vadd.f32 %v927, 1.0
      %v930 = vrcp.pop %v928
      %v931 = vmul.f32 1.0, %v930
      %v932 = vrcp.pop %v929
      %v933 = vmul.f32 1.0, %v932
      %v934 = vmul.f32 %v920, %v931
      %v935 = vmul.f32 %v921, %v933
      %v936 = vpack.c.bf16 %v935, %v934
      %v938 = vunpack.c.l.b16 %v936
      %v939 = vunpack.c.h.b16 %v936
      %v940 = vpack.c.b16 %v938, %v938
      %v941 = vpack.c.b16 %v939, %v939
      %vm944 = vcmask 257024
      %945 = vst.msk [vmem:[%s369] sm:$0xf] %vm944, %v940
      %946 = vst.msk [vmem:[%s369 + $0x4] sm:$0xf] %vm944, %v941
      %p947 = scmp.lt.s32.totalorder %s21, 1
      %s948 = scalar_select %p947, %s21, 1
      %p949 = scmp.lt.s32.totalorder %s22, 15
      %s950 = scalar_select %p949, %s22, 15
      %s951 = smul.addr %s950, 2
      %s952 = smul.addr %s948, 32
      %s953 = sadd.s32 %s951, %s952
      %s954 = smul.addr %s953, 4
      %s955 = scalar_lea.vmem %s6, %s954
      // Predicated region
      $region45: #{proto_forward.4} parent=43 // pred_check
        %p956 = pneg %p200
      $region46: #{proto_forward.4} parent=43 // pred_check_branch
        %958 = sbr.rel (%p956) target = $region48
      $region47: #{proto_forward.4} parent=43 // pred_region
        _
      $region48: #{proto_forward.4} parent=43 // pred_fallthru
        _
    $region44: #{proto_forward.4} parent=5 // pred_fallthru
      _
    %p959 = scmp.le.s32.totalorder 2, %s12
    // Predicated region
    $region49: #{proto_forward.4} parent=5 // pred_check
      %p960 = pneg %p959
    $region50: #{proto_forward.4} parent=5 // pred_check_branch
      %962 = sbr.rel (%p960) target = $region52
    $region51: #{proto_forward.4} parent=5 // pred_region
      %s963 = ssub.s32 %s12, 2
      // Predicated region
      $region53: #{proto_forward.4} parent=51 // pred_check
        %p964 = pneg %p206
      $region54: #{proto_forward.4} parent=51 // pred_check_branch
        %966 = sbr.rel (%p964) target = $region56
      $region55: #{proto_forward.4} parent=51 // pred_region
        %p967 = scmp.lt.s32.totalorder %s23, 1
        %s968 = scalar_select %p967, %s23, 1
        %p969 = scmp.lt.s32.totalorder %s24, 15
        %s970 = scalar_select %p969, %s24, 15
        %s971 = smul.addr %s970, 2
        %s972 = smul.addr %s968, 32
        %s973 = sadd.s32 %s971, %s972
        %s974 = smul.addr %s973, 4
        %s975 = scalar_lea.vmem %s6, %s974
      $region56: #{proto_forward.4} parent=51 // pred_fallthru
        _
    $region52: #{proto_forward.4} parent=5 // pred_fallthru
      _
  $region6: #{proto_forward.4} parent=0 // loop_footer
    %s16 = sadd.s32 1, %s12
  $region7: #{proto_forward.4} parent=0 // loop_footer_branch
    %11 = sbr.rel target = $region3
  $region8: #{proto_forward.4} parent=0 // loop_exit
    _

// kernel: proto_forward.6
$region0: #{proto_forward.6}
  #allocation0 [shape = 'u32[]', space=smem, size = 0x4, offset = 0x4, fixed_abs, tag = 'smem constant byte address 0x4 - core index']
  #allocation1 [shape = 'u32[144,128]{1,0:T(1,128)}', space=vmem, size = 0x12000, scoped, tag = 'internal scratch']
  %s0 = inlined_call_operand.vmem [shape: bf16[2,34,34,32], index: 0, kind: input, shape index: {}, may-alias: {0,1,2}]
  %s1 = inlined_call_operand.vmem [shape: bf16[2,34,34,32], index: 1, kind: input, shape index: {}, may-alias: {0,1,2}]
  %s2 = inlined_call_operand.vmem [shape: bf16[2,34,34,32], index: 2, kind: input, shape index: {}, may-alias: {0,1,2}]
  %s3 = inlined_call_operand.vmem [shape: bf16[9,32,32], index: 3, kind: input, shape index: {}]
  %s4 = inlined_call_operand.vmem [shape: f32[1,32], index: 4, kind: input, shape index: {}]
  %s5 = inlined_call_operand.vmem [shape: f32[1,32], index: 5, kind: input, shape index: {}]
  %s6 = inlined_call_operand.vmem [shape: bf16[2,32,32,32], index: 6, kind: output, shape index: {}]
  %s7 = sld [smem:[#allocation0]]
  $region57: #{proto_forward.6} parent=0
    _
  %s9 = ssub.s32 1, %s7
  %s10 = scalar_select 0, %s9, %s7
  loop: start=0, step=1, limit=66
  $region2: #{proto_forward.6} parent=0 // loop_pre_header
    _
  $region3: #{proto_forward.6} parent=0 // loop_header
    %s12 = sphi 0, %s16
    %p13 = scmp.ge.s32.totalorder %s12, 66
    %s19 = sphi 0, %s31
    %s20 = sphi 0, %s27
    %s21 = sphi 0, %s19
    %s22 = sphi 0, %s20
    %s23 = sphi 0, %s21
    %s24 = sphi 0, %s22
    %s36 = sphi 0, %s38
    %s39 = sphi 0, %s36
    %s40 = sphi 0, %s39
    %s56 = sphi 0, %s40
    %s66 = sphi 0, %s68
    %s69 = sphi 0, %s66
    %s70 = sphi 0, %s69
    %s86 = sphi 0, %s70
    %s96 = sphi 0, %s98
    %s99 = sphi 0, %s96
    %s100 = sphi 0, %s99
    %s116 = sphi 0, %s100
    %s120 = sphi 0, %s120
    %s122 = sphi 0, %s120
    %s123 = sphi 0, %s122
    %s137 = sphi 0, %s123
    %s141 = sphi 0, %s141
    %s143 = sphi 0, %s141
    %s144 = sphi 0, %s143
    %s158 = sphi 0, %s144
    %s162 = sphi 0, %s162
    %s164 = sphi 0, %s162
    %s165 = sphi 0, %s164
    %s179 = sphi 0, %s165
    %s187 = sphi 0, %s189
    %s190 = sphi 0, %s187
    %s191 = sphi 0, %s190
    %s207 = sphi 0, %s191
  $region4: #{proto_forward.6} parent=0 // loop_header_branch
    %15 = sbr.rel (%p13) target = $region8
  $region5: #{proto_forward.6} parent=0 // loop_body
    %s17 = ssub.s32 %s12, 1
    %s18 = ssub.s32 %s12, 2
    %s25 = sadd.s32 1, %s20
    %p26 = scmp.ge.s32.totalorder %s25, 32
    %s27 = scalar_select %p26, 0, %s25
    %s28 = sadd.s32 1, %s19
    %s29 = scalar_select %p26, %s28, %s19
    %p30 = scmp.ge.s32.totalorder %s29, 2
    %s31 = scalar_select %p30, 0, %s29
    %s32 = ssub.s32 %s19, %s31
    %s33 = ssub.s32 %s20, %s27
    %s34 = sor.u32 %s32, %s33
    %p35 = scmp.eq.s32.totalorder %s34, 0
    %s37 = sadd.s32 %s36, 1
    %s38 = scalar_select %p35, %s36, %s37
    %p41 = pneg %p35
    %p42 = scmp.eq.s32.totalorder %s12, 63
    %p43 = por %p41, %p42
    %p44 = scmp.ne.s32.totalorder %s36, %s39
    %p45 = scmp.eq.s32.totalorder %s12, 0
    %p46 = por %p44, %p45
    %p47 = scmp.ne.s32.totalorder %s36, %s39
    %p48 = scmp.eq.s32.totalorder %s17, 63
    %p49 = por %p47, %p48
    %p50 = scmp.ne.s32.totalorder %s39, %s40
    %p51 = scmp.eq.s32.totalorder %s17, 0
    %p52 = por %p50, %p51
    %p53 = scmp.ne.s32.totalorder %s39, %s40
    %p54 = scmp.eq.s32.totalorder %s18, 63
    %p55 = por %p53, %p54
    %p57 = scmp.ne.s32.totalorder %s40, %s56
    %p58 = scmp.eq.s32.totalorder %s18, 0
    %p59 = por %p57, %p58
    %s60 = sadd.s32 %s20, 1
    %s61 = sadd.s32 %s27, 1
    %s62 = ssub.s32 %s19, %s31
    %s63 = ssub.s32 %s60, %s61
    %s64 = sor.u32 %s62, %s63
    %p65 = scmp.eq.s32.totalorder %s64, 0
    %s67 = sadd.s32 %s66, 1
    %s68 = scalar_select %p65, %s66, %s67
    %p71 = pneg %p65
    %p72 = scmp.eq.s32.totalorder %s12, 63
    %p73 = por %p71, %p72
    %p74 = scmp.ne.s32.totalorder %s66, %s69
    %p75 = scmp.eq.s32.totalorder %s12, 0
    %p76 = por %p74, %p75
    %p77 = scmp.ne.s32.totalorder %s66, %s69
    %p78 = scmp.eq.s32.totalorder %s17, 63
    %p79 = por %p77, %p78
    %p80 = scmp.ne.s32.totalorder %s69, %s70
    %p81 = scmp.eq.s32.totalorder %s17, 0
    %p82 = por %p80, %p81
    %p83 = scmp.ne.s32.totalorder %s69, %s70
    %p84 = scmp.eq.s32.totalorder %s18, 63
    %p85 = por %p83, %p84
    %p87 = scmp.ne.s32.totalorder %s70, %s86
    %p88 = scmp.eq.s32.totalorder %s18, 0
    %p89 = por %p87, %p88
    %s90 = sadd.s32 %s20, 2
    %s91 = sadd.s32 %s27, 2
    %s92 = ssub.s32 %s19, %s31
    %s93 = ssub.s32 %s90, %s91
    %s94 = sor.u32 %s92, %s93
    %p95 = scmp.eq.s32.totalorder %s94, 0
    %s97 = sadd.s32 %s96, 1
    %s98 = scalar_select %p95, %s96, %s97
    %p101 = pneg %p95
    %p102 = scmp.eq.s32.totalorder %s12, 63
    %p103 = por %p101, %p102
    %p104 = scmp.ne.s32.totalorder %s96, %s99
    %p105 = scmp.eq.s32.totalorder %s12, 0
    %p106 = por %p104, %p105
    %p107 = scmp.ne.s32.totalorder %s96, %s99
    %p108 = scmp.eq.s32.totalorder %s17, 63
    %p109 = por %p107, %p108
    %p110 = scmp.ne.s32.totalorder %s99, %s100
    %p111 = scmp.eq.s32.totalorder %s17, 0
    %p112 = por %p110, %p111
    %p113 = scmp.ne.s32.totalorder %s99, %s100
    %p114 = scmp.eq.s32.totalorder %s18, 63
    %p115 = por %p113, %p114
    %p117 = scmp.ne.s32.totalorder %s100, %s116
    %p118 = scmp.eq.s32.totalorder %s18, 0
    %p119 = por %p117, %p118
    %s121 = sadd.s32 %s120, 1
    %p124 = scmp.eq.s32.totalorder %s12, 63
    %p125 = scmp.ne.s32.totalorder %s120, %s122
    %p126 = scmp.eq.s32.totalorder %s12, 0
    %p127 = por %p125, %p126
    %p128 = scmp.ne.s32.totalorder %s120, %s122
    %p129 = scmp.eq.s32.totalorder %s17, 63
    %p130 = por %p128, %p129
    %p131 = scmp.ne.s32.totalorder %s122, %s123
    %p132 = scmp.eq.s32.totalorder %s17, 0
    %p133 = por %p131, %p132
    %p134 = scmp.ne.s32.totalorder %s122, %s123
    %p135 = scmp.eq.s32.totalorder %s18, 63
    %p136 = por %p134, %p135
    %p138 = scmp.ne.s32.totalorder %s123, %s137
    %p139 = scmp.eq.s32.totalorder %s18, 0
    %p140 = por %p138, %p139
    %s142 = sadd.s32 %s141, 1
    %p145 = scmp.eq.s32.totalorder %s12, 63
    %p146 = scmp.ne.s32.totalorder %s141, %s143
    %p147 = scmp.eq.s32.totalorder %s12, 0
    %p148 = por %p146, %p147
    %p149 = scmp.ne.s32.totalorder %s141, %s143
    %p150 = scmp.eq.s32.totalorder %s17, 63
    %p151 = por %p149, %p150
    %p152 = scmp.ne.s32.totalorder %s143, %s144
    %p153 = scmp.eq.s32.totalorder %s17, 0
    %p154 = por %p152, %p153
    %p155 = scmp.ne.s32.totalorder %s143, %s144
    %p156 = scmp.eq.s32.totalorder %s18, 63
    %p157 = por %p155, %p156
    %p159 = scmp.ne.s32.totalorder %s144, %s158
    %p160 = scmp.eq.s32.totalorder %s18, 0
    %p161 = por %p159, %p160
    %s163 = sadd.s32 %s162, 1
    %p166 = scmp.eq.s32.totalorder %s12, 63
    %p167 = scmp.ne.s32.totalorder %s162, %s164
    %p168 = scmp.eq.s32.totalorder %s12, 0
    %p169 = por %p167, %p168
    %p170 = scmp.ne.s32.totalorder %s162, %s164
    %p171 = scmp.eq.s32.totalorder %s17, 63
    %p172 = por %p170, %p171
    %p173 = scmp.ne.s32.totalorder %s164, %s165
    %p174 = scmp.eq.s32.totalorder %s17, 0
    %p175 = por %p173, %p174
    %p176 = scmp.ne.s32.totalorder %s164, %s165
    %p177 = scmp.eq.s32.totalorder %s18, 63
    %p178 = por %p176, %p177
    %p180 = scmp.ne.s32.totalorder %s165, %s179
    %p181 = scmp.eq.s32.totalorder %s18, 0
    %p182 = por %p180, %p181
    %s183 = ssub.s32 %s19, %s31
    %s184 = ssub.s32 %s20, %s27
    %s185 = sor.u32 %s183, %s184
    %p186 = scmp.eq.s32.totalorder %s185, 0
    %s188 = sadd.s32 %s187, 1
    %s189 = scalar_select %p186, %s187, %s188
    %p192 = pneg %p186
    %p193 = scmp.eq.s32.totalorder %s12, 63
    %p194 = por %p192, %p193
    %p195 = scmp.ne.s32.totalorder %s187, %s190
    %p196 = scmp.eq.s32.totalorder %s12, 0
    %p197 = por %p195, %p196
    %p198 = scmp.ne.s32.totalorder %s187, %s190
    %p199 = scmp.eq.s32.totalorder %s17, 63
    %p200 = por %p198, %p199
    %p201 = scmp.ne.s32.totalorder %s190, %s191
    %p202 = scmp.eq.s32.totalorder %s17, 0
    %p203 = por %p201, %p202
    %p204 = scmp.ne.s32.totalorder %s190, %s191
    %p205 = scmp.eq.s32.totalorder %s18, 63
    %p206 = por %p204, %p205
    %p208 = scmp.ne.s32.totalorder %s191, %s207
    %p209 = scmp.eq.s32.totalorder %s18, 0
    %p210 = por %p208, %p209
    %p211 = scmp.le.s32.totalorder 1, %s12
    %p212 = scmp.lt.s32.totalorder %s12, 65
    %p213 = pnand %p211, %p212
    %p214 = pneg %p213
    // Predicated region
    $region9: #{proto_forward.6} parent=5 // pred_check
      _
    $region10: #{proto_forward.6} parent=5 // pred_check_branch
      %216 = sbr.rel (%p213) target = $region12
    $region11: #{proto_forward.6} parent=5 // pred_region
      %s217 = ssub.s32 %s12, 1
      // Predicated region
      $region13: #{proto_forward.6} parent=11 // pred_check
        %p218 = pneg %p133
      $region14: #{proto_forward.6} parent=11 // pred_check_branch
        %220 = sbr.rel (%p218) target = $region16
      $region15: #{proto_forward.6} parent=11 // pred_region
        _
      $region16: #{proto_forward.6} parent=11 // pred_fallthru
        _
      // Predicated region
      $region17: #{proto_forward.6} parent=11 // pred_check
        %p221 = pneg %p154
      $region18: #{proto_forward.6} parent=11 // pred_check_branch
        %223 = sbr.rel (%p221) target = $region20
      $region19: #{proto_forward.6} parent=11 // pred_region
        _
      $region20: #{proto_forward.6} parent=11 // pred_fallthru
        _
      // Predicated region
      $region21: #{proto_forward.6} parent=11 // pred_check
        %p224 = pneg %p175
      $region22: #{proto_forward.6} parent=11 // pred_check_branch
        %226 = sbr.rel (%p224) target = $region24
      $region23: #{proto_forward.6} parent=11 // pred_region
        _
      $region24: #{proto_forward.6} parent=11 // pred_fallthru
        _
    $region12: #{proto_forward.6} parent=5 // pred_fallthru
      _
    %p227 = scmp.lt.s32.totalorder %s12, 64
    // Predicated region
    $region25: #{proto_forward.6} parent=5 // pred_check
      %p228 = pneg %p227
    $region26: #{proto_forward.6} parent=5 // pred_check_branch
      %230 = sbr.rel (%p228) target = $region28
    $region27: #{proto_forward.6} parent=5 // pred_region
      // Predicated region
      $region29: #{proto_forward.6} parent=27 // pred_check
        %p231 = pneg %p46
      $region30: #{proto_forward.6} parent=27 // pred_check_branch
        %233 = sbr.rel (%p231) target = $region32
      $region31: #{proto_forward.6} parent=27 // pred_region
        %p234 = scmp.lt.s32.totalorder %s19, 1
        %s235 = scalar_select %p234, %s19, 1
        %p236 = scmp.lt.s32.totalorder %s20, 33
        %s237 = scalar_select %p236, %s20, 33
        %s238 = smul.addr %s237, 5
        %s239 = smul.addr %s235, 170
        %s240 = sadd.s32 %s238, %s239
        %s241 = smul.addr %s240, 4
        %s242 = scalar_lea.vmem %s0, %s241
      $region32: #{proto_forward.6} parent=27 // pred_fallthru
        _
      // Predicated region
      $region33: #{proto_forward.6} parent=27 // pred_check
        %p243 = pneg %p76
      $region34: #{proto_forward.6} parent=27 // pred_check_branch
        %245 = sbr.rel (%p243) target = $region36
      $region35: #{proto_forward.6} parent=27 // pred_region
        %s246 = sadd.s32 %s20, 1
        %p247 = scmp.lt.s32.totalorder %s19, 1
        %s248 = scalar_select %p247, %s19, 1
        %p249 = scmp.lt.s32.totalorder %s246, 33
        %s250 = scalar_select %p249, %s246, 33
        %s251 = smul.addr %s250, 5
        %s252 = smul.addr %s248, 170
        %s253 = sadd.s32 %s251, %s252
        %s254 = smul.addr %s253, 4
        %s255 = scalar_lea.vmem %s1, %s254
        %s256 = sadd.s32 %s20, 1
      $region36: #{proto_forward.6} parent=27 // pred_fallthru
        _
      // Predicated region
      $region37: #{proto_forward.6} parent=27 // pred_check
        %p257 = pneg %p106
      $region38: #{proto_forward.6} parent=27 // pred_check_branch
        %259 = sbr.rel (%p257) target = $region40
      $region39: #{proto_forward.6} parent=27 // pred_region
        %s260 = sadd.s32 %s20, 2
        %p261 = scmp.lt.s32.totalorder %s19, 1
        %s262 = scalar_select %p261, %s19, 1
        %p263 = scmp.lt.s32.totalorder %s260, 33
        %s264 = scalar_select %p263, %s260, 33
        %s265 = smul.addr %s264, 5
        %s266 = smul.addr %s262, 170
        %s267 = sadd.s32 %s265, %s266
        %s268 = smul.addr %s267, 4
        %s269 = scalar_lea.vmem %s2, %s268
        %s270 = sadd.s32 %s20, 2
      $region40: #{proto_forward.6} parent=27 // pred_fallthru
        _
    $region28: #{proto_forward.6} parent=5 // pred_fallthru
      _
    %p271 = scmp.le.s32.totalorder 1, %s12
    %p272 = scmp.lt.s32.totalorder %s12, 65
    %p273 = pnand %p271, %p272
    %p274 = pneg %p273
    // Predicated region
    $region41: #{proto_forward.6} parent=5 // pred_check
      _
    $region42: #{proto_forward.6} parent=5 // pred_check_branch
      %276 = sbr.rel (%p273) target = $region44
    $region43: #{proto_forward.6} parent=5 // pred_region
      %s277 = ssub.s32 %s12, 1
      %p278 = scmp.lt.s32.totalorder %s21, 1
      %s279 = scalar_select %p278, %s21, 1
      %p280 = scmp.lt.s32.totalorder %s22, 33
      %s281 = scalar_select %p280, %s22, 33
      %s282 = smul.addr %s281, 5
      %s283 = smul.addr %s279, 170
      %s284 = sadd.s32 %s282, %s283
      %s285 = smul.addr %s284, 4
      %s286 = scalar_lea.vmem %s0, %s285
      %p287 = pneg %p52
      %p288 = pneg %p49
      %s289 = sadd.s32 %s22, 1
      %p290 = scmp.lt.s32.totalorder %s21, 1
      %s291 = scalar_select %p290, %s21, 1
      %p292 = scmp.lt.s32.totalorder %s289, 33
      %s293 = scalar_select %p292, %s289, 33
      %s294 = smul.addr %s293, 5
      %s295 = smul.addr %s291, 170
      %s296 = sadd.s32 %s294, %s295
      %s297 = smul.addr %s296, 4
      %s298 = scalar_lea.vmem %s1, %s297
      %p299 = pneg %p82
      %p300 = pneg %p79
      %s301 = sadd.s32 %s22, 2
      %p302 = scmp.lt.s32.totalorder %s21, 1
      %s303 = scalar_select %p302, %s21, 1
      %p304 = scmp.lt.s32.totalorder %s301, 33
      %s305 = scalar_select %p304, %s301, 33
      %s306 = smul.addr %s305, 5
      %s307 = smul.addr %s303, 170
      %s308 = sadd.s32 %s306, %s307
      %s309 = smul.addr %s308, 4
      %s310 = scalar_lea.vmem %s2, %s309
      %p311 = pneg %p112
      %p312 = pneg %p109
      %p313 = pneg %p133
      %p314 = pneg %p130
      %p315 = pneg %p154
      %p316 = pneg %p151
      %p317 = pneg %p175
      %p318 = pneg %p172
      %p319 = pneg %p203
      %p320 = pneg %p200
      %p321 = scmp.lt.s32.totalorder %s21, 1
      %s322 = scalar_select %p321, %s21, 1
      %p323 = scmp.lt.s32.totalorder %s22, 31
      %s324 = scalar_select %p323, %s22, 31
      %s325 = smul.addr %s324, 4
      %s326 = smul.addr %s322, 128
      %s327 = sadd.s32 %s325, %s326
      %s328 = smul.addr %s327, 4
      %s329 = scalar_lea.vmem %s6, %s328
      %p330 = scmp.lt.s32.totalorder %s21, 1
      %s331 = scalar_select %p330, %s21, 1
      %p332 = scmp.lt.s32.totalorder %s22, 33
      %s333 = scalar_select %p332, %s22, 33
      %s334 = smul.addr %s333, 5
      %s335 = smul.addr %s331, 170
      %s336 = sadd.s32 %s334, %s335
      %s337 = smul.addr %s336, 4
      %s338 = scalar_lea.vmem %s0, %s337
      %s339 = sadd.s32 %s22, 1
      %p340 = scmp.lt.s32.totalorder %s21, 1
      %s341 = scalar_select %p340, %s21, 1
      %p342 = scmp.lt.s32.totalorder %s339, 33
      %s343 = scalar_select %p342, %s339, 33
      %s344 = smul.addr %s343, 5
      %s345 = smul.addr %s341, 170
      %s346 = sadd.s32 %s344, %s345
      %s347 = smul.addr %s346, 4
      %s348 = scalar_lea.vmem %s1, %s347
      %s349 = sadd.s32 %s22, 1
      %s350 = sadd.s32 %s22, 2
      %p351 = scmp.lt.s32.totalorder %s21, 1
      %s352 = scalar_select %p351, %s21, 1
      %p353 = scmp.lt.s32.totalorder %s350, 33
      %s354 = scalar_select %p353, %s350, 33
      %s355 = smul.addr %s354, 5
      %s356 = smul.addr %s352, 170
      %s357 = sadd.s32 %s355, %s356
      %s358 = smul.addr %s357, 4
      %s359 = scalar_lea.vmem %s2, %s358
      %s360 = sadd.s32 %s22, 2
      %p361 = scmp.lt.s32.totalorder %s21, 1
      %s362 = scalar_select %p361, %s21, 1
      %p363 = scmp.lt.s32.totalorder %s22, 31
      %s364 = scalar_select %p363, %s22, 31
      %s365 = smul.addr %s364, 4
      %s366 = smul.addr %s362, 128
      %s367 = sadd.s32 %s365, %s366
      %s368 = smul.addr %s367, 4
      %s369 = scalar_lea.vmem %s6, %s368
      %v371 = vld [vmem:[%s338] sm:$0xf]
      %v372 = vld [vmem:[%s338 + $0x4] sm:$0xf]
      %v373 = vld [vmem:[%s338 + $0x8] sm:$0xf]
      %v374 = vld [vmem:[%s338 + $0xc] sm:$0xf]
      %v375 = vld [vmem:[%s338 + $0x10] sm:$0x1]
      %v376 = vld [vmem:[%s348] sm:$0xf]
      %v377 = vld [vmem:[%s348 + $0x4] sm:$0xf]
      %v378 = vld [vmem:[%s348 + $0x8] sm:$0xf]
      %v379 = vld [vmem:[%s348 + $0xc] sm:$0xf]
      %v380 = vld [vmem:[%s348 + $0x10] sm:$0x1]
      %v381 = vld [vmem:[%s359] sm:$0xf]
      %v382 = vld [vmem:[%s359 + $0x4] sm:$0xf]
      %v383 = vld [vmem:[%s359 + $0x8] sm:$0xf]
      %v384 = vld [vmem:[%s359 + $0xc] sm:$0xf]
      %v385 = vld [vmem:[%s359 + $0x10] sm:$0x1]
      %v386 = vld [vmem:[%s3] sm:$0xf]
      %v387 = vld [vmem:[%s3 + $0x4] sm:$0xf]
      %v388 = vld [vmem:[%s3 + $0x8] sm:$0xf]
      %v389 = vld [vmem:[%s3 + $0xc] sm:$0xf]
      %s390 = scalar_lea.vmem %s3, 16
      %v391 = vld [vmem:[%s390] sm:$0xf]
      %v392 = vld [vmem:[%s390 + $0x4] sm:$0xf]
      %v393 = vld [vmem:[%s390 + $0x8] sm:$0xf]
      %v394 = vld [vmem:[%s390 + $0xc] sm:$0xf]
      %v400 = vunpack.c.l.b16 %v371
      %v401 = vunpack.c.l.b16 %v372
      %v402 = vunpack.c.l.b16 %v373
      %v403 = vunpack.c.l.b16 %v374
      %v404 = vunpack.c.l.b16 %v375
      %v405 = vpack.c.b16 %v401, %v400
      %v406 = vpack.c.b16 %v403, %v402
      %v407 = vpack.c.b16 %v404, %v404
      %vm408 = vsmask.f32 7424
      %v410 = vshrl.u32 %v405, 16
      %v412 = vshll.u32 %v405, 16
      %v414 = vrot.slane %v412, 1
      %v415 = vor.u32 %v410, %v414
      %v417 = vshll.u32 %v406, 16
      %v419 = vrot.slane %v417, 1
      %v420 = vsel %vm408, %v415, %v419
      %v421 = vshrl.u32 %v406, 16
      %v423 = vor.u32 %v421, %v419
      %v425 = vshll.u32 %v407, 16
      %v427 = vrot.slane %v425, 1
      %v428 = vsel %vm408, %v423, %v427
      %v433 = vunpack.c.l.b16 %v391
      %v434 = vunpack.c.l.b16 %v392
      %v435 = vunpack.c.l.b16 %v393
      %v436 = vunpack.c.l.b16 %v394
      %v437 = vpack.c.b16 %v434, %v433
      %v438 = vpack.c.b16 %v436, %v435
      %vm441 = vcmask 261120
      %v443 = vsel %vm441, %v420, 0
      %v446 = vsel %vm441, %v428, 0
      %448 = vmatprep.subr.bf16.mxu0 0
      %449 = vmatpush1.bf16.msra.mxu0 %v437
      %450 = vmatprep.subr.bf16.mxu0 0
      %451 = vmatpush1.bf16.msra.mxu0 %v438
      %452 = vmatprep.subr.bf16.mxu0 0
      %453 = vmatpush1.bf16.msra.mxu0 0
      %454 = vmatprep.subr.bf16.mxu0 0
      %455 = vmatpush1.bf16.msra.mxu0 0
      %456 = vmatprep.subr.bf16.mxu0 0
      %457 = vmatpush1.bf16.msra.mxu0 0
      %458 = vmatprep.subr.bf16.mxu0 0
      %459 = vmatpush1.bf16.msra.mxu0 0
      %460 = vmatprep.subr.bf16.mxu0 0
      %461 = vmatpush1.bf16.msra.mxu0 0
      %462 = vmatprep.subr.bf16.mxu0 0
      %463 = vmatpush1.bf16.msra.mxu0 0
      %464 = vmatprep.subr.bf16.mxu0 0
      %465 = vmatpush1.bf16.msra.mxu0 0
      %466 = vmatprep.subr.bf16.mxu0 0
      %467 = vmatpush1.bf16.msra.mxu0 0
      %468 = vmatprep.subr.bf16.mxu0 0
      %469 = vmatpush1.bf16.msra.mxu0 0
      %470 = vmatprep.subr.bf16.mxu0 0
      %471 = vmatpush1.bf16.msra.mxu0 0
      %472 = vmatprep.subr.bf16.mxu0 0
      %473 = vmatpush1.bf16.msra.mxu0 0
      %474 = vmatprep.subr.bf16.mxu0 0
      %475 = vmatpush1.bf16.msra.mxu0 0
      %476 = vmatprep.subr.bf16.mxu0 0
      %477 = vmatpush1.bf16.msra.mxu0 0
      %478 = vmatprep.subr.bf16.mxu0 0
      %479 = vmatpush1.bf16.msra.mxu0 0
      %480 = vmatprep.mubr.bf16.mxu0 0
      %481 = vmatmul.mubr.bf16.gmra.mrb[0].mxu0 %v443
      %v482 = vpop.f32.mrb[0].mxu0
      %v483 = vadd.f32 0.0, %v482
      %v484 = vpop.f32.mrb[0].mxu0
      %v485 = vpop.f32.mrb[0].mxu0
      %v486 = vadd.f32 0.0, %v485
      %v487 = vpop.f32.mrb[0].mxu0
      %488 = vmatprep.mubr.bf16.mxu0 0
      %489 = vmatmul.mubr.bf16.gmra.mrb[0].mxu0 %v446
      %v490 = vpop.f32.mrb[0].mxu0
      %v491 = vadd.f32 0.0, %v490
      %v492 = vpop.f32.mrb[0].mxu0
      %v493 = vpop.f32.mrb[0].mxu0
      %v494 = vadd.f32 0.0, %v493
      %v495 = vpop.f32.mrb[0].mxu0
      %496 = vdwg.mxu0
      %v501 = vunpack.c.l.b16 %v386
      %v502 = vunpack.c.l.b16 %v387
      %v503 = vunpack.c.l.b16 %v388
      %v504 = vunpack.c.l.b16 %v389
      %v505 = vpack.c.b16 %v502, %v501
      %v506 = vpack.c.b16 %v504, %v503
      %v509 = vsel %vm441, %v405, 0
      %v511 = vsel %vm441, %v406, 0
      %513 = vmatprep.subr.bf16.mxu0 0
      %514 = vmatpush1.bf16.msra.mxu0 %v505
      %515 = vmatprep.subr.bf16.mxu0 0
      %516 = vmatpush1.bf16.msra.mxu0 %v506
      %517 = vmatprep.subr.bf16.mxu0 0
      %518 = vmatpush1.bf16.msra.mxu0 0
      %519 = vmatprep.subr.bf16.mxu0 0
      %520 = vmatpush1.bf16.msra.mxu0 0
      %521 = vmatprep.subr.bf16.mxu0 0
      %522 = vmatpush1.bf16.msra.mxu0 0
      %523 = vmatprep.subr.bf16.mxu0 0
      %524 = vmatpush1.bf16.msra.mxu0 0
      %525 = vmatprep.subr.bf16.mxu0 0
      %526 = vmatpush1.bf16.msra.mxu0 0
      %527 = vmatprep.subr.bf16.mxu0 0
      %528 = vmatpush1.bf16.msra.mxu0 0
      %529 = vmatprep.subr.bf16.mxu0 0
      %530 = vmatpush1.bf16.msra.mxu0 0
      %531 = vmatprep.subr.bf16.mxu0 0
      %532 = vmatpush1.bf16.msra.mxu0 0
      %533 = vmatprep.subr.bf16.mxu0 0
      %534 = vmatpush1.bf16.msra.mxu0 0
      %535 = vmatprep.subr.bf16.mxu0 0
      %536 = vmatpush1.bf16.msra.mxu0 0
      %537 = vmatprep.subr.bf16.mxu0 0
      %538 = vmatpush1.bf16.msra.mxu0 0
      %539 = vmatprep.subr.bf16.mxu0 0
      %540 = vmatpush1.bf16.msra.mxu0 0
      %541 = vmatprep.subr.bf16.mxu0 0
      %542 = vmatpush1.bf16.msra.mxu0 0
      %543 = vmatprep.subr.bf16.mxu0 0
      %544 = vmatpush1.bf16.msra.mxu0 0
      %545 = vmatprep.mubr.bf16.mxu0 0
      %546 = vmatmul.mubr.bf16.gmra.mrb[0].mxu0 %v509
      %v547 = vpop.f32.mrb[0].mxu0
      %v548 = vadd.f32 %v483, %v547
      %v549 = vpop.f32.mrb[0].mxu0
      %v550 = vpop.f32.mrb[0].mxu0
      %v551 = vadd.f32 %v486, %v550
      %v552 = vpop.f32.mrb[0].mxu0
      %553 = vmatprep.mubr.bf16.mxu0 0
      %554 = vmatmul.mubr.bf16.gmra.mrb[0].mxu0 %v511
      %v555 = vpop.f32.mrb[0].mxu0
      %v556 = vadd.f32 %v491, %v555
      %v557 = vpop.f32.mrb[0].mxu0
      %v558 = vpop.f32.mrb[0].mxu0
      %v559 = vadd.f32 %v494, %v558
      %v560 = vpop.f32.mrb[0].mxu0
      %561 = vdwg.mxu0
      %s562 = scalar_lea.vmem %s3, 32
      %v563 = vld [vmem:[%s562] sm:$0xf]
      %v564 = vld [vmem:[%s562 + $0x4] sm:$0xf]
      %v565 = vld [vmem:[%s562 + $0x8] sm:$0xf]
      %v566 = vld [vmem:[%s562 + $0xc] sm:$0xf]
      %vm567 = vcmask 1046528
      %v568 = vrot.slane %v405, 1
      %v569 = vrot.slane %v406, 1
      %v570 = vsel %vm567, %v568, %v569
      %v571 = vrot.slane %v407, 1
      %v572 = vsel %vm567, %v569, %v571
      %v577 = vunpack.c.l.b16 %v563
      %v578 = vunpack.c.l.b16 %v564
      %v579 = vunpack.c.l.b16 %v565
      %v580 = vunpack.c.l.b16 %v566
      %v581 = vpack.c.b16 %v578, %v577
      %v582 = vpack.c.b16 %v580, %v579
      %v586 = vsel %vm441, %v570, 0
      %v589 = vsel %vm441, %v572, 0
      %591 = vmatprep.subr.bf16.mxu0 0
      %592 = vmatpush1.bf16.msra.mxu0 %v581
      %593 = vmatprep.subr.bf16.mxu0 0
      %594 = vmatpush1.bf16.msra.mxu0 %v582
      %595 = vmatprep.subr.bf16.mxu0 0
      %596 = vmatpush1.bf16.msra.mxu0 0
      %597 = vmatprep.subr.bf16.mxu0 0
      %598 = vmatpush1.bf16.msra.mxu0 0
      %599 = vmatprep.subr.bf16.mxu0 0
      %600 = vmatpush1.bf16.msra.mxu0 0
      %601 = vmatprep.subr.bf16.mxu0 0
      %602 = vmatpush1.bf16.msra.mxu0 0
      %603 = vmatprep.subr.bf16.mxu0 0
      %604 = vmatpush1.bf16.msra.mxu0 0
      %605 = vmatprep.subr.bf16.mxu0 0
      %606 = vmatpush1.bf16.msra.mxu0 0
      %607 = vmatprep.subr.bf16.mxu0 0
      %608 = vmatpush1.bf16.msra.mxu0 0
      %609 = vmatprep.subr.bf16.mxu0 0
      %610 = vmatpush1.bf16.msra.mxu0 0
      %611 = vmatprep.subr.bf16.mxu0 0
      %612 = vmatpush1.bf16.msra.mxu0 0
      %613 = vmatprep.subr.bf16.mxu0 0
      %614 = vmatpush1.bf16.msra.mxu0 0
      %615 = vmatprep.subr.bf16.mxu0 0
      %616 = vmatpush1.bf16.msra.mxu0 0
      %617 = vmatprep.subr.bf16.mxu0 0
      %618 = vmatpush1.bf16.msra.mxu0 0
      %619 = vmatprep.subr.bf16.mxu0 0
      %620 = vmatpush1.bf16.msra.mxu0 0
      %621 = vmatprep.subr.bf16.mxu0 0
      %622 = vmatpush1.bf16.msra.mxu0 0
      %623 = vmatprep.mubr.bf16.mxu0 0
      %624 = vmatmul.mubr.bf16.gmra.mrb[0].mxu0 %v586
      %v625 = vpop.f32.mrb[0].mxu0
      %v626 = vadd.f32 0.0, %v625
      %v627 = vpop.f32.mrb[0].mxu0
      %v628 = vpop.f32.mrb[0].mxu0
      %v629 = vadd.f32 0.0, %v628
      %v630 = vpop.f32.mrb[0].mxu0
      %631 = vmatprep.mubr.bf16.mxu0 0
      %632 = vmatmul.mubr.bf16.gmra.mrb[0].mxu0 %v589
      %v633 = vpop.f32.mrb[0].mxu0
      %v634 = vadd.f32 0.0, %v633
      %v635 = vpop.f32.mrb[0].mxu0
      %v636 = vpop.f32.mrb[0].mxu0
      %v637 = vadd.f32 0.0, %v636
      %v638 = vpop.f32.mrb[0].mxu0
      %639 = vdwg.mxu0
      %v640 = vadd.f32 %v548, %v626
      %v641 = vadd.f32 %v551, %v629
      %v642 = vadd.f32 %v556, %v634
      %v643 = vadd.f32 %v559, %v637
      %s644 = scalar_lea.vmem %s3, 48
      %v645 = vld [vmem:[%s644] sm:$0xf]
      %v646 = vld [vmem:[%s644 + $0x4] sm:$0xf]
      %v647 = vld [vmem:[%s644 + $0x8] sm:$0xf]
      %v648 = vld [vmem:[%s644 + $0xc] sm:$0xf]
      %v653 = vunpack.c.l.b16 %v376
      %v654 = vunpack.c.l.b16 %v377
      %v655 = vunpack.c.l.b16 %v378
      %v656 = vunpack.c.l.b16 %v379
      %v657 = vpack.c.b16 %v654, %v653
      %v658 = vpack.c.b16 %v656, %v655
      %v663 = vunpack.c.l.b16 %v645
      %v664 = vunpack.c.l.b16 %v646
      %v665 = vunpack.c.l.b16 %v647
      %v666 = vunpack.c.l.b16 %v648
      %v667 = vpack.c.b16 %v664, %v663
      %v668 = vpack.c.b16 %v666, %v665
      %v672 = vsel %vm441, %v657, 0
      %v675 = vsel %vm441, %v658, 0
      %677 = vmatprep.subr.bf16.mxu0 0
      %678 = vmatpush1.bf16.msra.mxu0 %v667
      %679 = vmatprep.subr.bf16.mxu0 0
      %680 = vmatpush1.bf16.msra.mxu0 %v668
      %681 = vmatprep.subr.bf16.mxu0 0
      %682 = vmatpush1.bf16.msra.mxu0 0
      %683 = vmatprep.subr.bf16.mxu0 0
      %684 = vmatpush1.bf16.msra.mxu0 0
      %685 = vmatprep.subr.bf16.mxu0 0
      %686 = vmatpush1.bf16.msra.mxu0 0
      %687 = vmatprep.subr.bf16.mxu0 0
      %688 = vmatpush1.bf16.msra.mxu0 0
      %689 = vmatprep.subr.bf16.mxu0 0
      %690 = vmatpush1.bf16.msra.mxu0 0
      %691 = vmatprep.subr.bf16.mxu0 0
      %692 = vmatpush1.bf16.msra.mxu0 0
      %693 = vmatprep.subr.bf16.mxu0 0
      %694 = vmatpush1.bf16.msra.mxu0 0
      %695 = vmatprep.subr.bf16.mxu0 0
      %696 = vmatpush1.bf16.msra.mxu0 0
      %697 = vmatprep.subr.bf16.mxu0 0
      %698 = vmatpush1.bf16.msra.mxu0 0
      %699 = vmatprep.subr.bf16.mxu0 0
      %700 = vmatpush1.bf16.msra.mxu0 0
      %701 = vmatprep.subr.bf16.mxu0 0
      %702 = vmatpush1.bf16.msra.mxu0 0
      %703 = vmatprep.subr.bf16.mxu0 0
      %704 = vmatpush1.bf16.msra.mxu0 0
      %705 = vmatprep.subr.bf16.mxu0 0
      %706 = vmatpush1.bf16.msra.mxu0 0
      %707 = vmatprep.subr.bf16.mxu0 0
      %708 = vmatpush1.bf16.msra.mxu0 0
      %709 = vmatprep.mubr.bf16.mxu0 0
      %710 = vmatmul.mubr.bf16.gmra.mrb[0].mxu0 %v672
      %v711 = vpop.f32.mrb[0].mxu0
      %v712 = vadd.f32 0.0, %v711
      %v713 = vpop.f32.mrb[0].mxu0
      %v714 = vpop.f32.mrb[0].mxu0
      %v715 = vadd.f32 0.0, %v714
      %v716 = vpop.f32.mrb[0].mxu0
      %717 = vmatprep.mubr.bf16.mxu0 0
      %718 = vmatmul.mubr.bf16.gmra.mrb[0].mxu0 %v675
      %v719 = vpop.f32.mrb[0].mxu0
      %v720 = vadd.f32 0.0, %v719
      %v721 = vpop.f32.mrb[0].mxu0
      %v722 = vpop.f32.mrb[0].mxu0
      %v723 = vadd.f32 0.0, %v722
      %v724 = vpop.f32.mrb[0].mxu0
      %725 = vdwg.mxu0
      %v726 = vadd.f32 %v640, %v712
      %v727 = vadd.f32 %v641, %v715
      %v728 = vadd.f32 %v642, %v720
      %v729 = vadd.f32 %v643, %v723
      %s730 = scalar_lea.vmem %s3, 64
      %v731 = vld [vmem:[%s730] sm:$0xf]
      %v732 = vld [vmem:[%s730 + $0x4] sm:$0xf]
      %v733 = vld [vmem:[%s730 + $0x8] sm:$0xf]
      %v734 = vld [vmem:[%s730 + $0xc] sm:$0xf]
      %v736 = vunpack.c.l.b16 %v380
      %v737 = vpack.c.b16 %v736, %v736
      %v738 = vshrl.u32 %v657, 16
      %v740 = vshll.u32 %v657, 16
      %v742 = vrot.slane %v740, 1
      %v743 = vor.u32 %v738, %v742
      %v744 = vshll.u32 %v658, 16
      %v746 = vrot.slane %v744, 1
      %v747 = vsel %vm408, %v743, %v746
      %v748 = vshrl.u32 %v658, 16
      %v750 = vor.u32 %v748, %v746
      %v752 = vshll.u32 %v737, 16
      %v754 = vrot.slane %v752, 1
      %v755 = vsel %vm408, %v750, %v754
      %v760 = vunpack.c.l.b16 %v731
      %v761 = vunpack.c.l.b16 %v732
      %v762 = vunpack.c.l.b16 %v733
      %v763 = vunpack.c.l.b16 %v734
      %v764 = vpack.c.b16 %v761, %v760
      %v765 = vpack.c.b16 %v763, %v762
      %v769 = vsel %vm441, %v747, 0
      %v772 = vsel %vm441, %v755, 0
      %774 = vmatprep.subr.bf16.mxu0 0
      %775 = vmatpush1.bf16.msra.mxu0 %v764
      %776 = vmatprep.subr.bf16.mxu0 0
      %777 = vmatpush1.bf16.msra.mxu0 %v765
      %778 = vmatprep.subr.bf16.mxu0 0
      %779 = vmatpush1.bf16.msra.mxu0 0
      %780 = vmatprep.subr.bf16.mxu0 0
      %781 = vmatpush1.bf16.msra.mxu0 0
      %782 = vmatprep.subr.bf16.mxu0 0
      %783 = vmatpush1.bf16.msra.mxu0 0
      %784 = vmatprep.subr.bf16.mxu0 0
      %785 = vmatpush1.bf16.msra.mxu0 0
      %786 = vmatprep.subr.bf16.mxu0 0
      %787 = vmatpush1.bf16.msra.mxu0 0
      %788 = vmatprep.subr.bf16.mxu0 0
      %789 = vmatpush1.bf16.msra.mxu0 0
      %790 = vmatprep.subr.bf16.mxu0 0
      %791 = vmatpush1.bf16.msra.mxu0 0
      %792 = vmatprep.subr.bf16.mxu0 0
      %793 = vmatpush1.bf16.msra.mxu0 0
      %794 = vmatprep.subr.bf16.mxu0 0
      %795 = vmatpush1.bf16.msra.mxu0 0
      %796 = vmatprep.subr.bf16.mxu0 0
      %797 = vmatpush1.bf16.msra.mxu0 0
      %798 = vmatprep.subr.bf16.mxu0 0
      %799 = vmatpush1.bf16.msra.mxu0 0
      %800 = vmatprep.subr.bf16.mxu0 0
      %801 = vmatpush1.bf16.msra.mxu0 0
      %802 = vmatprep.subr.bf16.mxu0 0
      %803 = vmatpush1.bf16.msra.mxu0 0
      %804 = vmatprep.subr.bf16.mxu0 0
      %805 = vmatpush1.bf16.msra.mxu0 0
      %806 = vmatprep.mubr.bf16.mxu0 0
      %807 = vmatmul.mubr.bf16.gmra.mrb[0].mxu0 %v769
      %v808 = vpop.f32.mrb[0].mxu0
      %v809 = vadd.f32 0.0, %v808
      %v810 = vpop.f32.mrb[0].mxu0
      %v811 = vpop.f32.mrb[0].mxu0
      %v812 = vadd.f32 0.0, %v811
      %v813 = vpop.f32.mrb[0].mxu0
      %814 = vmatprep.mubr.bf16.mxu0 0
      %815 = vmatmul.mubr.bf16.gmra.mrb[0].mxu0 %v772
      %v816 = vpop.f32.mrb[0].mxu0
      %v817 = vadd.f32 0.0, %v816
      %v818 = vpop.f32.mrb[0].mxu0
      %v819 = vpop.f32.mrb[0].mxu0
      %v820 = vadd.f32 0.0, %v819
      %v821 = vpop.f32.mrb[0].mxu0
      %822 = vdwg.mxu0
      %v823 = vadd.f32 %v726, %v809
      %v824 = vadd.f32 %v727, %v812
      %v825 = vadd.f32 %v728, %v817
      %v826 = vadd.f32 %v729, %v820
      %s827 = scalar_lea.vmem %s3, 80
      %v828 = vld [vmem:[%s827] sm:$0xf]
      %v829 = vld [vmem:[%s827 + $0x4] sm:$0xf]
      %v830 = vld [vmem:[%s827 + $0x8] sm:$0xf]
      %v831 = vld [vmem:[%s827 + $0xc] sm:$0xf]
      %v832 = vrot.slane %v657, 1
      %v833 = vrot.slane %v658, 1
      %v834 = vsel %vm567, %v832, %v833
      %v835 = vrot.slane %v737, 1
      %v836 = vsel %vm567, %v833, %v835
      %v841 = vunpack.c.l.b16 %v828
      %v842 = vunpack.c.l.b16 %v829
      %v843 = vunpack.c.l.b16 %v830
      %v844 = vunpack.c.l.b16 %v831
      %v845 = vpack.c.b16 %v842, %v841
      %v846 = vpack.c.b16 %v844, %v843
      %v850 = vsel %vm441, %v834, 0
      %v853 = vsel %vm441, %v836, 0
      %855 = vmatprep.subr.bf16.mxu0 0
      %856 = vmatpush1.bf16.msra.mxu0 %v845
      %857 = vmatprep.subr.bf16.mxu0 0
      %858 = vmatpush1.bf16.msra.mxu0 %v846
      %859 = vmatprep.subr.bf16.mxu0 0
      %860 = vmatpush1.bf16.msra.mxu0 0
      %861 = vmatprep.subr.bf16.mxu0 0
      %862 = vmatpush1.bf16.msra.mxu0 0
      %863 = vmatprep.subr.bf16.mxu0 0
      %864 = vmatpush1.bf16.msra.mxu0 0
      %865 = vmatprep.subr.bf16.mxu0 0
      %866 = vmatpush1.bf16.msra.mxu0 0
      %867 = vmatprep.subr.bf16.mxu0 0
      %868 = vmatpush1.bf16.msra.mxu0 0
      %869 = vmatprep.subr.bf16.mxu0 0
      %870 = vmatpush1.bf16.msra.mxu0 0
      %871 = vmatprep.subr.bf16.mxu0 0
      %872 = vmatpush1.bf16.msra.mxu0 0
      %873 = vmatprep.subr.bf16.mxu0 0
      %874 = vmatpush1.bf16.msra.mxu0 0
      %875 = vmatprep.subr.bf16.mxu0 0
      %876 = vmatpush1.bf16.msra.mxu0 0
      %877 = vmatprep.subr.bf16.mxu0 0
      %878 = vmatpush1.bf16.msra.mxu0 0
      %879 = vmatprep.subr.bf16.mxu0 0
      %880 = vmatpush1.bf16.msra.mxu0 0
      %881 = vmatprep.subr.bf16.mxu0 0
      %882 = vmatpush1.bf16.msra.mxu0 0
      %883 = vmatprep.subr.bf16.mxu0 0
      %884 = vmatpush1.bf16.msra.mxu0 0
      %885 = vmatprep.subr.bf16.mxu0 0
      %886 = vmatpush1.bf16.msra.mxu0 0
      %887 = vmatprep.mubr.bf16.mxu0 0
      %888 = vmatmul.mubr.bf16.gmra.mrb[0].mxu0 %v850
      %v889 = vpop.f32.mrb[0].mxu0
      %v890 = vadd.f32 0.0, %v889
      %v891 = vpop.f32.mrb[0].mxu0
      %v892 = vpop.f32.mrb[0].mxu0
      %v893 = vadd.f32 0.0, %v892
      %v894 = vpop.f32.mrb[0].mxu0
      %895 = vmatprep.mubr.bf16.mxu0 0
      %896 = vmatmul.mubr.bf16.gmra.mrb[0].mxu0 %v853
      %v897 = vpop.f32.mrb[0].mxu0
      %v898 = vadd.f32 0.0, %v897
      %v899 = vpop.f32.mrb[0].mxu0
      %v900 = vpop.f32.mrb[0].mxu0
      %v901 = vadd.f32 0.0, %v900
      %v902 = vpop.f32.mrb[0].mxu0
      %903 = vdwg.mxu0
      %v904 = vadd.f32 %v823, %v890
      %v905 = vadd.f32 %v824, %v893
      %v906 = vadd.f32 %v825, %v898
      %v907 = vadd.f32 %v826, %v901
      %s908 = scalar_lea.vmem %s3, 96
      %v909 = vld [vmem:[%s908] sm:$0xf]
      %v910 = vld [vmem:[%s908 + $0x4] sm:$0xf]
      %v911 = vld [vmem:[%s908 + $0x8] sm:$0xf]
      %v912 = vld [vmem:[%s908 + $0xc] sm:$0xf]
      %v917 = vunpack.c.l.b16 %v381
      %v918 = vunpack.c.l.b16 %v382
      %v919 = vunpack.c.l.b16 %v383
      %v920 = vunpack.c.l.b16 %v384
      %v921 = vpack.c.b16 %v918, %v917
      %v922 = vpack.c.b16 %v920, %v919
      %v927 = vunpack.c.l.b16 %v909
      %v928 = vunpack.c.l.b16 %v910
      %v929 = vunpack.c.l.b16 %v911
      %v930 = vunpack.c.l.b16 %v912
      %v931 = vpack.c.b16 %v928, %v927
      %v932 = vpack.c.b16 %v930, %v929
      %v936 = vsel %vm441, %v921, 0
      %v939 = vsel %vm441, %v922, 0
      %941 = vmatprep.subr.bf16.mxu0 0
      %942 = vmatpush1.bf16.msra.mxu0 %v931
      %943 = vmatprep.subr.bf16.mxu0 0
      %944 = vmatpush1.bf16.msra.mxu0 %v932
      %945 = vmatprep.subr.bf16.mxu0 0
      %946 = vmatpush1.bf16.msra.mxu0 0
      %947 = vmatprep.subr.bf16.mxu0 0
      %948 = vmatpush1.bf16.msra.mxu0 0
      %949 = vmatprep.subr.bf16.mxu0 0
      %950 = vmatpush1.bf16.msra.mxu0 0
      %951 = vmatprep.subr.bf16.mxu0 0
      %952 = vmatpush1.bf16.msra.mxu0 0
      %953 = vmatprep.subr.bf16.mxu0 0
      %954 = vmatpush1.bf16.msra.mxu0 0
      %955 = vmatprep.subr.bf16.mxu0 0
      %956 = vmatpush1.bf16.msra.mxu0 0
      %957 = vmatprep.subr.bf16.mxu0 0
      %958 = vmatpush1.bf16.msra.mxu0 0
      %959 = vmatprep.subr.bf16.mxu0 0
      %960 = vmatpush1.bf16.msra.mxu0 0
      %961 = vmatprep.subr.bf16.mxu0 0
      %962 = vmatpush1.bf16.msra.mxu0 0
      %963 = vmatprep.subr.bf16.mxu0 0
      %964 = vmatpush1.bf16.msra.mxu0 0
      %965 = vmatprep.subr.bf16.mxu0 0
      %966 = vmatpush1.bf16.msra.mxu0 0
      %967 = vmatprep.subr.bf16.mxu0 0
      %968 = vmatpush1.bf16.msra.mxu0 0
      %969 = vmatprep.subr.bf16.mxu0 0
      %970 = vmatpush1.bf16.msra.mxu0 0
      %971 = vmatprep.subr.bf16.mxu0 0
      %972 = vmatpush1.bf16.msra.mxu0 0
      %973 = vmatprep.mubr.bf16.mxu0 0
      %974 = vmatmul.mubr.bf16.gmra.mrb[0].mxu0 %v936
      %v975 = vpop.f32.mrb[0].mxu0
      %v976 = vadd.f32 0.0, %v975
      %v977 = vpop.f32.mrb[0].mxu0
      %v978 = vpop.f32.mrb[0].mxu0
      %v979 = vadd.f32 0.0, %v978
      %v980 = vpop.f32.mrb[0].mxu0
      %981 = vmatprep.mubr.bf16.mxu0 0
      %982 = vmatmul.mubr.bf16.gmra.mrb[0].mxu0 %v939
      %v983 = vpop.f32.mrb[0].mxu0
      %v984 = vadd.f32 0.0, %v983
      %v985 = vpop.f32.mrb[0].mxu0
      %v986 = vpop.f32.mrb[0].mxu0
      %v987 = vadd.f32 0.0, %v986
      %v988 = vpop.f32.mrb[0].mxu0
      %989 = vdwg.mxu0
      %v990 = vadd.f32 %v904, %v976
      %v991 = vadd.f32 %v905, %v979
      %v992 = vadd.f32 %v906, %v984
      %v993 = vadd.f32 %v907, %v987
      %s994 = scalar_lea.vmem %s3, 112
      %v995 = vld [vmem:[%s994] sm:$0xf]
      %v996 = vld [vmem:[%s994 + $0x4] sm:$0xf]
      %v997 = vld [vmem:[%s994 + $0x8] sm:$0xf]
      %v998 = vld [vmem:[%s994 + $0xc] sm:$0xf]
      %v1000 = vunpack.c.l.b16 %v385
      %v1001 = vpack.c.b16 %v1000, %v1000
      %v1002 = vshrl.u32 %v921, 16
      %v1004 = vshll.u32 %v921, 16
      %v1006 = vrot.slane %v1004, 1
      %v1007 = vor.u32 %v1002, %v1006
      %v1008 = vshll.u32 %v922, 16
      %v1010 = vrot.slane %v1008, 1
      %v1011 = vsel %vm408, %v1007, %v1010
      %v1012 = vshrl.u32 %v922, 16
      %v1014 = vor.u32 %v1012, %v1010
      %v1016 = vshll.u32 %v1001, 16
      %v1018 = vrot.slane %v1016, 1
      %v1019 = vsel %vm408, %v1014, %v1018
      %v1024 = vunpack.c.l.b16 %v995
      %v1025 = vunpack.c.l.b16 %v996
      %v1026 = vunpack.c.l.b16 %v997
      %v1027 = vunpack.c.l.b16 %v998
      %v1028 = vpack.c.b16 %v1025, %v1024
      %v1029 = vpack.c.b16 %v1027, %v1026
      %v1033 = vsel %vm441, %v1011, 0
      %v1036 = vsel %vm441, %v1019, 0
      %1038 = vmatprep.subr.bf16.mxu0 0
      %1039 = vmatpush1.bf16.msra.mxu0 %v1028
      %1040 = vmatprep.subr.bf16.mxu0 0
      %1041 = vmatpush1.bf16.msra.mxu0 %v1029
      %1042 = vmatprep.subr.bf16.mxu0 0
      %1043 = vmatpush1.bf16.msra.mxu0 0
      %1044 = vmatprep.subr.bf16.mxu0 0
      %1045 = vmatpush1.bf16.msra.mxu0 0
      %1046 = vmatprep.subr.bf16.mxu0 0
      %1047 = vmatpush1.bf16.msra.mxu0 0
      %1048 = vmatprep.subr.bf16.mxu0 0
      %1049 = vmatpush1.bf16.msra.mxu0 0
      %1050 = vmatprep.subr.bf16.mxu0 0
      %1051 = vmatpush1.bf16.msra.mxu0 0
      %1052 = vmatprep.subr.bf16.mxu0 0
      %1053 = vmatpush1.bf16.msra.mxu0 0
      %1054 = vmatprep.subr.bf16.mxu0 0
      %1055 = vmatpush1.bf16.msra.mxu0 0
      %1056 = vmatprep.subr.bf16.mxu0 0
      %1057 = vmatpush1.bf16.msra.mxu0 0
      %1058 = vmatprep.subr.bf16.mxu0 0
      %1059 = vmatpush1.bf16.msra.mxu0 0
      %1060 = vmatprep.subr.bf16.mxu0 0
      %1061 = vmatpush1.bf16.msra.mxu0 0
      %1062 = vmatprep.subr.bf16.mxu0 0
      %1063 = vmatpush1.bf16.msra.mxu0 0
      %1064 = vmatprep.subr.bf16.mxu0 0
      %1065 = vmatpush1.bf16.msra.mxu0 0
      %1066 = vmatprep.subr.bf16.mxu0 0
      %1067 = vmatpush1.bf16.msra.mxu0 0
      %1068 = vmatprep.subr.bf16.mxu0 0
      %1069 = vmatpush1.bf16.msra.mxu0 0
      %1070 = vmatprep.mubr.bf16.mxu0 0
      %1071 = vmatmul.mubr.bf16.gmra.mrb[0].mxu0 %v1033
      %v1072 = vpop.f32.mrb[0].mxu0
      %v1073 = vadd.f32 0.0, %v1072
      %v1074 = vpop.f32.mrb[0].mxu0
      %v1075 = vpop.f32.mrb[0].mxu0
      %v1076 = vadd.f32 0.0, %v1075
      %v1077 = vpop.f32.mrb[0].mxu0
      %1078 = vmatprep.mubr.bf16.mxu0 0
      %1079 = vmatmul.mubr.bf16.gmra.mrb[0].mxu0 %v1036
      %v1080 = vpop.f32.mrb[0].mxu0
      %v1081 = vadd.f32 0.0, %v1080
      %v1082 = vpop.f32.mrb[0].mxu0
      %v1083 = vpop.f32.mrb[0].mxu0
      %v1084 = vadd.f32 0.0, %v1083
      %v1085 = vpop.f32.mrb[0].mxu0
      %1086 = vdwg.mxu0
      %v1087 = vadd.f32 %v990, %v1073
      %v1088 = vadd.f32 %v991, %v1076
      %v1089 = vadd.f32 %v992, %v1081
      %v1090 = vadd.f32 %v993, %v1084
      %s1091 = scalar_lea.vmem %s3, 128
      %v1092 = vld [vmem:[%s1091] sm:$0xf]
      %v1093 = vld [vmem:[%s1091 + $0x4] sm:$0xf]
      %v1094 = vld [vmem:[%s1091 + $0x8] sm:$0xf]
      %v1095 = vld [vmem:[%s1091 + $0xc] sm:$0xf]
      %v1096 = vrot.slane %v921, 1
      %v1097 = vrot.slane %v922, 1
      %v1098 = vsel %vm567, %v1096, %v1097
      %v1099 = vrot.slane %v1001, 1
      %v1100 = vsel %vm567, %v1097, %v1099
      %v1105 = vunpack.c.l.b16 %v1092
      %v1106 = vunpack.c.l.b16 %v1093
      %v1107 = vunpack.c.l.b16 %v1094
      %v1108 = vunpack.c.l.b16 %v1095
      %v1109 = vpack.c.b16 %v1106, %v1105
      %v1110 = vpack.c.b16 %v1108, %v1107
      %v1114 = vsel %vm441, %v1098, 0
      %v1117 = vsel %vm441, %v1100, 0
      %1119 = vmatprep.subr.bf16.mxu0 0
      %1120 = vmatpush1.bf16.msra.mxu0 %v1109
      %1121 = vmatprep.subr.bf16.mxu0 0
      %1122 = vmatpush1.bf16.msra.mxu0 %v1110
      %1123 = vmatprep.subr.bf16.mxu0 0
      %1124 = vmatpush1.bf16.msra.mxu0 0
      %1125 = vmatprep.subr.bf16.mxu0 0
      %1126 = vmatpush1.bf16.msra.mxu0 0
      %1127 = vmatprep.subr.bf16.mxu0 0
      %1128 = vmatpush1.bf16.msra.mxu0 0
      %1129 = vmatprep.subr.bf16.mxu0 0
      %1130 = vmatpush1.bf16.msra.mxu0 0
      %1131 = vmatprep.subr.bf16.mxu0 0
      %1132 = vmatpush1.bf16.msra.mxu0 0
      %1133 = vmatprep.subr.bf16.mxu0 0
      %1134 = vmatpush1.bf16.msra.mxu0 0
      %1135 = vmatprep.subr.bf16.mxu0 0
      %1136 = vmatpush1.bf16.msra.mxu0 0
      %1137 = vmatprep.subr.bf16.mxu0 0
      %1138 = vmatpush1.bf16.msra.mxu0 0
      %1139 = vmatprep.subr.bf16.mxu0 0
      %1140 = vmatpush1.bf16.msra.mxu0 0
      %1141 = vmatprep.subr.bf16.mxu0 0
      %1142 = vmatpush1.bf16.msra.mxu0 0
      %1143 = vmatprep.subr.bf16.mxu0 0
      %1144 = vmatpush1.bf16.msra.mxu0 0
      %1145 = vmatprep.subr.bf16.mxu0 0
      %1146 = vmatpush1.bf16.msra.mxu0 0
      %1147 = vmatprep.subr.bf16.mxu0 0
      %1148 = vmatpush1.bf16.msra.mxu0 0
      %1149 = vmatprep.subr.bf16.mxu0 0
      %1150 = vmatpush1.bf16.msra.mxu0 0
      %1151 = vmatprep.mubr.bf16.mxu0 0
      %1152 = vmatmul.mubr.bf16.gmra.mrb[0].mxu0 %v1114
      %v1153 = vpop.f32.mrb[0].mxu0
      %v1154 = vadd.f32 0.0, %v1153
      %v1155 = vpop.f32.mrb[0].mxu0
      %v1156 = vpop.f32.mrb[0].mxu0
      %v1157 = vadd.f32 0.0, %v1156
      %v1158 = vpop.f32.mrb[0].mxu0
      %1159 = vmatprep.mubr.bf16.mxu0 0
      %1160 = vmatmul.mubr.bf16.gmra.mrb[0].mxu0 %v1117
      %v1161 = vpop.f32.mrb[0].mxu0
      %v1162 = vadd.f32 0.0, %v1161
      %v1163 = vpop.f32.mrb[0].mxu0
      %v1164 = vpop.f32.mrb[0].mxu0
      %v1165 = vadd.f32 0.0, %v1164
      %v1166 = vpop.f32.mrb[0].mxu0
      %1167 = vdwg.mxu0
      %v1168 = vadd.f32 %v1087, %v1154
      %v1169 = vadd.f32 %v1088, %v1157
      %v1170 = vadd.f32 %v1089, %v1162
      %v1171 = vadd.f32 %v1090, %v1165
      %v1172 = vld [vmem:[%s4] sm:$0x1]
      %v1174 = vlaneseq
      %v1175 = vshrl.u32 %v1174, 7
      %v1176 = vsub.s32 0, %v1175
      %v1177 = vrot.slane %v1172, %v1176
      %v1179 = vmul.f32 %v1168, %v1177
      %v1180 = vmul.f32 %v1169, %v1177
      %v1181 = vmul.f32 %v1170, %v1177
      %v1182 = vmul.f32 %v1171, %v1177
      %v1183 = vld [vmem:[%s5] sm:$0x1]
      %v1185 = vlaneseq
      %v1186 = vshrl.u32 %v1185, 7
      %v1187 = vsub.s32 0, %v1186
      %v1188 = vrot.slane %v1183, %v1187
      %v1190 = vadd.f32 %v1179, %v1188
      %v1191 = vadd.f32 %v1180, %v1188
      %v1192 = vadd.f32 %v1181, %v1188
      %v1193 = vadd.f32 %v1182, %v1188
      %v1194 = vxor.u32 %v1190, 2147483648
      %v1195 = vxor.u32 %v1191, 2147483648
      %v1196 = vxor.u32 %v1192, 2147483648
      %v1197 = vxor.u32 %v1193, 2147483648
      %v1198 = vmul.f32 %v1194, 1.442695
      %v1199 = vpow.pop %v1198
      %v1200 = vmul.f32 %v1195, 1.442695
      %v1201 = vpow.pop %v1200
      %v1202 = vmul.f32 %v1196, 1.442695
      %v1203 = vpow.pop %v1202
      %v1204 = vmul.f32 %v1197, 1.442695
      %v1205 = vpow.pop %v1204
      %v1206 = vadd.f32 %v1199, 1.0
      %v1207 = vadd.f32 %v1201, 1.0
      %v1208 = vadd.f32 %v1203, 1.0
      %v1209 = vadd.f32 %v1205, 1.0
      %v1210 = vrcp.pop %v1206
      %v1211 = vmul.f32 1.0, %v1210
      %v1212 = vrcp.pop %v1207
      %v1213 = vmul.f32 1.0, %v1212
      %v1214 = vrcp.pop %v1208
      %v1215 = vmul.f32 1.0, %v1214
      %v1216 = vrcp.pop %v1209
      %v1217 = vmul.f32 1.0, %v1216
      %v1218 = vmul.f32 %v1190, %v1211
      %v1219 = vmul.f32 %v1191, %v1213
      %v1220 = vmul.f32 %v1192, %v1215
      %v1221 = vmul.f32 %v1193, %v1217
      %v1222 = vpack.c.bf16 %v1219, %v1218
      %v1223 = vpack.c.bf16 %v1221, %v1220
      %v1226 = vunpack.c.l.b16 %v1222
      %v1227 = vunpack.c.h.b16 %v1222
      %v1228 = vunpack.c.l.b16 %v1223
      %v1229 = vunpack.c.h.b16 %v1223
      %v1230 = vpack.c.b16 %v1226, %v1226
      %v1231 = vpack.c.b16 %v1227, %v1227
      %v1232 = vpack.c.b16 %v1228, %v1228
      %v1233 = vpack.c.b16 %v1229, %v1229
      %vm1238 = vcmask 257024
      %1239 = vst.msk [vmem:[%s369] sm:$0xf] %vm1238, %v1230
      %1240 = vst.msk [vmem:[%s369 + $0x4] sm:$0xf] %vm1238, %v1231
      %1241 = vst.msk [vmem:[%s369 + $0x8] sm:$0xf] %vm1238, %v1232
      %1242 = vst.msk [vmem:[%s369 + $0xc] sm:$0xf] %vm1238, %v1233
      %p1243 = scmp.lt.s32.totalorder %s21, 1
      %s1244 = scalar_select %p1243, %s21, 1
      %p1245 = scmp.lt.s32.totalorder %s22, 31
      %s1246 = scalar_select %p1245, %s22, 31
      %s1247 = smul.addr %s1246, 4
      %s1248 = smul.addr %s1244, 128
      %s1249 = sadd.s32 %s1247, %s1248
      %s1250 = smul.addr %s1249, 4
      %s1251 = scalar_lea.vmem %s6, %s1250
      // Predicated region
      $region45: #{proto_forward.6} parent=43 // pred_check
        %p1252 = pneg %p200
      $region46: #{proto_forward.6} parent=43 // pred_check_branch
        %1254 = sbr.rel (%p1252) target = $region48
      $region47: #{proto_forward.6} parent=43 // pred_region
        _
      $region48: #{proto_forward.6} parent=43 // pred_fallthru
        _
    $region44: #{proto_forward.6} parent=5 // pred_fallthru
      _
    %p1255 = scmp.le.s32.totalorder 2, %s12
    // Predicated region
    $region49: #{proto_forward.6} parent=5 // pred_check
      %p1256 = pneg %p1255
    $region50: #{proto_forward.6} parent=5 // pred_check_branch
      %1258 = sbr.rel (%p1256) target = $region52
    $region51: #{proto_forward.6} parent=5 // pred_region
      %s1259 = ssub.s32 %s12, 2
      // Predicated region
      $region53: #{proto_forward.6} parent=51 // pred_check
        %p1260 = pneg %p206
      $region54: #{proto_forward.6} parent=51 // pred_check_branch
        %1262 = sbr.rel (%p1260) target = $region56
      $region55: #{proto_forward.6} parent=51 // pred_region
        %p1263 = scmp.lt.s32.totalorder %s23, 1
        %s1264 = scalar_select %p1263, %s23, 1
        %p1265 = scmp.lt.s32.totalorder %s24, 31
        %s1266 = scalar_select %p1265, %s24, 31
        %s1267 = smul.addr %s1266, 4
        %s1268 = smul.addr %s1264, 128
        %s1269 = sadd.s32 %s1267, %s1268
        %s1270 = smul.addr %s1269, 4
        %s1271 = scalar_lea.vmem %s6, %s1270
      $region56: #{proto_forward.6} parent=51 // pred_fallthru
        _
    $region52: #{proto_forward.6} parent=5 // pred_fallthru
      _
  $region6: #{proto_forward.6} parent=0 // loop_footer
    %s16 = sadd.s32 1, %s12
  $region7: #{proto_forward.6} parent=0 // loop_footer_branch
    %11 = sbr.rel target = $region3
  $region8: #{proto_forward.6} parent=0 // loop_exit
    _

// kernel: proto_forward.7
$region0: #{proto_forward.7}
  #allocation0 [shape = 'u32[]', space=smem, size = 0x4, offset = 0x4, fixed_abs, tag = 'smem constant byte address 0x4 - core index']
  #allocation1 [shape = 'u32[144,128]{1,0:T(1,128)}', space=vmem, size = 0x12000, scoped, tag = 'internal scratch']
  %s0 = inlined_call_operand.vmem [shape: bf16[2048,32], index: 0, kind: input, shape index: {}]
  %s1 = inlined_call_operand.vmem [shape: bf16[32,16], index: 1, kind: input, shape index: {}]
  %s2 = inlined_call_operand.vmem [shape: f32[1,16], index: 2, kind: input, shape index: {}]
  %s3 = inlined_call_operand.vmem [shape: f32[1,16], index: 3, kind: input, shape index: {}]
  %s4 = inlined_call_operand.vmem [shape: f32[2048,16], index: 4, kind: output, shape index: {}]
  %s5 = sld [smem:[#allocation0]]
  $region49: #{proto_forward.7} parent=0
    _
  %s7 = ssub.s32 1, %s5
  %s8 = scalar_select 0, %s7, %s5
  loop: start=0, step=1, limit=6
  $region2: #{proto_forward.7} parent=0 // loop_pre_header
    _
  $region3: #{proto_forward.7} parent=0 // loop_header
    %s10 = sphi 0, %s14
    %p11 = scmp.ge.s32.totalorder %s10, 6
    %s20 = sphi 0, %s22
    %s23 = sphi 0, %s20
    %s24 = sphi 0, %s23
    %s40 = sphi 0, %s24
    %s44 = sphi 0, %s44
    %s46 = sphi 0, %s44
    %s47 = sphi 0, %s46
    %s61 = sphi 0, %s47
    %s65 = sphi 0, %s65
    %s67 = sphi 0, %s65
    %s68 = sphi 0, %s67
    %s82 = sphi 0, %s68
    %s86 = sphi 0, %s86
    %s88 = sphi 0, %s86
    %s89 = sphi 0, %s88
    %s103 = sphi 0, %s89
    %s109 = sphi 0, %s111
    %s112 = sphi 0, %s109
    %s113 = sphi 0, %s112
    %s129 = sphi 0, %s113
  $region4: #{proto_forward.7} parent=0 // loop_header_branch
    %13 = sbr.rel (%p11) target = $region8
  $region5: #{proto_forward.7} parent=0 // loop_body
    %s15 = ssub.s32 %s10, 1
    %s16 = ssub.s32 %s10, 2
    %s17 = sadd.s32 %s10, 1
    %s18 = ssub.s32 %s10, %s17
    %p19 = scmp.eq.s32.totalorder %s18, 0
    %s21 = sadd.s32 %s20, 1
    %s22 = scalar_select %p19, %s20, %s21
    %p25 = pneg %p19
    %p26 = scmp.eq.s32.totalorder %s10, 3
    %p27 = por %p25, %p26
    %p28 = scmp.ne.s32.totalorder %s20, %s23
    %p29 = scmp.eq.s32.totalorder %s10, 0
    %p30 = por %p28, %p29
    %p31 = scmp.ne.s32.totalorder %s20, %s23
    %p32 = scmp.eq.s32.totalorder %s15, 3
    %p33 = por %p31, %p32
    %p34 = scmp.ne.s32.totalorder %s23, %s24
    %p35 = scmp.eq.s32.totalorder %s15, 0
    %p36 = por %p34, %p35
    %p37 = scmp.ne.s32.totalorder %s23, %s24
    %p38 = scmp.eq.s32.totalorder %s16, 3
    %p39 = por %p37, %p38
    %p41 = scmp.ne.s32.totalorder %s24, %s40
    %p42 = scmp.eq.s32.totalorder %s16, 0
    %p43 = por %p41, %p42
    %s45 = sadd.s32 %s44, 1
    %p48 = scmp.eq.s32.totalorder %s10, 3
    %p49 = scmp.ne.s32.totalorder %s44, %s46
    %p50 = scmp.eq.s32.totalorder %s10, 0
    %p51 = por %p49, %p50
    %p52 = scmp.ne.s32.totalorder %s44, %s46
    %p53 = scmp.eq.s32.totalorder %s15, 3
    %p54 = por %p52, %p53
    %p55 = scmp.ne.s32.totalorder %s46, %s47
    %p56 = scmp.eq.s32.totalorder %s15, 0
    %p57 = por %p55, %p56
    %p58 = scmp.ne.s32.totalorder %s46, %s47
    %p59 = scmp.eq.s32.totalorder %s16, 3
    %p60 = por %p58, %p59
    %p62 = scmp.ne.s32.totalorder %s47, %s61
    %p63 = scmp.eq.s32.totalorder %s16, 0
    %p64 = por %p62, %p63
    %s66 = sadd.s32 %s65, 1
    %p69 = scmp.eq.s32.totalorder %s10, 3
    %p70 = scmp.ne.s32.totalorder %s65, %s67
    %p71 = scmp.eq.s32.totalorder %s10, 0
    %p72 = por %p70, %p71
    %p73 = scmp.ne.s32.totalorder %s65, %s67
    %p74 = scmp.eq.s32.totalorder %s15, 3
    %p75 = por %p73, %p74
    %p76 = scmp.ne.s32.totalorder %s67, %s68
    %p77 = scmp.eq.s32.totalorder %s15, 0
    %p78 = por %p76, %p77
    %p79 = scmp.ne.s32.totalorder %s67, %s68
    %p80 = scmp.eq.s32.totalorder %s16, 3
    %p81 = por %p79, %p80
    %p83 = scmp.ne.s32.totalorder %s68, %s82
    %p84 = scmp.eq.s32.totalorder %s16, 0
    %p85 = por %p83, %p84
    %s87 = sadd.s32 %s86, 1
    %p90 = scmp.eq.s32.totalorder %s10, 3
    %p91 = scmp.ne.s32.totalorder %s86, %s88
    %p92 = scmp.eq.s32.totalorder %s10, 0
    %p93 = por %p91, %p92
    %p94 = scmp.ne.s32.totalorder %s86, %s88
    %p95 = scmp.eq.s32.totalorder %s15, 3
    %p96 = por %p94, %p95
    %p97 = scmp.ne.s32.totalorder %s88, %s89
    %p98 = scmp.eq.s32.totalorder %s15, 0
    %p99 = por %p97, %p98
    %p100 = scmp.ne.s32.totalorder %s88, %s89
    %p101 = scmp.eq.s32.totalorder %s16, 3
    %p102 = por %p100, %p101
    %p104 = scmp.ne.s32.totalorder %s89, %s103
    %p105 = scmp.eq.s32.totalorder %s16, 0
    %p106 = por %p104, %p105
    %s107 = ssub.s32 %s10, %s17
    %p108 = scmp.eq.s32.totalorder %s107, 0
    %s110 = sadd.s32 %s109, 1
    %s111 = scalar_select %p108, %s109, %s110
    %p114 = pneg %p108
    %p115 = scmp.eq.s32.totalorder %s10, 3
    %p116 = por %p114, %p115
    %p117 = scmp.ne.s32.totalorder %s109, %s112
    %p118 = scmp.eq.s32.totalorder %s10, 0
    %p119 = por %p117, %p118
    %p120 = scmp.ne.s32.totalorder %s109, %s112
    %p121 = scmp.eq.s32.totalorder %s15, 3
    %p122 = por %p120, %p121
    %p123 = scmp.ne.s32.totalorder %s112, %s113
    %p124 = scmp.eq.s32.totalorder %s15, 0
    %p125 = por %p123, %p124
    %p126 = scmp.ne.s32.totalorder %s112, %s113
    %p127 = scmp.eq.s32.totalorder %s16, 3
    %p128 = por %p126, %p127
    %p130 = scmp.ne.s32.totalorder %s113, %s129
    %p131 = scmp.eq.s32.totalorder %s16, 0
    %p132 = por %p130, %p131
    %p133 = scmp.le.s32.totalorder 1, %s10
    %p134 = scmp.lt.s32.totalorder %s10, 5
    %p135 = pnand %p133, %p134
    %p136 = pneg %p135
    // Predicated region
    $region9: #{proto_forward.7} parent=5 // pred_check
      _
    $region10: #{proto_forward.7} parent=5 // pred_check_branch
      %138 = sbr.rel (%p135) target = $region12
    $region11: #{proto_forward.7} parent=5 // pred_region
      %s139 = ssub.s32 %s10, 1
      // Predicated region
      $region13: #{proto_forward.7} parent=11 // pred_check
        %p140 = pneg %p57
      $region14: #{proto_forward.7} parent=11 // pred_check_branch
        %142 = sbr.rel (%p140) target = $region16
      $region15: #{proto_forward.7} parent=11 // pred_region
        _
      $region16: #{proto_forward.7} parent=11 // pred_fallthru
        _
      // Predicated region
      $region17: #{proto_forward.7} parent=11 // pred_check
        %p143 = pneg %p78
      $region18: #{proto_forward.7} parent=11 // pred_check_branch
        %145 = sbr.rel (%p143) target = $region20
      $region19: #{proto_forward.7} parent=11 // pred_region
        _
      $region20: #{proto_forward.7} parent=11 // pred_fallthru
        _
      // Predicated region
      $region21: #{proto_forward.7} parent=11 // pred_check
        %p146 = pneg %p99
      $region22: #{proto_forward.7} parent=11 // pred_check_branch
        %148 = sbr.rel (%p146) target = $region24
      $region23: #{proto_forward.7} parent=11 // pred_region
        _
      $region24: #{proto_forward.7} parent=11 // pred_fallthru
        _
    $region12: #{proto_forward.7} parent=5 // pred_fallthru
      _
    %p149 = scmp.lt.s32.totalorder %s10, 4
    // Predicated region
    $region25: #{proto_forward.7} parent=5 // pred_check
      %p150 = pneg %p149
    $region26: #{proto_forward.7} parent=5 // pred_check_branch
      %152 = sbr.rel (%p150) target = $region28
    $region27: #{proto_forward.7} parent=5 // pred_region
      // Predicated region
      $region29: #{proto_forward.7} parent=27 // pred_check
        %p153 = pneg %p30
      $region30: #{proto_forward.7} parent=27 // pred_check_branch
        %155 = sbr.rel (%p153) target = $region32
      $region31: #{proto_forward.7} parent=27 // pred_region
        %s156 = smul.u32 64, %s10
        %p157 = scmp.lt.s32.totalorder %s156, 255
        %s158 = scalar_select %p157, %s156, 255
        %s159 = smul.addr %s158, 4
        %s160 = scalar_lea.vmem %s0, %s159
        %s161 = smul.u32 64, %s10
      $region32: #{proto_forward.7} parent=27 // pred_fallthru
        _
    $region28: #{proto_forward.7} parent=5 // pred_fallthru
      _
    %p162 = scmp.le.s32.totalorder 1, %s10
    %p163 = scmp.lt.s32.totalorder %s10, 5
    %p164 = pnand %p162, %p163
    %p165 = pneg %p164
    // Predicated region
    $region33: #{proto_forward.7} parent=5 // pred_check
      _
    $region34: #{proto_forward.7} parent=5 // pred_check_branch
      %167 = sbr.rel (%p164) target = $region36
    $region35: #{proto_forward.7} parent=5 // pred_region
      %s168 = ssub.s32 %s10, 1
      %s169 = smul.u32 64, %s15
      %p170 = scmp.lt.s32.totalorder %s169, 255
      %s171 = scalar_select %p170, %s169, 255
      %s172 = smul.addr %s171, 4
      %s173 = scalar_lea.vmem %s0, %s172
      %p174 = pneg %p36
      %p175 = pneg %p33
      %p176 = pneg %p57
      %p177 = pneg %p54
      %p178 = pneg %p78
      %p179 = pneg %p75
      %p180 = pneg %p99
      %p181 = pneg %p96
      %p182 = pneg %p125
      %p183 = pneg %p122
      %s184 = smul.u32 64, %s15
      %p185 = scmp.lt.s32.totalorder %s184, 255
      %s186 = scalar_select %p185, %s184, 255
      %s187 = smul.addr %s186, 8
      %s188 = scalar_lea.vmem %s4, %s187
      %s189 = smul.u32 64, %s15
      %p190 = scmp.lt.s32.totalorder %s189, 255
      %s191 = scalar_select %p190, %s189, 255
      %s192 = smul.addr %s191, 4
      %s193 = scalar_lea.vmem %s0, %s192
      %s194 = smul.u32 64, %s15
      %s195 = smul.u32 64, %s15
      %p196 = scmp.lt.s32.totalorder %s195, 255
      %s197 = scalar_select %p196, %s195, 255
      %s198 = smul.addr %s197, 8
      %s199 = scalar_lea.vmem %s4, %s198
      %s200 = smul.u32 64, %s15
      %v202 = vld [vmem:[%s193] sm:$0xf]
      %v203 = vld [vmem:[%s193 + $0x4] sm:$0xf]
      %v204 = vld [vmem:[%s193 + $0x8] sm:$0xf]
      %v205 = vld [vmem:[%s193 + $0xc] sm:$0xf]
      %v206 = vld [vmem:[%s193 + $0x10] sm:$0xf]
      %v207 = vld [vmem:[%s193 + $0x14] sm:$0xf]
      %v208 = vld [vmem:[%s193 + $0x18] sm:$0xf]
      %v209 = vld [vmem:[%s193 + $0x1c] sm:$0xf]
      %v210 = vld [vmem:[%s193 + $0x20] sm:$0xf]
      %v211 = vld [vmem:[%s193 + $0x24] sm:$0xf]
      %v212 = vld [vmem:[%s193 + $0x28] sm:$0xf]
      %v213 = vld [vmem:[%s193 + $0x2c] sm:$0xf]
      %v214 = vld [vmem:[%s193 + $0x30] sm:$0xf]
      %v215 = vld [vmem:[%s193 + $0x34] sm:$0xf]
      %v216 = vld [vmem:[%s193 + $0x38] sm:$0xf]
      %v217 = vld [vmem:[%s193 + $0x3c] sm:$0xf]
      %v218 = vld [vmem:[%s193 + $0x40] sm:$0xf]
      %v219 = vld [vmem:[%s193 + $0x44] sm:$0xf]
      %v220 = vld [vmem:[%s193 + $0x48] sm:$0xf]
      %v221 = vld [vmem:[%s193 + $0x4c] sm:$0xf]
      %v222 = vld [vmem:[%s193 + $0x50] sm:$0xf]
      %v223 = vld [vmem:[%s193 + $0x54] sm:$0xf]
      %v224 = vld [vmem:[%s193 + $0x58] sm:$0xf]
      %v225 = vld [vmem:[%s193 + $0x5c] sm:$0xf]
      %v226 = vld [vmem:[%s193 + $0x60] sm:$0xf]
      %v227 = vld [vmem:[%s193 + $0x64] sm:$0xf]
      %v228 = vld [vmem:[%s193 + $0x68] sm:$0xf]
      %v229 = vld [vmem:[%s193 + $0x6c] sm:$0xf]
      %v230 = vld [vmem:[%s193 + $0x70] sm:$0xf]
      %v231 = vld [vmem:[%s193 + $0x74] sm:$0xf]
      %v232 = vld [vmem:[%s193 + $0x78] sm:$0xf]
      %v233 = vld [vmem:[%s193 + $0x7c] sm:$0xf]
      %v234 = vld [vmem:[%s193 + $0x80] sm:$0xf]
      %v235 = vld [vmem:[%s193 + $0x84] sm:$0xf]
      %v236 = vld [vmem:[%s193 + $0x88] sm:$0xf]
      %v237 = vld [vmem:[%s193 + $0x8c] sm:$0xf]
      %v238 = vld [vmem:[%s193 + $0x90] sm:$0xf]
      %v239 = vld [vmem:[%s193 + $0x94] sm:$0xf]
      %v240 = vld [vmem:[%s193 + $0x98] sm:$0xf]
      %v241 = vld [vmem:[%s193 + $0x9c] sm:$0xf]
      %v242 = vld [vmem:[%s193 + $0xa0] sm:$0xf]
      %v243 = vld [vmem:[%s193 + $0xa4] sm:$0xf]
      %v244 = vld [vmem:[%s193 + $0xa8] sm:$0xf]
      %v245 = vld [vmem:[%s193 + $0xac] sm:$0xf]
      %v246 = vld [vmem:[%s193 + $0xb0] sm:$0xf]
      %v247 = vld [vmem:[%s193 + $0xb4] sm:$0xf]
      %v248 = vld [vmem:[%s193 + $0xb8] sm:$0xf]
      %v249 = vld [vmem:[%s193 + $0xbc] sm:$0xf]
      %v250 = vld [vmem:[%s193 + $0xc0] sm:$0xf]
      %v251 = vld [vmem:[%s193 + $0xc4] sm:$0xf]
      %v252 = vld [vmem:[%s193 + $0xc8] sm:$0xf]
      %v253 = vld [vmem:[%s193 + $0xcc] sm:$0xf]
      %v254 = vld [vmem:[%s193 + $0xd0] sm:$0xf]
      %v255 = vld [vmem:[%s193 + $0xd4] sm:$0xf]
      %v256 = vld [vmem:[%s193 + $0xd8] sm:$0xf]
      %v257 = vld [vmem:[%s193 + $0xdc] sm:$0xf]
      %v258 = vld [vmem:[%s193 + $0xe0] sm:$0xf]
      %v259 = vld [vmem:[%s193 + $0xe4] sm:$0xf]
      %v260 = vld [vmem:[%s193 + $0xe8] sm:$0xf]
      %v261 = vld [vmem:[%s193 + $0xec] sm:$0xf]
      %v262 = vld [vmem:[%s193 + $0xf0] sm:$0xf]
      %v263 = vld [vmem:[%s193 + $0xf4] sm:$0xf]
      %v264 = vld [vmem:[%s193 + $0xf8] sm:$0xf]
      %v265 = vld [vmem:[%s193 + $0xfc] sm:$0xf]
      %v266 = vld [vmem:[%s1] sm:$0xf]
      %v267 = vld [vmem:[%s1 + $0x4] sm:$0xf]
      %v268 = vld [vmem:[%s1 + $0x8] sm:$0xf]
      %v269 = vld [vmem:[%s1 + $0xc] sm:$0xf]
      %v334 = vunpack.c.l.b16 %v202
      %v335 = vunpack.c.l.b16 %v203
      %v336 = vunpack.c.l.b16 %v204
      %v337 = vunpack.c.l.b16 %v205
      %v338 = vunpack.c.l.b16 %v206
      %v339 = vunpack.c.l.b16 %v207
      %v340 = vunpack.c.l.b16 %v208
      %v341 = vunpack.c.l.b16 %v209
      %v342 = vunpack.c.l.b16 %v210
      %v343 = vunpack.c.l.b16 %v211
      %v344 = vunpack.c.l.b16 %v212
      %v345 = vunpack.c.l.b16 %v213
      %v346 = vunpack.c.l.b16 %v214
      %v347 = vunpack.c.l.b16 %v215
      %v348 = vunpack.c.l.b16 %v216
      %v349 = vunpack.c.l.b16 %v217
      %v350 = vunpack.c.l.b16 %v218
      %v351 = vunpack.c.l.b16 %v219
      %v352 = vunpack.c.l.b16 %v220
      %v353 = vunpack.c.l.b16 %v221
      %v354 = vunpack.c.l.b16 %v222
      %v355 = vunpack.c.l.b16 %v223
      %v356 = vunpack.c.l.b16 %v224
      %v357 = vunpack.c.l.b16 %v225
      %v358 = vunpack.c.l.b16 %v226
      %v359 = vunpack.c.l.b16 %v227
      %v360 = vunpack.c.l.b16 %v228
      %v361 = vunpack.c.l.b16 %v229
      %v362 = vunpack.c.l.b16 %v230
      %v363 = vunpack.c.l.b16 %v231
      %v364 = vunpack.c.l.b16 %v232
      %v365 = vunpack.c.l.b16 %v233
      %v366 = vunpack.c.l.b16 %v234
      %v367 = vunpack.c.l.b16 %v235
      %v368 = vunpack.c.l.b16 %v236
      %v369 = vunpack.c.l.b16 %v237
      %v370 = vunpack.c.l.b16 %v238
      %v371 = vunpack.c.l.b16 %v239
      %v372 = vunpack.c.l.b16 %v240
      %v373 = vunpack.c.l.b16 %v241
      %v374 = vunpack.c.l.b16 %v242
      %v375 = vunpack.c.l.b16 %v243
      %v376 = vunpack.c.l.b16 %v244
      %v377 = vunpack.c.l.b16 %v245
      %v378 = vunpack.c.l.b16 %v246
      %v379 = vunpack.c.l.b16 %v247
      %v380 = vunpack.c.l.b16 %v248
      %v381 = vunpack.c.l.b16 %v249
      %v382 = vunpack.c.l.b16 %v250
      %v383 = vunpack.c.l.b16 %v251
      %v384 = vunpack.c.l.b16 %v252
      %v385 = vunpack.c.l.b16 %v253
      %v386 = vunpack.c.l.b16 %v254
      %v387 = vunpack.c.l.b16 %v255
      %v388 = vunpack.c.l.b16 %v256
      %v389 = vunpack.c.l.b16 %v257
      %v390 = vunpack.c.l.b16 %v258
      %v391 = vunpack.c.l.b16 %v259
      %v392 = vunpack.c.l.b16 %v260
      %v393 = vunpack.c.l.b16 %v261
      %v394 = vunpack.c.l.b16 %v262
      %v395 = vunpack.c.l.b16 %v263
      %v396 = vunpack.c.l.b16 %v264
      %v397 = vunpack.c.l.b16 %v265
      %v398 = vpack.c.b16 %v335, %v334
      %v399 = vpack.c.b16 %v337, %v336
      %v400 = vpack.c.b16 %v339, %v338
      %v401 = vpack.c.b16 %v341, %v340
      %v402 = vpack.c.b16 %v343, %v342
      %v403 = vpack.c.b16 %v345, %v344
      %v404 = vpack.c.b16 %v347, %v346
      %v405 = vpack.c.b16 %v349, %v348
      %v406 = vpack.c.b16 %v351, %v350
      %v407 = vpack.c.b16 %v353, %v352
      %v408 = vpack.c.b16 %v355, %v354
      %v409 = vpack.c.b16 %v357, %v356
      %v410 = vpack.c.b16 %v359, %v358
      %v411 = vpack.c.b16 %v361, %v360
      %v412 = vpack.c.b16 %v363, %v362
      %v413 = vpack.c.b16 %v365, %v364
      %v414 = vpack.c.b16 %v367, %v366
      %v415 = vpack.c.b16 %v369, %v368
      %v416 = vpack.c.b16 %v371, %v370
      %v417 = vpack.c.b16 %v373, %v372
      %v418 = vpack.c.b16 %v375, %v374
      %v419 = vpack.c.b16 %v377, %v376
      %v420 = vpack.c.b16 %v379, %v378
      %v421 = vpack.c.b16 %v381, %v380
      %v422 = vpack.c.b16 %v383, %v382
      %v423 = vpack.c.b16 %v385, %v384
      %v424 = vpack.c.b16 %v387, %v386
      %v425 = vpack.c.b16 %v389, %v388
      %v426 = vpack.c.b16 %v391, %v390
      %v427 = vpack.c.b16 %v393, %v392
      %v428 = vpack.c.b16 %v395, %v394
      %v429 = vpack.c.b16 %v397, %v396
      %v434 = vunpack.c.l.b16 %v266
      %v435 = vunpack.c.l.b16 %v267
      %v436 = vunpack.c.l.b16 %v268
      %v437 = vunpack.c.l.b16 %v269
      %v438 = vpack.c.b16 %v435, %v434
      %v439 = vpack.c.b16 %v437, %v436
      %vm442 = vcmask 261120
      %v444 = vsel %vm442, %v398, 0
      %v447 = vsel %vm442, %v399, 0
      %v450 = vsel %vm442, %v400, 0
      %v453 = vsel %vm442, %v401, 0
      %v456 = vsel %vm442, %v402, 0
      %v459 = vsel %vm442, %v403, 0
      %v462 = vsel %vm442, %v404, 0
      %v465 = vsel %vm442, %v405, 0
      %v468 = vsel %vm442, %v406, 0
      %v471 = vsel %vm442, %v407, 0
      %v474 = vsel %vm442, %v408, 0
      %v477 = vsel %vm442, %v409, 0
      %v480 = vsel %vm442, %v410, 0
      %v483 = vsel %vm442, %v411, 0
      %v486 = vsel %vm442, %v412, 0
      %v489 = vsel %vm442, %v413, 0
      %v492 = vsel %vm442, %v414, 0
      %v495 = vsel %vm442, %v415, 0
      %v498 = vsel %vm442, %v416, 0
      %v501 = vsel %vm442, %v417, 0
      %v504 = vsel %vm442, %v418, 0
      %v507 = vsel %vm442, %v419, 0
      %v510 = vsel %vm442, %v420, 0
      %v513 = vsel %vm442, %v421, 0
      %v516 = vsel %vm442, %v422, 0
      %v519 = vsel %vm442, %v423, 0
      %v522 = vsel %vm442, %v424, 0
      %v525 = vsel %vm442, %v425, 0
      %v528 = vsel %vm442, %v426, 0
      %v531 = vsel %vm442, %v427, 0
      %v534 = vsel %vm442, %v428, 0
      %v537 = vsel %vm442, %v429, 0
      %539 = vmatprep.subr.bf16.mxu0 0
      %540 = vmatpush1.bf16.msra.mxu0 %v438
      %541 = vmatprep.subr.bf16.mxu0 0
      %542 = vmatpush1.bf16.msra.mxu0 %v439
      %543 = vmatprep.subr.bf16.mxu0 0
      %544 = vmatpush1.bf16.msra.mxu0 0
      %545 = vmatprep.subr.bf16.mxu0 0
      %546 = vmatpush1.bf16.msra.mxu0 0
      %547 = vmatprep.subr.bf16.mxu0 0
      %548 = vmatpush1.bf16.msra.mxu0 0
      %549 = vmatprep.subr.bf16.mxu0 0
      %550 = vmatpush1.bf16.msra.mxu0 0
      %551 = vmatprep.subr.bf16.mxu0 0
      %552 = vmatpush1.bf16.msra.mxu0 0
      %553 = vmatprep.subr.bf16.mxu0 0
      %554 = vmatpush1.bf16.msra.mxu0 0
      %555 = vmatprep.subr.bf16.mxu0 0
      %556 = vmatpush1.bf16.msra.mxu0 0
      %557 = vmatprep.subr.bf16.mxu0 0
      %558 = vmatpush1.bf16.msra.mxu0 0
      %559 = vmatprep.subr.bf16.mxu0 0
      %560 = vmatpush1.bf16.msra.mxu0 0
      %561 = vmatprep.subr.bf16.mxu0 0
      %562 = vmatpush1.bf16.msra.mxu0 0
      %563 = vmatprep.subr.bf16.mxu0 0
      %564 = vmatpush1.bf16.msra.mxu0 0
      %565 = vmatprep.subr.bf16.mxu0 0
      %566 = vmatpush1.bf16.msra.mxu0 0
      %567 = vmatprep.subr.bf16.mxu0 0
      %568 = vmatpush1.bf16.msra.mxu0 0
      %569 = vmatprep.subr.bf16.mxu0 0
      %570 = vmatpush1.bf16.msra.mxu0 0
      %571 = vmatprep.mubr.bf16.mxu0 0
      %572 = vmatmul.mubr.bf16.gmra.mrb[0].mxu0 %v444
      %v573 = vpop.f32.mrb[0].mxu0
      %v574 = vadd.f32 0.0, %v573
      %v575 = vpop.f32.mrb[0].mxu0
      %v576 = vpop.f32.mrb[0].mxu0
      %v577 = vadd.f32 0.0, %v576
      %v578 = vpop.f32.mrb[0].mxu0
      %579 = vmatprep.mubr.bf16.mxu0 0
      %580 = vmatmul.mubr.bf16.gmra.mrb[0].mxu0 %v447
      %v581 = vpop.f32.mrb[0].mxu0
      %v582 = vadd.f32 0.0, %v581
      %v583 = vpop.f32.mrb[0].mxu0
      %v584 = vpop.f32.mrb[0].mxu0
      %v585 = vadd.f32 0.0, %v584
      %v586 = vpop.f32.mrb[0].mxu0
      %587 = vmatprep.mubr.bf16.mxu0 0
      %588 = vmatmul.mubr.bf16.gmra.mrb[0].mxu0 %v450
      %v589 = vpop.f32.mrb[0].mxu0
      %v590 = vadd.f32 0.0, %v589
      %v591 = vpop.f32.mrb[0].mxu0
      %v592 = vpop.f32.mrb[0].mxu0
      %v593 = vadd.f32 0.0, %v592
      %v594 = vpop.f32.mrb[0].mxu0
      %595 = vmatprep.mubr.bf16.mxu0 0
      %596 = vmatmul.mubr.bf16.gmra.mrb[0].mxu0 %v453
      %v597 = vpop.f32.mrb[0].mxu0
      %v598 = vadd.f32 0.0, %v597
      %v599 = vpop.f32.mrb[0].mxu0
      %v600 = vpop.f32.mrb[0].mxu0
      %v601 = vadd.f32 0.0, %v600
      %v602 = vpop.f32.mrb[0].mxu0
      %603 = vmatprep.mubr.bf16.mxu0 0
      %604 = vmatmul.mubr.bf16.gmra.mrb[0].mxu0 %v456
      %v605 = vpop.f32.mrb[0].mxu0
      %v606 = vadd.f32 0.0, %v605
      %v607 = vpop.f32.mrb[0].mxu0
      %v608 = vpop.f32.mrb[0].mxu0
      %v609 = vadd.f32 0.0, %v608
      %v610 = vpop.f32.mrb[0].mxu0
      %611 = vmatprep.mubr.bf16.mxu0 0
      %612 = vmatmul.mubr.bf16.gmra.mrb[0].mxu0 %v459
      %v613 = vpop.f32.mrb[0].mxu0
      %v614 = vadd.f32 0.0, %v613
      %v615 = vpop.f32.mrb[0].mxu0
      %v616 = vpop.f32.mrb[0].mxu0
      %v617 = vadd.f32 0.0, %v616
      %v618 = vpop.f32.mrb[0].mxu0
      %619 = vmatprep.mubr.bf16.mxu0 0
      %620 = vmatmul.mubr.bf16.gmra.mrb[0].mxu0 %v462
      %v621 = vpop.f32.mrb[0].mxu0
      %v622 = vadd.f32 0.0, %v621
      %v623 = vpop.f32.mrb[0].mxu0
      %v624 = vpop.f32.mrb[0].mxu0
      %v625 = vadd.f32 0.0, %v624
      %v626 = vpop.f32.mrb[0].mxu0
      %627 = vmatprep.mubr.bf16.mxu0 0
      %628 = vmatmul.mubr.bf16.gmra.mrb[0].mxu0 %v465
      %v629 = vpop.f32.mrb[0].mxu0
      %v630 = vadd.f32 0.0, %v629
      %v631 = vpop.f32.mrb[0].mxu0
      %v632 = vpop.f32.mrb[0].mxu0
      %v633 = vadd.f32 0.0, %v632
      %v634 = vpop.f32.mrb[0].mxu0
      %635 = vmatprep.mubr.bf16.mxu0 0
      %636 = vmatmul.mubr.bf16.gmra.mrb[0].mxu0 %v468
      %v637 = vpop.f32.mrb[0].mxu0
      %v638 = vadd.f32 0.0, %v637
      %v639 = vpop.f32.mrb[0].mxu0
      %v640 = vpop.f32.mrb[0].mxu0
      %v641 = vadd.f32 0.0, %v640
      %v642 = vpop.f32.mrb[0].mxu0
      %643 = vmatprep.mubr.bf16.mxu0 0
      %644 = vmatmul.mubr.bf16.gmra.mrb[0].mxu0 %v471
      %v645 = vpop.f32.mrb[0].mxu0
      %v646 = vadd.f32 0.0, %v645
      %v647 = vpop.f32.mrb[0].mxu0
      %v648 = vpop.f32.mrb[0].mxu0
      %v649 = vadd.f32 0.0, %v648
      %v650 = vpop.f32.mrb[0].mxu0
      %651 = vmatprep.mubr.bf16.mxu0 0
      %652 = vmatmul.mubr.bf16.gmra.mrb[0].mxu0 %v474
      %v653 = vpop.f32.mrb[0].mxu0
      %v654 = vadd.f32 0.0, %v653
      %v655 = vpop.f32.mrb[0].mxu0
      %v656 = vpop.f32.mrb[0].mxu0
      %v657 = vadd.f32 0.0, %v656
      %v658 = vpop.f32.mrb[0].mxu0
      %659 = vmatprep.mubr.bf16.mxu0 0
      %660 = vmatmul.mubr.bf16.gmra.mrb[0].mxu0 %v477
      %v661 = vpop.f32.mrb[0].mxu0
      %v662 = vadd.f32 0.0, %v661
      %v663 = vpop.f32.mrb[0].mxu0
      %v664 = vpop.f32.mrb[0].mxu0
      %v665 = vadd.f32 0.0, %v664
      %v666 = vpop.f32.mrb[0].mxu0
      %667 = vmatprep.mubr.bf16.mxu0 0
      %668 = vmatmul.mubr.bf16.gmra.mrb[0].mxu0 %v480
      %v669 = vpop.f32.mrb[0].mxu0
      %v670 = vadd.f32 0.0, %v669
      %v671 = vpop.f32.mrb[0].mxu0
      %v672 = vpop.f32.mrb[0].mxu0
      %v673 = vadd.f32 0.0, %v672
      %v674 = vpop.f32.mrb[0].mxu0
      %675 = vmatprep.mubr.bf16.mxu0 0
      %676 = vmatmul.mubr.bf16.gmra.mrb[0].mxu0 %v483
      %v677 = vpop.f32.mrb[0].mxu0
      %v678 = vadd.f32 0.0, %v677
      %v679 = vpop.f32.mrb[0].mxu0
      %v680 = vpop.f32.mrb[0].mxu0
      %v681 = vadd.f32 0.0, %v680
      %v682 = vpop.f32.mrb[0].mxu0
      %683 = vmatprep.mubr.bf16.mxu0 0
      %684 = vmatmul.mubr.bf16.gmra.mrb[0].mxu0 %v486
      %v685 = vpop.f32.mrb[0].mxu0
      %v686 = vadd.f32 0.0, %v685
      %v687 = vpop.f32.mrb[0].mxu0
      %v688 = vpop.f32.mrb[0].mxu0
      %v689 = vadd.f32 0.0, %v688
      %v690 = vpop.f32.mrb[0].mxu0
      %691 = vmatprep.mubr.bf16.mxu0 0
      %692 = vmatmul.mubr.bf16.gmra.mrb[0].mxu0 %v489
      %v693 = vpop.f32.mrb[0].mxu0
      %v694 = vadd.f32 0.0, %v693
      %v695 = vpop.f32.mrb[0].mxu0
      %v696 = vpop.f32.mrb[0].mxu0
      %v697 = vadd.f32 0.0, %v696
      %v698 = vpop.f32.mrb[0].mxu0
      %699 = vmatprep.mubr.bf16.mxu0 0
      %700 = vmatmul.mubr.bf16.gmra.mrb[0].mxu0 %v492
      %v701 = vpop.f32.mrb[0].mxu0
      %v702 = vadd.f32 0.0, %v701
      %v703 = vpop.f32.mrb[0].mxu0
      %v704 = vpop.f32.mrb[0].mxu0
      %v705 = vadd.f32 0.0, %v704
      %v706 = vpop.f32.mrb[0].mxu0
      %707 = vmatprep.mubr.bf16.mxu0 0
      %708 = vmatmul.mubr.bf16.gmra.mrb[0].mxu0 %v495
      %v709 = vpop.f32.mrb[0].mxu0
      %v710 = vadd.f32 0.0, %v709
      %v711 = vpop.f32.mrb[0].mxu0
      %v712 = vpop.f32.mrb[0].mxu0
      %v713 = vadd.f32 0.0, %v712
      %v714 = vpop.f32.mrb[0].mxu0
      %715 = vmatprep.mubr.bf16.mxu0 0
      %716 = vmatmul.mubr.bf16.gmra.mrb[0].mxu0 %v498
      %v717 = vpop.f32.mrb[0].mxu0
      %v718 = vadd.f32 0.0, %v717
      %v719 = vpop.f32.mrb[0].mxu0
      %v720 = vpop.f32.mrb[0].mxu0
      %v721 = vadd.f32 0.0, %v720
      %v722 = vpop.f32.mrb[0].mxu0
      %723 = vmatprep.mubr.bf16.mxu0 0
      %724 = vmatmul.mubr.bf16.gmra.mrb[0].mxu0 %v501
      %v725 = vpop.f32.mrb[0].mxu0
      %v726 = vadd.f32 0.0, %v725
      %v727 = vpop.f32.mrb[0].mxu0
      %v728 = vpop.f32.mrb[0].mxu0
      %v729 = vadd.f32 0.0, %v728
      %v730 = vpop.f32.mrb[0].mxu0
      %731 = vmatprep.mubr.bf16.mxu0 0
      %732 = vmatmul.mubr.bf16.gmra.mrb[0].mxu0 %v504
      %v733 = vpop.f32.mrb[0].mxu0
      %v734 = vadd.f32 0.0, %v733
      %v735 = vpop.f32.mrb[0].mxu0
      %v736 = vpop.f32.mrb[0].mxu0
      %v737 = vadd.f32 0.0, %v736
      %v738 = vpop.f32.mrb[0].mxu0
      %739 = vmatprep.mubr.bf16.mxu0 0
      %740 = vmatmul.mubr.bf16.gmra.mrb[0].mxu0 %v507
      %v741 = vpop.f32.mrb[0].mxu0
      %v742 = vadd.f32 0.0, %v741
      %v743 = vpop.f32.mrb[0].mxu0
      %v744 = vpop.f32.mrb[0].mxu0
      %v745 = vadd.f32 0.0, %v744
      %v746 = vpop.f32.mrb[0].mxu0
      %747 = vmatprep.mubr.bf16.mxu0 0
      %748 = vmatmul.mubr.bf16.gmra.mrb[0].mxu0 %v510
      %v749 = vpop.f32.mrb[0].mxu0
      %v750 = vadd.f32 0.0, %v749
      %v751 = vpop.f32.mrb[0].mxu0
      %v752 = vpop.f32.mrb[0].mxu0
      %v753 = vadd.f32 0.0, %v752
      %v754 = vpop.f32.mrb[0].mxu0
      %755 = vmatprep.mubr.bf16.mxu0 0
      %756 = vmatmul.mubr.bf16.gmra.mrb[0].mxu0 %v513
      %v757 = vpop.f32.mrb[0].mxu0
      %v758 = vadd.f32 0.0, %v757
      %v759 = vpop.f32.mrb[0].mxu0
      %v760 = vpop.f32.mrb[0].mxu0
      %v761 = vadd.f32 0.0, %v760
      %v762 = vpop.f32.mrb[0].mxu0
      %763 = vmatprep.mubr.bf16.mxu0 0
      %764 = vmatmul.mubr.bf16.gmra.mrb[0].mxu0 %v516
      %v765 = vpop.f32.mrb[0].mxu0
      %v766 = vadd.f32 0.0, %v765
      %v767 = vpop.f32.mrb[0].mxu0
      %v768 = vpop.f32.mrb[0].mxu0
      %v769 = vadd.f32 0.0, %v768
      %v770 = vpop.f32.mrb[0].mxu0
      %771 = vmatprep.mubr.bf16.mxu0 0
      %772 = vmatmul.mubr.bf16.gmra.mrb[0].mxu0 %v519
      %v773 = vpop.f32.mrb[0].mxu0
      %v774 = vadd.f32 0.0, %v773
      %v775 = vpop.f32.mrb[0].mxu0
      %v776 = vpop.f32.mrb[0].mxu0
      %v777 = vadd.f32 0.0, %v776
      %v778 = vpop.f32.mrb[0].mxu0
      %779 = vmatprep.mubr.bf16.mxu0 0
      %780 = vmatmul.mubr.bf16.gmra.mrb[0].mxu0 %v522
      %v781 = vpop.f32.mrb[0].mxu0
      %v782 = vadd.f32 0.0, %v781
      %v783 = vpop.f32.mrb[0].mxu0
      %v784 = vpop.f32.mrb[0].mxu0
      %v785 = vadd.f32 0.0, %v784
      %v786 = vpop.f32.mrb[0].mxu0
      %787 = vmatprep.mubr.bf16.mxu0 0
      %788 = vmatmul.mubr.bf16.gmra.mrb[0].mxu0 %v525
      %v789 = vpop.f32.mrb[0].mxu0
      %v790 = vadd.f32 0.0, %v789
      %v791 = vpop.f32.mrb[0].mxu0
      %v792 = vpop.f32.mrb[0].mxu0
      %v793 = vadd.f32 0.0, %v792
      %v794 = vpop.f32.mrb[0].mxu0
      %795 = vmatprep.mubr.bf16.mxu0 0
      %796 = vmatmul.mubr.bf16.gmra.mrb[0].mxu0 %v528
      %v797 = vpop.f32.mrb[0].mxu0
      %v798 = vadd.f32 0.0, %v797
      %v799 = vpop.f32.mrb[0].mxu0
      %v800 = vpop.f32.mrb[0].mxu0
      %v801 = vadd.f32 0.0, %v800
      %v802 = vpop.f32.mrb[0].mxu0
      %803 = vmatprep.mubr.bf16.mxu0 0
      %804 = vmatmul.mubr.bf16.gmra.mrb[0].mxu0 %v531
      %v805 = vpop.f32.mrb[0].mxu0
      %v806 = vadd.f32 0.0, %v805
      %v807 = vpop.f32.mrb[0].mxu0
      %v808 = vpop.f32.mrb[0].mxu0
      %v809 = vadd.f32 0.0, %v808
      %v810 = vpop.f32.mrb[0].mxu0
      %811 = vmatprep.mubr.bf16.mxu0 0
      %812 = vmatmul.mubr.bf16.gmra.mrb[0].mxu0 %v534
      %v813 = vpop.f32.mrb[0].mxu0
      %v814 = vadd.f32 0.0, %v813
      %v815 = vpop.f32.mrb[0].mxu0
      %v816 = vpop.f32.mrb[0].mxu0
      %v817 = vadd.f32 0.0, %v816
      %v818 = vpop.f32.mrb[0].mxu0
      %819 = vmatprep.mubr.bf16.mxu0 0
      %820 = vmatmul.mubr.bf16.gmra.mrb[0].mxu0 %v537
      %v821 = vpop.f32.mrb[0].mxu0
      %v822 = vadd.f32 0.0, %v821
      %v823 = vpop.f32.mrb[0].mxu0
      %v824 = vpop.f32.mrb[0].mxu0
      %v825 = vadd.f32 0.0, %v824
      %v826 = vpop.f32.mrb[0].mxu0
      %827 = vdwg.mxu0
      %v828 = vld [vmem:[%s2] sm:$0x1]
      %v830 = vlaneseq
      %v831 = vshrl.u32 %v830, 7
      %v832 = vsub.s32 0, %v831
      %v833 = vrot.slane %v828, %v832
      %v835 = vmul.f32 %v574, %v833
      %v836 = vmul.f32 %v577, %v833
      %v837 = vmul.f32 %v582, %v833
      %v838 = vmul.f32 %v585, %v833
      %v839 = vmul.f32 %v590, %v833
      %v840 = vmul.f32 %v593, %v833
      %v841 = vmul.f32 %v598, %v833
      %v842 = vmul.f32 %v601, %v833
      %v843 = vmul.f32 %v606, %v833
      %v844 = vmul.f32 %v609, %v833
      %v845 = vmul.f32 %v614, %v833
      %v846 = vmul.f32 %v617, %v833
      %v847 = vmul.f32 %v622, %v833
      %v848 = vmul.f32 %v625, %v833
      %v849 = vmul.f32 %v630, %v833
      %v850 = vmul.f32 %v633, %v833
      %v851 = vmul.f32 %v638, %v833
      %v852 = vmul.f32 %v641, %v833
      %v853 = vmul.f32 %v646, %v833
      %v854 = vmul.f32 %v649, %v833
      %v855 = vmul.f32 %v654, %v833
      %v856 = vmul.f32 %v657, %v833
      %v857 = vmul.f32 %v662, %v833
      %v858 = vmul.f32 %v665, %v833
      %v859 = vmul.f32 %v670, %v833
      %v860 = vmul.f32 %v673, %v833
      %v861 = vmul.f32 %v678, %v833
      %v862 = vmul.f32 %v681, %v833
      %v863 = vmul.f32 %v686, %v833
      %v864 = vmul.f32 %v689, %v833
      %v865 = vmul.f32 %v694, %v833
      %v866 = vmul.f32 %v697, %v833
      %v867 = vmul.f32 %v702, %v833
      %v868 = vmul.f32 %v705, %v833
      %v869 = vmul.f32 %v710, %v833
      %v870 = vmul.f32 %v713, %v833
      %v871 = vmul.f32 %v718, %v833
      %v872 = vmul.f32 %v721, %v833
      %v873 = vmul.f32 %v726, %v833
      %v874 = vmul.f32 %v729, %v833
      %v875 = vmul.f32 %v734, %v833
      %v876 = vmul.f32 %v737, %v833
      %v877 = vmul.f32 %v742, %v833
      %v878 = vmul.f32 %v745, %v833
      %v879 = vmul.f32 %v750, %v833
      %v880 = vmul.f32 %v753, %v833
      %v881 = vmul.f32 %v758, %v833
      %v882 = vmul.f32 %v761, %v833
      %v883 = vmul.f32 %v766, %v833
      %v884 = vmul.f32 %v769, %v833
      %v885 = vmul.f32 %v774, %v833
      %v886 = vmul.f32 %v777, %v833
      %v887 = vmul.f32 %v782, %v833
      %v888 = vmul.f32 %v785, %v833
      %v889 = vmul.f32 %v790, %v833
      %v890 = vmul.f32 %v793, %v833
      %v891 = vmul.f32 %v798, %v833
      %v892 = vmul.f32 %v801, %v833
      %v893 = vmul.f32 %v806, %v833
      %v894 = vmul.f32 %v809, %v833
      %v895 = vmul.f32 %v814, %v833
      %v896 = vmul.f32 %v817, %v833
      %v897 = vmul.f32 %v822, %v833
      %v898 = vmul.f32 %v825, %v833
      %v899 = vld [vmem:[%s3] sm:$0x1]
      %v901 = vlaneseq
      %v902 = vshrl.u32 %v901, 7
      %v903 = vsub.s32 0, %v902
      %v904 = vrot.slane %v899, %v903
      %v906 = vadd.f32 %v835, %v904
      %v907 = vadd.f32 %v836, %v904
      %v908 = vadd.f32 %v837, %v904
      %v909 = vadd.f32 %v838, %v904
      %v910 = vadd.f32 %v839, %v904
      %v911 = vadd.f32 %v840, %v904
      %v912 = vadd.f32 %v841, %v904
      %v913 = vadd.f32 %v842, %v904
      %v914 = vadd.f32 %v843, %v904
      %v915 = vadd.f32 %v844, %v904
      %v916 = vadd.f32 %v845, %v904
      %v917 = vadd.f32 %v846, %v904
      %v918 = vadd.f32 %v847, %v904
      %v919 = vadd.f32 %v848, %v904
      %v920 = vadd.f32 %v849, %v904
      %v921 = vadd.f32 %v850, %v904
      %v922 = vadd.f32 %v851, %v904
      %v923 = vadd.f32 %v852, %v904
      %v924 = vadd.f32 %v853, %v904
      %v925 = vadd.f32 %v854, %v904
      %v926 = vadd.f32 %v855, %v904
      %v927 = vadd.f32 %v856, %v904
      %v928 = vadd.f32 %v857, %v904
      %v929 = vadd.f32 %v858, %v904
      %v930 = vadd.f32 %v859, %v904
      %v931 = vadd.f32 %v860, %v904
      %v932 = vadd.f32 %v861, %v904
      %v933 = vadd.f32 %v862, %v904
      %v934 = vadd.f32 %v863, %v904
      %v935 = vadd.f32 %v864, %v904
      %v936 = vadd.f32 %v865, %v904
      %v937 = vadd.f32 %v866, %v904
      %v938 = vadd.f32 %v867, %v904
      %v939 = vadd.f32 %v868, %v904
      %v940 = vadd.f32 %v869, %v904
      %v941 = vadd.f32 %v870, %v904
      %v942 = vadd.f32 %v871, %v904
      %v943 = vadd.f32 %v872, %v904
      %v944 = vadd.f32 %v873, %v904
      %v945 = vadd.f32 %v874, %v904
      %v946 = vadd.f32 %v875, %v904
      %v947 = vadd.f32 %v876, %v904
      %v948 = vadd.f32 %v877, %v904
      %v949 = vadd.f32 %v878, %v904
      %v950 = vadd.f32 %v879, %v904
      %v951 = vadd.f32 %v880, %v904
      %v952 = vadd.f32 %v881, %v904
      %v953 = vadd.f32 %v882, %v904
      %v954 = vadd.f32 %v883, %v904
      %v955 = vadd.f32 %v884, %v904
      %v956 = vadd.f32 %v885, %v904
      %v957 = vadd.f32 %v886, %v904
      %v958 = vadd.f32 %v887, %v904
      %v959 = vadd.f32 %v888, %v904
      %v960 = vadd.f32 %v889, %v904
      %v961 = vadd.f32 %v890, %v904
      %v962 = vadd.f32 %v891, %v904
      %v963 = vadd.f32 %v892, %v904
      %v964 = vadd.f32 %v893, %v904
      %v965 = vadd.f32 %v894, %v904
      %v966 = vadd.f32 %v895, %v904
      %v967 = vadd.f32 %v896, %v904
      %v968 = vadd.f32 %v897, %v904
      %v969 = vadd.f32 %v898, %v904
      %v970 = vxor.u32 %v906, 2147483648
      %v971 = vxor.u32 %v907, 2147483648
      %v972 = vxor.u32 %v908, 2147483648
      %v973 = vxor.u32 %v909, 2147483648
      %v974 = vxor.u32 %v910, 2147483648
      %v975 = vxor.u32 %v911, 2147483648
      %v976 = vxor.u32 %v912, 2147483648
      %v977 = vxor.u32 %v913, 2147483648
      %v978 = vxor.u32 %v914, 2147483648
      %v979 = vxor.u32 %v915, 2147483648
      %v980 = vxor.u32 %v916, 2147483648
      %v981 = vxor.u32 %v917, 2147483648
      %v982 = vxor.u32 %v918, 2147483648
      %v983 = vxor.u32 %v919, 2147483648
      %v984 = vxor.u32 %v920, 2147483648
      %v985 = vxor.u32 %v921, 2147483648
      %v986 = vxor.u32 %v922, 2147483648
      %v987 = vxor.u32 %v923, 2147483648
      %v988 = vxor.u32 %v924, 2147483648
      %v989 = vxor.u32 %v925, 2147483648
      %v990 = vxor.u32 %v926, 2147483648
      %v991 = vxor.u32 %v927, 2147483648
      %v992 = vxor.u32 %v928, 2147483648
      %v993 = vxor.u32 %v929, 2147483648
      %v994 = vxor.u32 %v930, 2147483648
      %v995 = vxor.u32 %v931, 2147483648
      %v996 = vxor.u32 %v932, 2147483648
      %v997 = vxor.u32 %v933, 2147483648
      %v998 = vxor.u32 %v934, 2147483648
      %v999 = vxor.u32 %v935, 2147483648
      %v1000 = vxor.u32 %v936, 2147483648
      %v1001 = vxor.u32 %v937, 2147483648
      %v1002 = vxor.u32 %v938, 2147483648
      %v1003 = vxor.u32 %v939, 2147483648
      %v1004 = vxor.u32 %v940, 2147483648
      %v1005 = vxor.u32 %v941, 2147483648
      %v1006 = vxor.u32 %v942, 2147483648
      %v1007 = vxor.u32 %v943, 2147483648
      %v1008 = vxor.u32 %v944, 2147483648
      %v1009 = vxor.u32 %v945, 2147483648
      %v1010 = vxor.u32 %v946, 2147483648
      %v1011 = vxor.u32 %v947, 2147483648
      %v1012 = vxor.u32 %v948, 2147483648
      %v1013 = vxor.u32 %v949, 2147483648
      %v1014 = vxor.u32 %v950, 2147483648
      %v1015 = vxor.u32 %v951, 2147483648
      %v1016 = vxor.u32 %v952, 2147483648
      %v1017 = vxor.u32 %v953, 2147483648
      %v1018 = vxor.u32 %v954, 2147483648
      %v1019 = vxor.u32 %v955, 2147483648
      %v1020 = vxor.u32 %v956, 2147483648
      %v1021 = vxor.u32 %v957, 2147483648
      %v1022 = vxor.u32 %v958, 2147483648
      %v1023 = vxor.u32 %v959, 2147483648
      %v1024 = vxor.u32 %v960, 2147483648
      %v1025 = vxor.u32 %v961, 2147483648
      %v1026 = vxor.u32 %v962, 2147483648
      %v1027 = vxor.u32 %v963, 2147483648
      %v1028 = vxor.u32 %v964, 2147483648
      %v1029 = vxor.u32 %v965, 2147483648
      %v1030 = vxor.u32 %v966, 2147483648
      %v1031 = vxor.u32 %v967, 2147483648
      %v1032 = vxor.u32 %v968, 2147483648
      %v1033 = vxor.u32 %v969, 2147483648
      %v1034 = vmul.f32 %v970, 1.442695
      %v1035 = vpow.pop %v1034
      %v1036 = vmul.f32 %v971, 1.442695
      %v1037 = vpow.pop %v1036
      %v1038 = vmul.f32 %v972, 1.442695
      %v1039 = vpow.pop %v1038
      %v1040 = vmul.f32 %v973, 1.442695
      %v1041 = vpow.pop %v1040
      %v1042 = vmul.f32 %v974, 1.442695
      %v1043 = vpow.pop %v1042
      %v1044 = vmul.f32 %v975, 1.442695
      %v1045 = vpow.pop %v1044
      %v1046 = vmul.f32 %v976, 1.442695
      %v1047 = vpow.pop %v1046
      %v1048 = vmul.f32 %v977, 1.442695
      %v1049 = vpow.pop %v1048
      %v1050 = vmul.f32 %v978, 1.442695
      %v1051 = vpow.pop %v1050
      %v1052 = vmul.f32 %v979, 1.442695
      %v1053 = vpow.pop %v1052
      %v1054 = vmul.f32 %v980, 1.442695
      %v1055 = vpow.pop %v1054
      %v1056 = vmul.f32 %v981, 1.442695
      %v1057 = vpow.pop %v1056
      %v1058 = vmul.f32 %v982, 1.442695
      %v1059 = vpow.pop %v1058
      %v1060 = vmul.f32 %v983, 1.442695
      %v1061 = vpow.pop %v1060
      %v1062 = vmul.f32 %v984, 1.442695
      %v1063 = vpow.pop %v1062
      %v1064 = vmul.f32 %v985, 1.442695
      %v1065 = vpow.pop %v1064
      %v1066 = vmul.f32 %v986, 1.442695
      %v1067 = vpow.pop %v1066
      %v1068 = vmul.f32 %v987, 1.442695
      %v1069 = vpow.pop %v1068
      %v1070 = vmul.f32 %v988, 1.442695
      %v1071 = vpow.pop %v1070
      %v1072 = vmul.f32 %v989, 1.442695
      %v1073 = vpow.pop %v1072
      %v1074 = vmul.f32 %v990, 1.442695
      %v1075 = vpow.pop %v1074
      %v1076 = vmul.f32 %v991, 1.442695
      %v1077 = vpow.pop %v1076
      %v1078 = vmul.f32 %v992, 1.442695
      %v1079 = vpow.pop %v1078
      %v1080 = vmul.f32 %v993, 1.442695
      %v1081 = vpow.pop %v1080
      %v1082 = vmul.f32 %v994, 1.442695
      %v1083 = vpow.pop %v1082
      %v1084 = vmul.f32 %v995, 1.442695
      %v1085 = vpow.pop %v1084
      %v1086 = vmul.f32 %v996, 1.442695
      %v1087 = vpow.pop %v1086
      %v1088 = vmul.f32 %v997, 1.442695
      %v1089 = vpow.pop %v1088
      %v1090 = vmul.f32 %v998, 1.442695
      %v1091 = vpow.pop %v1090
      %v1092 = vmul.f32 %v999, 1.442695
      %v1093 = vpow.pop %v1092
      %v1094 = vmul.f32 %v1000, 1.442695
      %v1095 = vpow.pop %v1094
      %v1096 = vmul.f32 %v1001, 1.442695
      %v1097 = vpow.pop %v1096
      %v1098 = vmul.f32 %v1002, 1.442695
      %v1099 = vpow.pop %v1098
      %v1100 = vmul.f32 %v1003, 1.442695
      %v1101 = vpow.pop %v1100
      %v1102 = vmul.f32 %v1004, 1.442695
      %v1103 = vpow.pop %v1102
      %v1104 = vmul.f32 %v1005, 1.442695
      %v1105 = vpow.pop %v1104
      %v1106 = vmul.f32 %v1006, 1.442695
      %v1107 = vpow.pop %v1106
      %v1108 = vmul.f32 %v1007, 1.442695
      %v1109 = vpow.pop %v1108
      %v1110 = vmul.f32 %v1008, 1.442695
      %v1111 = vpow.pop %v1110
      %v1112 = vmul.f32 %v1009, 1.442695
      %v1113 = vpow.pop %v1112
      %v1114 = vmul.f32 %v1010, 1.442695
      %v1115 = vpow.pop %v1114
      %v1116 = vmul.f32 %v1011, 1.442695
      %v1117 = vpow.pop %v1116
      %v1118 = vmul.f32 %v1012, 1.442695
      %v1119 = vpow.pop %v1118
      %v1120 = vmul.f32 %v1013, 1.442695
      %v1121 = vpow.pop %v1120
      %v1122 = vmul.f32 %v1014, 1.442695
      %v1123 = vpow.pop %v1122
      %v1124 = vmul.f32 %v1015, 1.442695
      %v1125 = vpow.pop %v1124
      %v1126 = vmul.f32 %v1016, 1.442695
      %v1127 = vpow.pop %v1126
      %v1128 = vmul.f32 %v1017, 1.442695
      %v1129 = vpow.pop %v1128
      %v1130 = vmul.f32 %v1018, 1.442695
      %v1131 = vpow.pop %v1130
      %v1132 = vmul.f32 %v1019, 1.442695
      %v1133 = vpow.pop %v1132
      %v1134 = vmul.f32 %v1020, 1.442695
      %v1135 = vpow.pop %v1134
      %v1136 = vmul.f32 %v1021, 1.442695
      %v1137 = vpow.pop %v1136
      %v1138 = vmul.f32 %v1022, 1.442695
      %v1139 = vpow.pop %v1138
      %v1140 = vmul.f32 %v1023, 1.442695
      %v1141 = vpow.pop %v1140
      %v1142 = vmul.f32 %v1024, 1.442695
      %v1143 = vpow.pop %v1142
      %v1144 = vmul.f32 %v1025, 1.442695
      %v1145 = vpow.pop %v1144
      %v1146 = vmul.f32 %v1026, 1.442695
      %v1147 = vpow.pop %v1146
      %v1148 = vmul.f32 %v1027, 1.442695
      %v1149 = vpow.pop %v1148
      %v1150 = vmul.f32 %v1028, 1.442695
      %v1151 = vpow.pop %v1150
      %v1152 = vmul.f32 %v1029, 1.442695
      %v1153 = vpow.pop %v1152
      %v1154 = vmul.f32 %v1030, 1.442695
      %v1155 = vpow.pop %v1154
      %v1156 = vmul.f32 %v1031, 1.442695
      %v1157 = vpow.pop %v1156
      %v1158 = vmul.f32 %v1032, 1.442695
      %v1159 = vpow.pop %v1158
      %v1160 = vmul.f32 %v1033, 1.442695
      %v1161 = vpow.pop %v1160
      %v1162 = vadd.f32 %v1035, 1.0
      %v1163 = vadd.f32 %v1037, 1.0
      %v1164 = vadd.f32 %v1039, 1.0
      %v1165 = vadd.f32 %v1041, 1.0
      %v1166 = vadd.f32 %v1043, 1.0
      %v1167 = vadd.f32 %v1045, 1.0
      %v1168 = vadd.f32 %v1047, 1.0
      %v1169 = vadd.f32 %v1049, 1.0
      %v1170 = vadd.f32 %v1051, 1.0
      %v1171 = vadd.f32 %v1053, 1.0
      %v1172 = vadd.f32 %v1055, 1.0
      %v1173 = vadd.f32 %v1057, 1.0
      %v1174 = vadd.f32 %v1059, 1.0
      %v1175 = vadd.f32 %v1061, 1.0
      %v1176 = vadd.f32 %v1063, 1.0
      %v1177 = vadd.f32 %v1065, 1.0
      %v1178 = vadd.f32 %v1067, 1.0
      %v1179 = vadd.f32 %v1069, 1.0
      %v1180 = vadd.f32 %v1071, 1.0
      %v1181 = vadd.f32 %v1073, 1.0
      %v1182 = vadd.f32 %v1075, 1.0
      %v1183 = vadd.f32 %v1077, 1.0
      %v1184 = vadd.f32 %v1079, 1.0
      %v1185 = vadd.f32 %v1081, 1.0
      %v1186 = vadd.f32 %v1083, 1.0
      %v1187 = vadd.f32 %v1085, 1.0
      %v1188 = vadd.f32 %v1087, 1.0
      %v1189 = vadd.f32 %v1089, 1.0
      %v1190 = vadd.f32 %v1091, 1.0
      %v1191 = vadd.f32 %v1093, 1.0
      %v1192 = vadd.f32 %v1095, 1.0
      %v1193 = vadd.f32 %v1097, 1.0
      %v1194 = vadd.f32 %v1099, 1.0
      %v1195 = vadd.f32 %v1101, 1.0
      %v1196 = vadd.f32 %v1103, 1.0
      %v1197 = vadd.f32 %v1105, 1.0
      %v1198 = vadd.f32 %v1107, 1.0
      %v1199 = vadd.f32 %v1109, 1.0
      %v1200 = vadd.f32 %v1111, 1.0
      %v1201 = vadd.f32 %v1113, 1.0
      %v1202 = vadd.f32 %v1115, 1.0
      %v1203 = vadd.f32 %v1117, 1.0
      %v1204 = vadd.f32 %v1119, 1.0
      %v1205 = vadd.f32 %v1121, 1.0
      %v1206 = vadd.f32 %v1123, 1.0
      %v1207 = vadd.f32 %v1125, 1.0
      %v1208 = vadd.f32 %v1127, 1.0
      %v1209 = vadd.f32 %v1129, 1.0
      %v1210 = vadd.f32 %v1131, 1.0
      %v1211 = vadd.f32 %v1133, 1.0
      %v1212 = vadd.f32 %v1135, 1.0
      %v1213 = vadd.f32 %v1137, 1.0
      %v1214 = vadd.f32 %v1139, 1.0
      %v1215 = vadd.f32 %v1141, 1.0
      %v1216 = vadd.f32 %v1143, 1.0
      %v1217 = vadd.f32 %v1145, 1.0
      %v1218 = vadd.f32 %v1147, 1.0
      %v1219 = vadd.f32 %v1149, 1.0
      %v1220 = vadd.f32 %v1151, 1.0
      %v1221 = vadd.f32 %v1153, 1.0
      %v1222 = vadd.f32 %v1155, 1.0
      %v1223 = vadd.f32 %v1157, 1.0
      %v1224 = vadd.f32 %v1159, 1.0
      %v1225 = vadd.f32 %v1161, 1.0
      %v1226 = vrcp.pop %v1162
      %v1227 = vmul.f32 1.0, %v1226
      %v1228 = vrcp.pop %v1163
      %v1229 = vmul.f32 1.0, %v1228
      %v1230 = vrcp.pop %v1164
      %v1231 = vmul.f32 1.0, %v1230
      %v1232 = vrcp.pop %v1165
      %v1233 = vmul.f32 1.0, %v1232
      %v1234 = vrcp.pop %v1166
      %v1235 = vmul.f32 1.0, %v1234
      %v1236 = vrcp.pop %v1167
      %v1237 = vmul.f32 1.0, %v1236
      %v1238 = vrcp.pop %v1168
      %v1239 = vmul.f32 1.0, %v1238
      %v1240 = vrcp.pop %v1169
      %v1241 = vmul.f32 1.0, %v1240
      %v1242 = vrcp.pop %v1170
      %v1243 = vmul.f32 1.0, %v1242
      %v1244 = vrcp.pop %v1171
      %v1245 = vmul.f32 1.0, %v1244
      %v1246 = vrcp.pop %v1172
      %v1247 = vmul.f32 1.0, %v1246
      %v1248 = vrcp.pop %v1173
      %v1249 = vmul.f32 1.0, %v1248
      %v1250 = vrcp.pop %v1174
      %v1251 = vmul.f32 1.0, %v1250
      %v1252 = vrcp.pop %v1175
      %v1253 = vmul.f32 1.0, %v1252
      %v1254 = vrcp.pop %v1176
      %v1255 = vmul.f32 1.0, %v1254
      %v1256 = vrcp.pop %v1177
      %v1257 = vmul.f32 1.0, %v1256
      %v1258 = vrcp.pop %v1178
      %v1259 = vmul.f32 1.0, %v1258
      %v1260 = vrcp.pop %v1179
      %v1261 = vmul.f32 1.0, %v1260
      %v1262 = vrcp.pop %v1180
      %v1263 = vmul.f32 1.0, %v1262
      %v1264 = vrcp.pop %v1181
      %v1265 = vmul.f32 1.0, %v1264
      %v1266 = vrcp.pop %v1182
      %v1267 = vmul.f32 1.0, %v1266
      %v1268 = vrcp.pop %v1183
      %v1269 = vmul.f32 1.0, %v1268
      %v1270 = vrcp.pop %v1184
      %v1271 = vmul.f32 1.0, %v1270
      %v1272 = vrcp.pop %v1185
      %v1273 = vmul.f32 1.0, %v1272
      %v1274 = vrcp.pop %v1186
      %v1275 = vmul.f32 1.0, %v1274
      %v1276 = vrcp.pop %v1187
      %v1277 = vmul.f32 1.0, %v1276
      %v1278 = vrcp.pop %v1188
      %v1279 = vmul.f32 1.0, %v1278
      %v1280 = vrcp.pop %v1189
      %v1281 = vmul.f32 1.0, %v1280
      %v1282 = vrcp.pop %v1190
      %v1283 = vmul.f32 1.0, %v1282
      %v1284 = vrcp.pop %v1191
      %v1285 = vmul.f32 1.0, %v1284
      %v1286 = vrcp.pop %v1192
      %v1287 = vmul.f32 1.0, %v1286
      %v1288 = vrcp.pop %v1193
      %v1289 = vmul.f32 1.0, %v1288
      %v1290 = vrcp.pop %v1194
      %v1291 = vmul.f32 1.0, %v1290
      %v1292 = vrcp.pop %v1195
      %v1293 = vmul.f32 1.0, %v1292
      %v1294 = vrcp.pop %v1196
      %v1295 = vmul.f32 1.0, %v1294
      %v1296 = vrcp.pop %v1197
      %v1297 = vmul.f32 1.0, %v1296
      %v1298 = vrcp.pop %v1198
      %v1299 = vmul.f32 1.0, %v1298
      %v1300 = vrcp.pop %v1199
      %v1301 = vmul.f32 1.0, %v1300
      %v1302 = vrcp.pop %v1200
      %v1303 = vmul.f32 1.0, %v1302
      %v1304 = vrcp.pop %v1201
      %v1305 = vmul.f32 1.0, %v1304
      %v1306 = vrcp.pop %v1202
      %v1307 = vmul.f32 1.0, %v1306
      %v1308 = vrcp.pop %v1203
      %v1309 = vmul.f32 1.0, %v1308
      %v1310 = vrcp.pop %v1204
      %v1311 = vmul.f32 1.0, %v1310
      %v1312 = vrcp.pop %v1205
      %v1313 = vmul.f32 1.0, %v1312
      %v1314 = vrcp.pop %v1206
      %v1315 = vmul.f32 1.0, %v1314
      %v1316 = vrcp.pop %v1207
      %v1317 = vmul.f32 1.0, %v1316
      %v1318 = vrcp.pop %v1208
      %v1319 = vmul.f32 1.0, %v1318
      %v1320 = vrcp.pop %v1209
      %v1321 = vmul.f32 1.0, %v1320
      %v1322 = vrcp.pop %v1210
      %v1323 = vmul.f32 1.0, %v1322
      %v1324 = vrcp.pop %v1211
      %v1325 = vmul.f32 1.0, %v1324
      %v1326 = vrcp.pop %v1212
      %v1327 = vmul.f32 1.0, %v1326
      %v1328 = vrcp.pop %v1213
      %v1329 = vmul.f32 1.0, %v1328
      %v1330 = vrcp.pop %v1214
      %v1331 = vmul.f32 1.0, %v1330
      %v1332 = vrcp.pop %v1215
      %v1333 = vmul.f32 1.0, %v1332
      %v1334 = vrcp.pop %v1216
      %v1335 = vmul.f32 1.0, %v1334
      %v1336 = vrcp.pop %v1217
      %v1337 = vmul.f32 1.0, %v1336
      %v1338 = vrcp.pop %v1218
      %v1339 = vmul.f32 1.0, %v1338
      %v1340 = vrcp.pop %v1219
      %v1341 = vmul.f32 1.0, %v1340
      %v1342 = vrcp.pop %v1220
      %v1343 = vmul.f32 1.0, %v1342
      %v1344 = vrcp.pop %v1221
      %v1345 = vmul.f32 1.0, %v1344
      %v1346 = vrcp.pop %v1222
      %v1347 = vmul.f32 1.0, %v1346
      %v1348 = vrcp.pop %v1223
      %v1349 = vmul.f32 1.0, %v1348
      %v1350 = vrcp.pop %v1224
      %v1351 = vmul.f32 1.0, %v1350
      %v1352 = vrcp.pop %v1225
      %v1353 = vmul.f32 1.0, %v1352
      %v1354 = vmul.f32 %v906, %v1227
      %v1355 = vmul.f32 %v907, %v1229
      %v1356 = vmul.f32 %v908, %v1231
      %v1357 = vmul.f32 %v909, %v1233
      %v1358 = vmul.f32 %v910, %v1235
      %v1359 = vmul.f32 %v911, %v1237
      %v1360 = vmul.f32 %v912, %v1239
      %v1361 = vmul.f32 %v913, %v1241
      %v1362 = vmul.f32 %v914, %v1243
      %v1363 = vmul.f32 %v915, %v1245
      %v1364 = vmul.f32 %v916, %v1247
      %v1365 = vmul.f32 %v917, %v1249
      %v1366 = vmul.f32 %v918, %v1251
      %v1367 = vmul.f32 %v919, %v1253
      %v1368 = vmul.f32 %v920, %v1255
      %v1369 = vmul.f32 %v921, %v1257
      %v1370 = vmul.f32 %v922, %v1259
      %v1371 = vmul.f32 %v923, %v1261
      %v1372 = vmul.f32 %v924, %v1263
      %v1373 = vmul.f32 %v925, %v1265
      %v1374 = vmul.f32 %v926, %v1267
      %v1375 = vmul.f32 %v927, %v1269
      %v1376 = vmul.f32 %v928, %v1271
      %v1377 = vmul.f32 %v929, %v1273
      %v1378 = vmul.f32 %v930, %v1275
      %v1379 = vmul.f32 %v931, %v1277
      %v1380 = vmul.f32 %v932, %v1279
      %v1381 = vmul.f32 %v933, %v1281
      %v1382 = vmul.f32 %v934, %v1283
      %v1383 = vmul.f32 %v935, %v1285
      %v1384 = vmul.f32 %v936, %v1287
      %v1385 = vmul.f32 %v937, %v1289
      %v1386 = vmul.f32 %v938, %v1291
      %v1387 = vmul.f32 %v939, %v1293
      %v1388 = vmul.f32 %v940, %v1295
      %v1389 = vmul.f32 %v941, %v1297
      %v1390 = vmul.f32 %v942, %v1299
      %v1391 = vmul.f32 %v943, %v1301
      %v1392 = vmul.f32 %v944, %v1303
      %v1393 = vmul.f32 %v945, %v1305
      %v1394 = vmul.f32 %v946, %v1307
      %v1395 = vmul.f32 %v947, %v1309
      %v1396 = vmul.f32 %v948, %v1311
      %v1397 = vmul.f32 %v949, %v1313
      %v1398 = vmul.f32 %v950, %v1315
      %v1399 = vmul.f32 %v951, %v1317
      %v1400 = vmul.f32 %v952, %v1319
      %v1401 = vmul.f32 %v953, %v1321
      %v1402 = vmul.f32 %v954, %v1323
      %v1403 = vmul.f32 %v955, %v1325
      %v1404 = vmul.f32 %v956, %v1327
      %v1405 = vmul.f32 %v957, %v1329
      %v1406 = vmul.f32 %v958, %v1331
      %v1407 = vmul.f32 %v959, %v1333
      %v1408 = vmul.f32 %v960, %v1335
      %v1409 = vmul.f32 %v961, %v1337
      %v1410 = vmul.f32 %v962, %v1339
      %v1411 = vmul.f32 %v963, %v1341
      %v1412 = vmul.f32 %v964, %v1343
      %v1413 = vmul.f32 %v965, %v1345
      %v1414 = vmul.f32 %v966, %v1347
      %v1415 = vmul.f32 %v967, %v1349
      %v1416 = vmul.f32 %v968, %v1351
      %v1417 = vmul.f32 %v969, %v1353
      %vm1418 = vcmask 130048
      %1419 = vst.msk [vmem:[%s199] sm:$0xff] %vm1418, %v1354
      %1420 = vst.msk [vmem:[%s199 + $0x8] sm:$0xff] %vm1418, %v1355
      %1421 = vst.msk [vmem:[%s199 + $0x10] sm:$0xff] %vm1418, %v1356
      %1422 = vst.msk [vmem:[%s199 + $0x18] sm:$0xff] %vm1418, %v1357
      %1423 = vst.msk [vmem:[%s199 + $0x20] sm:$0xff] %vm1418, %v1358
      %1424 = vst.msk [vmem:[%s199 + $0x28] sm:$0xff] %vm1418, %v1359
      %1425 = vst.msk [vmem:[%s199 + $0x30] sm:$0xff] %vm1418, %v1360
      %1426 = vst.msk [vmem:[%s199 + $0x38] sm:$0xff] %vm1418, %v1361
      %1427 = vst.msk [vmem:[%s199 + $0x40] sm:$0xff] %vm1418, %v1362
      %1428 = vst.msk [vmem:[%s199 + $0x48] sm:$0xff] %vm1418, %v1363
      %1429 = vst.msk [vmem:[%s199 + $0x50] sm:$0xff] %vm1418, %v1364
      %1430 = vst.msk [vmem:[%s199 + $0x58] sm:$0xff] %vm1418, %v1365
      %1431 = vst.msk [vmem:[%s199 + $0x60] sm:$0xff] %vm1418, %v1366
      %1432 = vst.msk [vmem:[%s199 + $0x68] sm:$0xff] %vm1418, %v1367
      %1433 = vst.msk [vmem:[%s199 + $0x70] sm:$0xff] %vm1418, %v1368
      %1434 = vst.msk [vmem:[%s199 + $0x78] sm:$0xff] %vm1418, %v1369
      %1435 = vst.msk [vmem:[%s199 + $0x80] sm:$0xff] %vm1418, %v1370
      %1436 = vst.msk [vmem:[%s199 + $0x88] sm:$0xff] %vm1418, %v1371
      %1437 = vst.msk [vmem:[%s199 + $0x90] sm:$0xff] %vm1418, %v1372
      %1438 = vst.msk [vmem:[%s199 + $0x98] sm:$0xff] %vm1418, %v1373
      %1439 = vst.msk [vmem:[%s199 + $0xa0] sm:$0xff] %vm1418, %v1374
      %1440 = vst.msk [vmem:[%s199 + $0xa8] sm:$0xff] %vm1418, %v1375
      %1441 = vst.msk [vmem:[%s199 + $0xb0] sm:$0xff] %vm1418, %v1376
      %1442 = vst.msk [vmem:[%s199 + $0xb8] sm:$0xff] %vm1418, %v1377
      %1443 = vst.msk [vmem:[%s199 + $0xc0] sm:$0xff] %vm1418, %v1378
      %1444 = vst.msk [vmem:[%s199 + $0xc8] sm:$0xff] %vm1418, %v1379
      %1445 = vst.msk [vmem:[%s199 + $0xd0] sm:$0xff] %vm1418, %v1380
      %1446 = vst.msk [vmem:[%s199 + $0xd8] sm:$0xff] %vm1418, %v1381
      %1447 = vst.msk [vmem:[%s199 + $0xe0] sm:$0xff] %vm1418, %v1382
      %1448 = vst.msk [vmem:[%s199 + $0xe8] sm:$0xff] %vm1418, %v1383
      %1449 = vst.msk [vmem:[%s199 + $0xf0] sm:$0xff] %vm1418, %v1384
      %1450 = vst.msk [vmem:[%s199 + $0xf8] sm:$0xff] %vm1418, %v1385
      %1451 = vst.msk [vmem:[%s199 + $0x100] sm:$0xff] %vm1418, %v1386
      %1452 = vst.msk [vmem:[%s199 + $0x108] sm:$0xff] %vm1418, %v1387
      %1453 = vst.msk [vmem:[%s199 + $0x110] sm:$0xff] %vm1418, %v1388
      %1454 = vst.msk [vmem:[%s199 + $0x118] sm:$0xff] %vm1418, %v1389
      %1455 = vst.msk [vmem:[%s199 + $0x120] sm:$0xff] %vm1418, %v1390
      %1456 = vst.msk [vmem:[%s199 + $0x128] sm:$0xff] %vm1418, %v1391
      %1457 = vst.msk [vmem:[%s199 + $0x130] sm:$0xff] %vm1418, %v1392
      %1458 = vst.msk [vmem:[%s199 + $0x138] sm:$0xff] %vm1418, %v1393
      %1459 = vst.msk [vmem:[%s199 + $0x140] sm:$0xff] %vm1418, %v1394
      %1460 = vst.msk [vmem:[%s199 + $0x148] sm:$0xff] %vm1418, %v1395
      %1461 = vst.msk [vmem:[%s199 + $0x150] sm:$0xff] %vm1418, %v1396
      %1462 = vst.msk [vmem:[%s199 + $0x158] sm:$0xff] %vm1418, %v1397
      %1463 = vst.msk [vmem:[%s199 + $0x160] sm:$0xff] %vm1418, %v1398
      %1464 = vst.msk [vmem:[%s199 + $0x168] sm:$0xff] %vm1418, %v1399
      %1465 = vst.msk [vmem:[%s199 + $0x170] sm:$0xff] %vm1418, %v1400
      %1466 = vst.msk [vmem:[%s199 + $0x178] sm:$0xff] %vm1418, %v1401
      %1467 = vst.msk [vmem:[%s199 + $0x180] sm:$0xff] %vm1418, %v1402
      %1468 = vst.msk [vmem:[%s199 + $0x188] sm:$0xff] %vm1418, %v1403
      %1469 = vst.msk [vmem:[%s199 + $0x190] sm:$0xff] %vm1418, %v1404
      %1470 = vst.msk [vmem:[%s199 + $0x198] sm:$0xff] %vm1418, %v1405
      %1471 = vst.msk [vmem:[%s199 + $0x1a0] sm:$0xff] %vm1418, %v1406
      %1472 = vst.msk [vmem:[%s199 + $0x1a8] sm:$0xff] %vm1418, %v1407
      %1473 = vst.msk [vmem:[%s199 + $0x1b0] sm:$0xff] %vm1418, %v1408
      %1474 = vst.msk [vmem:[%s199 + $0x1b8] sm:$0xff] %vm1418, %v1409
      %1475 = vst.msk [vmem:[%s199 + $0x1c0] sm:$0xff] %vm1418, %v1410
      %1476 = vst.msk [vmem:[%s199 + $0x1c8] sm:$0xff] %vm1418, %v1411
      %1477 = vst.msk [vmem:[%s199 + $0x1d0] sm:$0xff] %vm1418, %v1412
      %1478 = vst.msk [vmem:[%s199 + $0x1d8] sm:$0xff] %vm1418, %v1413
      %1479 = vst.msk [vmem:[%s199 + $0x1e0] sm:$0xff] %vm1418, %v1414
      %1480 = vst.msk [vmem:[%s199 + $0x1e8] sm:$0xff] %vm1418, %v1415
      %1481 = vst.msk [vmem:[%s199 + $0x1f0] sm:$0xff] %vm1418, %v1416
      %1482 = vst.msk [vmem:[%s199 + $0x1f8] sm:$0xff] %vm1418, %v1417
      %s1483 = smul.u32 64, %s15
      %p1484 = scmp.lt.s32.totalorder %s1483, 255
      %s1485 = scalar_select %p1484, %s1483, 255
      %s1486 = smul.addr %s1485, 8
      %s1487 = scalar_lea.vmem %s4, %s1486
      // Predicated region
      $region37: #{proto_forward.7} parent=35 // pred_check
        %p1488 = pneg %p122
      $region38: #{proto_forward.7} parent=35 // pred_check_branch
        %1490 = sbr.rel (%p1488) target = $region40
      $region39: #{proto_forward.7} parent=35 // pred_region
        %s1491 = smul.u32 64, %s15
      $region40: #{proto_forward.7} parent=35 // pred_fallthru
        _
    $region36: #{proto_forward.7} parent=5 // pred_fallthru
      _
    %p1492 = scmp.le.s32.totalorder 2, %s10
    // Predicated region
    $region41: #{proto_forward.7} parent=5 // pred_check
      %p1493 = pneg %p1492
    $region42: #{proto_forward.7} parent=5 // pred_check_branch
      %1495 = sbr.rel (%p1493) target = $region44
    $region43: #{proto_forward.7} parent=5 // pred_region
      %s1496 = ssub.s32 %s10, 2
      // Predicated region
      $region45: #{proto_forward.7} parent=43 // pred_check
        %p1497 = pneg %p128
      $region46: #{proto_forward.7} parent=43 // pred_check_branch
        %1499 = sbr.rel (%p1497) target = $region48
      $region47: #{proto_forward.7} parent=43 // pred_region
        %s1500 = smul.u32 64, %s16
        %p1501 = scmp.lt.s32.totalorder %s1500, 255
        %s1502 = scalar_select %p1501, %s1500, 255
        %s1503 = smul.addr %s1502, 8
        %s1504 = scalar_lea.vmem %s4, %s1503
      $region48: #{proto_forward.7} parent=43 // pred_fallthru
        _
    $region44: #{proto_forward.7} parent=5 // pred_fallthru
      _
  $region6: #{proto_forward.7} parent=0 // loop_footer
    %s14 = sadd.s32 1, %s10
  $region7: #{proto_forward.7} parent=0 // loop_footer_branch
    %9 = sbr.rel target = $region3
  $region8: #{proto_forward.7} parent=0 // loop_exit
    _

</llo_original>
